<compile_context>
chip_gen: v7x
topology: tpu7x:2x2x1
jax: 0.10.0
libtpu: 0.0.40
codegen_flags: <defaults>
</compile_context>

<pallas_src>
import math
from functools import partial

import jax
import jax.numpy as jnp
from jax.experimental import pallas as pl
from jax.experimental.pallas import tpu as pltpu


# ----------------------------------------------------------------------------
# small in-kernel helpers
# ----------------------------------------------------------------------------
def _layer_norm(z, g, b, eps):
    mean = jnp.mean(z, axis=-1, keepdims=True)
    var = jnp.mean(jnp.square(z - mean), axis=-1, keepdims=True)
    return (z - mean) * jax.lax.rsqrt(var + eps) * g + b


def _shift_rows(x, off):
    """y[i] = x[i + off] (zero outside [0, T)).  `off` is a static Python int."""
    if off == 0:
        return x
    T, C = x.shape
    pad = jnp.zeros((abs(off), C), x.dtype)
    if off > 0:
        return jnp.concatenate([x[off:, :], pad], axis=0)
    return jnp.concatenate([pad, x[:T + off, :]], axis=0)


# ----------------------------------------------------------------------------
# fused encoder kernel
# ----------------------------------------------------------------------------
def _encoder_kernel(
        lens_ref,                                                    # SMEM [B]
        base_ref, bj_ref, wcat_ref, bcat_ref,                        # front
        wq_ref, bq_ref, wk_ref, bk_ref, wv_ref, bv_ref, wo_ref, bo_ref,
        rk_ref, rv_ref, g1_ref, be1_ref,
        w1_ref, b1_ref, w2_ref, b2_ref, g2_ref, be2_ref,             # ffn/LN
        wp_ref, bp_ref,                                              # final proj
        xo_ref, st_ref,                                              # outputs
        x_scr, oc_scr,                                               # scratch
        *, n_heads, k_channels, window, kernel_size, n_layers, eps, sqrt_h):
    b = pl.program_id(0)
    l = pl.program_id(1)
    T, H = x_scr.shape

    length = lens_ref[b]
    mask_t = (jax.lax.broadcasted_iota(jnp.int32, (T, 1), 0) < length
              ).astype(jnp.float32)                                   # [T, 1]
    ri = jax.lax.broadcasted_iota(jnp.int32, (T, T), 0)
    ci = jax.lax.broadcasted_iota(jnp.int32, (T, T), 1)
    attn_valid = jnp.logical_and(ri < length, ci < length)            # [T, T]
    rel_idx = ci - ri                                                 # [T, T]

    # ---- front (first layer step only): emb sum + bert/ja proj ----------
    @pl.when(l == 0)
    def _():
        proj = jnp.dot(bj_ref[0], wcat_ref[...],
                       preferred_element_type=jnp.float32) + bcat_ref[...]
        x_scr[...] = (base_ref[0] + proj) * sqrt_h * mask_t

    x = x_scr[...]                                                    # [T, H] f32

    # ---- multi-head self-attention with windowed relative positions -----
    xb = x.astype(jnp.bfloat16)
    q = jnp.dot(xb, wq_ref[0], preferred_element_type=jnp.float32) + bq_ref[0]
    k = jnp.dot(xb, wk_ref[0], preferred_element_type=jnp.float32) + bk_ref[0]
    v = jnp.dot(xb, wv_ref[0], preferred_element_type=jnp.float32) + bv_ref[0]
    scale = 1.0 / math.sqrt(k_channels)
    rel_k = rk_ref[0].astype(jnp.bfloat16)                            # [2w+1, dk]
    rel_v = rv_ref[0]                                                 # [2w+1, dk]

    contract_last = (((1,), (1,)), ((), ()))                          # A @ B^T
    for h in range(n_heads):
        sl = slice(h * k_channels, (h + 1) * k_channels)
        qh = (q[:, sl] * scale).astype(jnp.bfloat16)                  # [T, dk]
        kh = k[:, sl].astype(jnp.bfloat16)
        vh = v[:, sl].astype(jnp.bfloat16)
        scores = jax.lax.dot_general(qh, kh, contract_last,
                                     preferred_element_type=jnp.float32)      # [T,T]
        # relative keys: q·rel_k -> [T, 2w+1], scattered onto the |j-i|<=w band
        rel_logits = jax.lax.dot_general(qh, rel_k, contract_last,
                                         preferred_element_type=jnp.float32)  # [T,2w+1]
        for d in range(-window, window + 1):
            col = rel_logits[:, d + window:d + window + 1]            # [T, 1]
            scores = scores + jnp.where(rel_idx == d, col, 0.0)
        scores = jnp.where(attn_valid, scores, -1e4)
        smax = jnp.max(scores, axis=-1, keepdims=True)
        e = jnp.exp(scores - smax)
        p = e * pl.reciprocal(jnp.sum(e, axis=-1, keepdims=True), approx=True)
        oh = jnp.dot(p.astype(jnp.bfloat16), vh,
                     preferred_element_type=jnp.float32)              # [T, dk]
        # relative values: oh[i] += sum_d p[i, i+d] * rel_v[d+w]
        for d in range(-window, window + 1):
            wsum = jnp.sum(jnp.where(rel_idx == d, p, 0.0),
                           axis=-1, keepdims=True)                    # [T, 1]
            oh = oh + wsum * rel_v[d + window:d + window + 1, :]
        oc_scr[:, sl] = oh

    y = jnp.dot(oc_scr[...].astype(jnp.bfloat16), wo_ref[0],
                preferred_element_type=jnp.float32) + bo_ref[0]
    x = _layer_norm(x + y, g1_ref[0], be1_ref[0], eps)

    # ---- FFN: masked same-pad conv -> relu -> conv -> mask ---------------
    pad_l = (kernel_size - 1) // 2
    xm = x * mask_t
    h_ff = b1_ref[0]                                                  # [1, F]
    for d in range(kernel_size):
        sh = _shift_rows(xm, d - pad_l).astype(jnp.bfloat16)
        h_ff = h_ff + jnp.dot(sh, w1_ref[0, d],
                              preferred_element_type=jnp.float32)
    h_ff = jnp.maximum(h_ff, 0.0) * mask_t
    y2 = b2_ref[0]                                                    # [1, H]
    for d in range(kernel_size):
        sh = _shift_rows(h_ff, d - pad_l).astype(jnp.bfloat16)
        y2 = y2 + jnp.dot(sh, w2_ref[0, d],
                          preferred_element_type=jnp.float32)
    y2 = y2 * mask_t
    x = _layer_norm(x + y2, g2_ref[0], be2_ref[0], eps)
    x_scr[...] = x

    # ---- final mask + 1x1 projection (last layer step only) --------------
    @pl.when(l == n_layers - 1)
    def _():
        xm_f = x * mask_t
        xo_ref[0] = xm_f
        st_ref[0] = (jnp.dot(xm_f.astype(jnp.bfloat16), wp_ref[...],
                             preferred_element_type=jnp.float32)
                     + bp_ref[...]) * mask_t


# ----------------------------------------------------------------------------
# parameter init (stacked per-layer weights, bf16 matmul weights)
# ----------------------------------------------------------------------------
def init_params(key, cfg):
    H = cfg["hidden_channels"]
    Fc = cfg["filter_channels"]
    nh = cfg["n_heads"]
    dk = H // nh
    k = cfg["kernel_size"]
    w = cfg["window_size"]
    L = cfg["n_layers"]
    keys = iter(jax.random.split(key, 64))
    bf = jnp.bfloat16

    def nrm(shape, std, dtype=jnp.float32):
        return (jax.random.normal(next(keys), shape, jnp.float32) * std).astype(dtype)

    p = dict(
        emb_w=nrm((cfg["n_vocab"], H), H ** -0.5),
        tone_w=nrm((cfg["num_tones"], H), H ** -0.5),
        lang_w=nrm((cfg["num_languages"], H), H ** -0.5),
        bert_w=nrm((1024, H), 0.02, bf), bert_b=jnp.zeros((1, H), jnp.float32),
        ja_w=nrm((768, H), 0.02, bf), ja_b=jnp.zeros((1, H), jnp.float32),
        emo_w=nrm((1024, H), 0.02), emo_b=jnp.zeros((1, H), jnp.float32),
        proj_w=nrm((H, 2 * cfg["out_channels"]), 0.02, bf),
        proj_b=jnp.zeros((1, 2 * cfg["out_channels"]), jnp.float32),
        layers=dict(
            wq=nrm((L, H, H), H ** -0.5, bf), bq=jnp.zeros((L, 1, H), jnp.float32),
            wk=nrm((L, H, H), H ** -0.5, bf), bk=jnp.zeros((L, 1, H), jnp.float32),
            wv=nrm((L, H, H), H ** -0.5, bf), bv=jnp.zeros((L, 1, H), jnp.float32),
            wo=nrm((L, H, H), H ** -0.5, bf), bo=jnp.zeros((L, 1, H), jnp.float32),
            rel_k=nrm((L, 2 * w + 1, dk), dk ** -0.5),
            rel_v=nrm((L, 2 * w + 1, dk), dk ** -0.5),
            g1=jnp.ones((L, 1, H), jnp.float32), be1=jnp.zeros((L, 1, H), jnp.float32),
            w1=nrm((L, k, H, Fc), (H * k) ** -0.5, bf),
            b1=jnp.zeros((L, 1, Fc), jnp.float32),
            w2=nrm((L, k, Fc, H), (Fc * k) ** -0.5, bf),
            b2=jnp.zeros((L, 1, H), jnp.float32),
            g2=jnp.ones((L, 1, H), jnp.float32), be2=jnp.zeros((L, 1, H), jnp.float32),
        ),
    )
    return p


# ----------------------------------------------------------------------------
# forward pass
# ----------------------------------------------------------------------------
def text_encoder_forward(params, x_tokens, x_lengths, emo, tone, language,
                         bert, ja_bert, cfg):
    B, T = x_tokens.shape
    H = cfg["hidden_channels"]
    nh = cfg["n_heads"]
    dk = H // nh
    L = cfg["n_layers"]
    k = cfg["kernel_size"]
    w = cfg["window_size"]
    out_c = cfg["out_channels"]
    C2 = 2 * out_c
    assert H == nh * dk

    # XLA glue: embedding gathers + per-batch (M=1) emo linear stay outside
    # the kernel (gather / tiny matmul give the MXU nothing to chew on).
    emb_sum = (params["emb_w"][x_tokens] + params["tone_w"][tone]
               + params["lang_w"][language]).astype(jnp.float32)
    emo_p = jnp.dot(emo.astype(jnp.float32), params["emo_w"]) + params["emo_b"]
    base = emb_sum + emo_p[:, None, :]                                # [B, T, H]

    # fuse bert / ja_bert projections into a single K=1792 matmul
    bj = jnp.concatenate([jnp.transpose(bert, (0, 2, 1)),
                          jnp.transpose(ja_bert, (0, 2, 1))],
                         axis=-1).astype(jnp.bfloat16)                # [B, T, 1792]
    wcat = jnp.concatenate([params["bert_w"], params["ja_w"]], axis=0)  # bf16
    bcat = params["bert_b"] + params["ja_b"]                            # f32

    lay = params["layers"]
    lens = x_lengths.astype(jnp.int32)

    kern = partial(_encoder_kernel, n_heads=nh, k_channels=dk, window=w,
                   kernel_size=k, n_layers=L, eps=1e-5, sqrt_h=math.sqrt(H))

    def _b3(arr):   # per-batch block
        return pl.BlockSpec((1, arr.shape[1], arr.shape[2]),
                            lambda b, l, lens: (b, 0, 0))

    def _l3(arr):   # per-layer block
        return pl.BlockSpec((1, arr.shape[1], arr.shape[2]),
                            lambda b, l, lens: (l, 0, 0))

    def _l4(arr):   # per-layer 4-D block
        return pl.BlockSpec((1,) + tuple(arr.shape[1:]),
                            lambda b, l, lens: (l, 0, 0, 0))

    def _s2(arr):   # shared 2-D block
        return pl.BlockSpec(tuple(arr.shape), lambda b, l, lens: (0, 0))

    inputs = (base, bj, wcat, bcat,
              lay["wq"], lay["bq"], lay["wk"], lay["bk"],
              lay["wv"], lay["bv"], lay["wo"], lay["bo"],
              lay["rel_k"], lay["rel_v"], lay["g1"], lay["be1"],
              lay["w1"], lay["b1"], lay["w2"], lay["b2"],
              lay["g2"], lay["be2"],
              params["proj_w"], params["proj_b"])
    in_specs = [_b3(base), _b3(bj), _s2(wcat), _s2(bcat),
                _l3(lay["wq"]), _l3(lay["bq"]), _l3(lay["wk"]), _l3(lay["bk"]),
                _l3(lay["wv"]), _l3(lay["bv"]), _l3(lay["wo"]), _l3(lay["bo"]),
                _l3(lay["rel_k"]), _l3(lay["rel_v"]), _l3(lay["g1"]), _l3(lay["be1"]),
                _l4(lay["w1"]), _l3(lay["b1"]), _l4(lay["w2"]), _l3(lay["b2"]),
                _l3(lay["g2"]), _l3(lay["be2"]),
                _s2(params["proj_w"]), _s2(params["proj_b"])]

    grid_spec = pltpu.PrefetchScalarGridSpec(
        num_scalar_prefetch=1,
        grid=(B, L),
        in_specs=in_specs,
        out_specs=(pl.BlockSpec((1, T, H), lambda b, l, lens: (b, 0, 0)),
                   pl.BlockSpec((1, T, C2), lambda b, l, lens: (b, 0, 0))),
        scratch_shapes=[pltpu.VMEM((T, H), jnp.float32),    # resident x
                        pltpu.VMEM((T, H), jnp.float32)],   # head concat
    )

    xo, stats = pl.pallas_call(
        kern,
        out_shape=(jax.ShapeDtypeStruct((B, T, H), jnp.float32),
                   jax.ShapeDtypeStruct((B, T, C2), jnp.float32)),
        grid_spec=grid_spec,
        compiler_params=pltpu.CompilerParams(
            dimension_semantics=("parallel", "arbitrary"),
            vmem_limit_bytes=48 * 1024 * 1024),
    )(lens, *inputs)

    # back to PyTorch NCT layout
    x_out = jnp.transpose(xo, (0, 2, 1))                  # [B, H, T]
    stats_t = jnp.transpose(stats, (0, 2, 1))             # [B, 2*out, T]
    m_out = stats_t[:, :out_c, :]
    logs_out = stats_t[:, out_c:, :]
    x_mask = (jnp.arange(T)[None, :] < x_lengths[:, None]
              ).astype(jnp.float32)[:, None, :]           # [B, 1, T]
    return x_out, m_out, logs_out, x_mask


# ----------------------------------------------------------------------------
if __name__ == "__main__":
    cfg = dict(n_vocab=40, out_channels=16, hidden_channels=64,
               filter_channels=128, n_heads=2, n_layers=2, kernel_size=3,
               p_dropout=0.1, num_tones=8, num_languages=4, window_size=4)
    B, T = 2, 16

    params = init_params(jax.random.PRNGKey(0), cfg)

    kx, kt, kl, kb, kj, ke = jax.random.split(jax.random.PRNGKey(0), 6)
    x_tokens = jax.random.randint(kx, (B, T), 0, cfg["n_vocab"])
    tone = jax.random.randint(kt, (B, T), 0, cfg["num_tones"])
    language = jax.random.randint(kl, (B, T), 0, cfg["num_languages"])
    bert = jax.random.normal(kb, (B, 1024, T), jnp.float32)
    ja_bert = jax.random.normal(kj, (B, 768, T), jnp.float32)
    emo = jax.random.normal(ke, (B, 1024), jnp.float32)
    x_lengths = jnp.array([T, T - 5], dtype=jnp.int32)

    x_out, m_out, logs_out, x_mask = text_encoder_forward(
        params, x_tokens, x_lengths, emo, tone, language, bert, ja_bert, cfg)
    jax.block_until_ready((x_out, m_out, logs_out, x_mask))

    assert x_out.shape == (B, cfg["hidden_channels"], T)
    assert m_out.shape == (B, cfg["out_channels"], T)
    assert logs_out.shape == (B, cfg["out_channels"], T)
    assert x_mask.shape == (B, 1, T)
    assert bool(jnp.all(jnp.isfinite(x_out)))
    print("KERNEL_OK")
</pallas_src>

<mosaic_0001>
module attributes {stable_mosaic.version = 11 : i64} {
  func.func @_encoder_kernel(%arg0: i32, %arg1: i32, %arg2: memref<2xi32, #tpu.memory_space<smem>>, %arg3: memref<1x16x64xf32, #tpu.memory_space<vmem>>, %arg4: memref<1x16x1792xbf16, #tpu.memory_space<vmem>>, %arg5: memref<1792x64xbf16, #tpu.memory_space<vmem>>, %arg6: memref<1x64xf32, #tpu.memory_space<vmem>>, %arg7: memref<1x64x64xbf16, #tpu.memory_space<vmem>>, %arg8: memref<1x1x64xf32, #tpu.memory_space<vmem>>, %arg9: memref<1x64x64xbf16, #tpu.memory_space<vmem>>, %arg10: memref<1x1x64xf32, #tpu.memory_space<vmem>>, %arg11: memref<1x64x64xbf16, #tpu.memory_space<vmem>>, %arg12: memref<1x1x64xf32, #tpu.memory_space<vmem>>, %arg13: memref<1x64x64xbf16, #tpu.memory_space<vmem>>, %arg14: memref<1x1x64xf32, #tpu.memory_space<vmem>>, %arg15: memref<1x9x32xf32, #tpu.memory_space<vmem>>, %arg16: memref<1x9x32xf32, #tpu.memory_space<vmem>>, %arg17: memref<1x1x64xf32, #tpu.memory_space<vmem>>, %arg18: memref<1x1x64xf32, #tpu.memory_space<vmem>>, %arg19: memref<1x3x64x128xbf16, #tpu.memory_space<vmem>>, %arg20: memref<1x1x128xf32, #tpu.memory_space<vmem>>, %arg21: memref<1x3x128x64xbf16, #tpu.memory_space<vmem>>, %arg22: memref<1x1x64xf32, #tpu.memory_space<vmem>>, %arg23: memref<1x1x64xf32, #tpu.memory_space<vmem>>, %arg24: memref<1x1x64xf32, #tpu.memory_space<vmem>>, %arg25: memref<64x32xbf16, #tpu.memory_space<vmem>>, %arg26: memref<1x32xf32, #tpu.memory_space<vmem>>, %arg27: memref<1x16x64xf32, #tpu.memory_space<vmem>>, %arg28: memref<1x16x32xf32, #tpu.memory_space<vmem>>, %arg29: memref<16x64xf32, #tpu.memory_space<vmem>>, %arg30: memref<16x64xf32, #tpu.memory_space<vmem>>) attributes {dimension_semantics = [#tpu.dimension_semantics<parallel>, #tpu.dimension_semantics<arbitrary>], iteration_bounds = array<i64: 2, 2>, scalar_prefetch = 1 : i64, scratch_operands = 2 : i64, tpu.core_type = #tpu.core_type<tc>, window_params = [{transform_indices = @transform_0, window_bounds = array<i64: 1, 16, 64>}, {transform_indices = @transform_1, window_bounds = array<i64: 1, 16, 1792>}, {pipeline_mode = #tpu.pipeline_mode<synchronous>, transform_indices = @transform_2, window_bounds = array<i64: 1792, 64>}, {pipeline_mode = #tpu.pipeline_mode<synchronous>, transform_indices = @transform_3, window_bounds = array<i64: 1, 64>}, {transform_indices = @transform_4, window_bounds = array<i64: 1, 64, 64>}, {transform_indices = @transform_5, window_bounds = array<i64: 1, 1, 64>}, {transform_indices = @transform_6, window_bounds = array<i64: 1, 64, 64>}, {transform_indices = @transform_7, window_bounds = array<i64: 1, 1, 64>}, {transform_indices = @transform_8, window_bounds = array<i64: 1, 64, 64>}, {transform_indices = @transform_9, window_bounds = array<i64: 1, 1, 64>}, {transform_indices = @transform_10, window_bounds = array<i64: 1, 64, 64>}, {transform_indices = @transform_11, window_bounds = array<i64: 1, 1, 64>}, {transform_indices = @transform_12, window_bounds = array<i64: 1, 9, 32>}, {transform_indices = @transform_13, window_bounds = array<i64: 1, 9, 32>}, {transform_indices = @transform_14, window_bounds = array<i64: 1, 1, 64>}, {transform_indices = @transform_15, window_bounds = array<i64: 1, 1, 64>}, {transform_indices = @transform_16, window_bounds = array<i64: 1, 3, 64, 128>}, {transform_indices = @transform_17, window_bounds = array<i64: 1, 1, 128>}, {transform_indices = @transform_18, window_bounds = array<i64: 1, 3, 128, 64>}, {transform_indices = @transform_19, window_bounds = array<i64: 1, 1, 64>}, {transform_indices = @transform_20, window_bounds = array<i64: 1, 1, 64>}, {transform_indices = @transform_21, window_bounds = array<i64: 1, 1, 64>}, {pipeline_mode = #tpu.pipeline_mode<synchronous>, transform_indices = @transform_22, window_bounds = array<i64: 64, 32>}, {pipeline_mode = #tpu.pipeline_mode<synchronous>, transform_indices = @transform_23, window_bounds = array<i64: 1, 32>}, {transform_indices = @transform_24, window_bounds = array<i64: 1, 16, 64>}, {transform_indices = @transform_25, window_bounds = array<i64: 1, 16, 32>}]} {
    %0 = arith.index_cast %arg0 : i32 to index
    %1 = memref.load %arg2[%0] : memref<2xi32, #tpu.memory_space<smem>>
    %2 = tpu.iota {dimensions = array<i32: 0>} : vector<16x1xi32>
    %3 = vector.broadcast %1 : i32 to vector<16x1xi32>
    %4 = arith.cmpi slt, %2, %3 : vector<16x1xi32>
    %5 = arith.extui %4 : vector<16x1xi1> to vector<16x1xi32>
    %6 = arith.sitofp %5 : vector<16x1xi32> to vector<16x1xf32>
    %7 = tpu.iota {dimensions = array<i32: 0>} : vector<16x16xi32>
    %8 = tpu.iota {dimensions = array<i32: 1>} : vector<16x16xi32>
    %9 = vector.broadcast %1 : i32 to vector<16x16xi32>
    %10 = arith.cmpi slt, %7, %9 : vector<16x16xi32>
    %11 = vector.broadcast %1 : i32 to vector<16x16xi32>
    %12 = arith.cmpi slt, %8, %11 : vector<16x16xi32>
    %13 = arith.andi %10, %12 : vector<16x16xi1>
    %14 = arith.subi %8, %7 : vector<16x16xi32>
    %c0_i32 = arith.constant 0 : i32
    %15 = arith.cmpi eq, %arg1, %c0_i32 : i32
    %16 = arith.extui %15 : i1 to i32
    %c0_i32_0 = arith.constant 0 : i32
    %17 = arith.cmpi ne, %16, %c0_i32_0 : i32
    scf.if %17 {
      %c0_201 = arith.constant 0 : index
      %c0_202 = arith.constant 0 : index
      %c0_203 = arith.constant 0 : index
      %561 = vector.load %arg4[%c0_201, %c0_202, %c0_203] : memref<1x16x1792xbf16, #tpu.memory_space<vmem>>, vector<1x16x1792xbf16>
      %562 = vector.shape_cast %561 : vector<1x16x1792xbf16> to vector<16x1792xbf16>
      %c0_204 = arith.constant 0 : index
      %c0_205 = arith.constant 0 : index
      %563 = vector.load %arg5[%c0_204, %c0_205] : memref<1792x64xbf16, #tpu.memory_space<vmem>>, vector<1792x64xbf16>
      %cst_206 = arith.constant dense<0.000000e+00> : vector<16x64xf32>
      %564 = tpu.matmul %562, %563, %cst_206 {dimension_numbers = #tpu.dot_dimension_numbers<[1], [0], [0], [1], [0, 0, 1, 1], [], []>} : vector<16x1792xbf16>, vector<1792x64xbf16>, vector<16x64xf32> -> vector<16x64xf32>
      %c0_207 = arith.constant 0 : index
      %c0_208 = arith.constant 0 : index
      %565 = vector.load %arg6[%c0_207, %c0_208] : memref<1x64xf32, #tpu.memory_space<vmem>>, vector<1x64xf32>
      %566 = vector.broadcast %565 : vector<1x64xf32> to vector<16x64xf32>
      %567 = arith.addf %564, %566 : vector<16x64xf32>
      %c0_209 = arith.constant 0 : index
      %c0_210 = arith.constant 0 : index
      %c0_211 = arith.constant 0 : index
      %568 = vector.load %arg3[%c0_209, %c0_210, %c0_211] : memref<1x16x64xf32, #tpu.memory_space<vmem>>, vector<1x16x64xf32>
      %569 = vector.shape_cast %568 : vector<1x16x64xf32> to vector<16x64xf32>
      %570 = arith.addf %569, %567 : vector<16x64xf32>
      %cst_212 = arith.constant 8.000000e+00 : f32
      %571 = vector.broadcast %cst_212 : f32 to vector<16x64xf32>
      %572 = arith.mulf %570, %571 : vector<16x64xf32>
      %573 = vector.broadcast %6 : vector<16x1xf32> to vector<16x64xf32>
      %574 = arith.mulf %572, %573 : vector<16x64xf32>
      %c0_213 = arith.constant 0 : index
      %c0_214 = arith.constant 0 : index
      %575 = vector.load %arg29[%c0_213, %c0_214] : memref<16x64xf32, #tpu.memory_space<vmem>>, vector<16x64xf32>
      tpu.vector_store %arg29[%c0_213, %c0_214], %574 {strides = array<i32>} : memref<16x64xf32, #tpu.memory_space<vmem>>, vector<16x64xf32>,
    } else {
    }
    %c0 = arith.constant 0 : index
    %c0_1 = arith.constant 0 : index
    %18 = vector.load %arg29[%c0, %c0_1] : memref<16x64xf32, #tpu.memory_space<vmem>>, vector<16x64xf32>
    %19 = arith.truncf %18 : vector<16x64xf32> to vector<16x64xbf16>
    %c0_2 = arith.constant 0 : index
    %c0_3 = arith.constant 0 : index
    %c0_4 = arith.constant 0 : index
    %20 = vector.load %arg7[%c0_2, %c0_3, %c0_4] : memref<1x64x64xbf16, #tpu.memory_space<vmem>>, vector<1x64x64xbf16>
    %21 = vector.shape_cast %20 : vector<1x64x64xbf16> to vector<64x64xbf16>
    %cst = arith.constant dense<0.000000e+00> : vector<16x64xf32>
    %22 = tpu.matmul %19, %21, %cst {dimension_numbers = #tpu.dot_dimension_numbers<[1], [0], [0], [1], [0, 0, 1, 1], [], []>} : vector<16x64xbf16>, vector<64x64xbf16>, vector<16x64xf32> -> vector<16x64xf32>
    %c0_5 = arith.constant 0 : index
    %c0_6 = arith.constant 0 : index
    %c0_7 = arith.constant 0 : index
    %23 = vector.load %arg8[%c0_5, %c0_6, %c0_7] : memref<1x1x64xf32, #tpu.memory_space<vmem>>, vector<1x1x64xf32>
    %24 = vector.shape_cast %23 : vector<1x1x64xf32> to vector<1x64xf32>
    %25 = vector.broadcast %24 : vector<1x64xf32> to vector<16x64xf32>
    %26 = arith.addf %22, %25 : vector<16x64xf32>
    %c0_8 = arith.constant 0 : index
    %c0_9 = arith.constant 0 : index
    %c0_10 = arith.constant 0 : index
    %27 = vector.load %arg9[%c0_8, %c0_9, %c0_10] : memref<1x64x64xbf16, #tpu.memory_space<vmem>>, vector<1x64x64xbf16>
    %28 = vector.shape_cast %27 : vector<1x64x64xbf16> to vector<64x64xbf16>
    %cst_11 = arith.constant dense<0.000000e+00> : vector<16x64xf32>
    %29 = tpu.matmul %19, %28, %cst_11 {dimension_numbers = #tpu.dot_dimension_numbers<[1], [0], [0], [1], [0, 0, 1, 1], [], []>} : vector<16x64xbf16>, vector<64x64xbf16>, vector<16x64xf32> -> vector<16x64xf32>
    %c0_12 = arith.constant 0 : index
    %c0_13 = arith.constant 0 : index
    %c0_14 = arith.constant 0 : index
    %30 = vector.load %arg10[%c0_12, %c0_13, %c0_14] : memref<1x1x64xf32, #tpu.memory_space<vmem>>, vector<1x1x64xf32>
    %31 = vector.shape_cast %30 : vector<1x1x64xf32> to vector<1x64xf32>
    %32 = vector.broadcast %31 : vector<1x64xf32> to vector<16x64xf32>
    %33 = arith.addf %29, %32 : vector<16x64xf32>
    %c0_15 = arith.constant 0 : index
    %c0_16 = arith.constant 0 : index
    %c0_17 = arith.constant 0 : index
    %34 = vector.load %arg11[%c0_15, %c0_16, %c0_17] : memref<1x64x64xbf16, #tpu.memory_space<vmem>>, vector<1x64x64xbf16>
    %35 = vector.shape_cast %34 : vector<1x64x64xbf16> to vector<64x64xbf16>
    %cst_18 = arith.constant dense<0.000000e+00> : vector<16x64xf32>
    %36 = tpu.matmul %19, %35, %cst_18 {dimension_numbers = #tpu.dot_dimension_numbers<[1], [0], [0], [1], [0, 0, 1, 1], [], []>} : vector<16x64xbf16>, vector<64x64xbf16>, vector<16x64xf32> -> vector<16x64xf32>
    %c0_19 = arith.constant 0 : index
    %c0_20 = arith.constant 0 : index
    %c0_21 = arith.constant 0 : index
    %37 = vector.load %arg12[%c0_19, %c0_20, %c0_21] : memref<1x1x64xf32, #tpu.memory_space<vmem>>, vector<1x1x64xf32>
    %38 = vector.shape_cast %37 : vector<1x1x64xf32> to vector<1x64xf32>
    %39 = vector.broadcast %38 : vector<1x64xf32> to vector<16x64xf32>
    %40 = arith.addf %36, %39 : vector<16x64xf32>
    %c0_22 = arith.constant 0 : index
    %c0_23 = arith.constant 0 : index
    %c0_24 = arith.constant 0 : index
    %41 = vector.load %arg15[%c0_22, %c0_23, %c0_24] : memref<1x9x32xf32, #tpu.memory_space<vmem>>, vector<1x9x32xf32>
    %42 = vector.shape_cast %41 : vector<1x9x32xf32> to vector<9x32xf32>
    %43 = arith.truncf %42 : vector<9x32xf32> to vector<9x32xbf16>
    %c0_25 = arith.constant 0 : index
    %c0_26 = arith.constant 0 : index
    %c0_27 = arith.constant 0 : index
    %44 = vector.load %arg16[%c0_25, %c0_26, %c0_27] : memref<1x9x32xf32, #tpu.memory_space<vmem>>, vector<1x9x32xf32>
    %45 = vector.shape_cast %44 : vector<1x9x32xf32> to vector<9x32xf32>
    %46 = vector.extract_strided_slice %26 {offsets = [0, 0], sizes = [16, 32], strides = [1, 1]} : vector<16x64xf32> to vector<16x32xf32>
    %cst_28 = arith.constant 0.176776692 : f32
    %47 = vector.broadcast %cst_28 : f32 to vector<16x32xf32>
    %48 = arith.mulf %46, %47 : vector<16x32xf32>
    %49 = arith.truncf %48 : vector<16x32xf32> to vector<16x32xbf16>
    %50 = vector.extract_strided_slice %33 {offsets = [0, 0], sizes = [16, 32], strides = [1, 1]} : vector<16x64xf32> to vector<16x32xf32>
    %51 = arith.truncf %50 : vector<16x32xf32> to vector<16x32xbf16>
    %52 = vector.extract_strided_slice %40 {offsets = [0, 0], sizes = [16, 32], strides = [1, 1]} : vector<16x64xf32> to vector<16x32xf32>
    %53 = arith.truncf %52 : vector<16x32xf32> to vector<16x32xbf16>
    %cst_29 = arith.constant dense<0.000000e+00> : vector<16x16xf32>
    %54 = tpu.matmul %49, %51, %cst_29 {dimension_numbers = #tpu.dot_dimension_numbers<[1], [1], [0], [0], [0, 0, 1, 0], [], []>} : vector<16x32xbf16>, vector<16x32xbf16>, vector<16x16xf32> -> vector<16x16xf32>
    %cst_30 = arith.constant dense<0.000000e+00> : vector<16x9xf32>
    %55 = tpu.matmul %49, %43, %cst_30 {dimension_numbers = #tpu.dot_dimension_numbers<[1], [1], [0], [0], [0, 0, 1, 0], [], []>} : vector<16x32xbf16>, vector<9x32xbf16>, vector<16x9xf32> -> vector<16x9xf32>
    %56 = vector.extract_strided_slice %55 {offsets = [0, 0], sizes = [16, 1], strides = [1, 1]} : vector<16x9xf32> to vector<16x1xf32>
    %c-4_i32 = arith.constant -4 : i32
    %57 = vector.broadcast %c-4_i32 : i32 to vector<16x16xi32>
    %58 = arith.cmpi eq, %14, %57 : vector<16x16xi32>
    %cst_31 = arith.constant 0.000000e+00 : f32
    %59 = vector.shape_cast %56 : vector<16x1xf32> to vector<16x1xf32>
    %60 = vector.broadcast %59 : vector<16x1xf32> to vector<16x16xf32>
    %61 = vector.broadcast %cst_31 : f32 to vector<16x16xf32>
    %62 = arith.select %58, %60, %61 : vector<16x16xi1>, vector<16x16xf32>
    %63 = arith.addf %54, %62 : vector<16x16xf32>
    %64 = vector.extract_strided_slice %55 {offsets = [0, 1], sizes = [16, 1], strides = [1, 1]} : vector<16x9xf32> to vector<16x1xf32>
    %c-3_i32 = arith.constant -3 : i32
    %65 = vector.broadcast %c-3_i32 : i32 to vector<16x16xi32>
    %66 = arith.cmpi eq, %14, %65 : vector<16x16xi32>
    %cst_32 = arith.constant 0.000000e+00 : f32
    %67 = vector.shape_cast %64 : vector<16x1xf32> to vector<16x1xf32>
    %68 = vector.broadcast %67 : vector<16x1xf32> to vector<16x16xf32>
    %69 = vector.broadcast %cst_32 : f32 to vector<16x16xf32>
    %70 = arith.select %66, %68, %69 : vector<16x16xi1>, vector<16x16xf32>
    %71 = arith.addf %63, %70 : vector<16x16xf32>
    %72 = vector.extract_strided_slice %55 {offsets = [0, 2], sizes = [16, 1], strides = [1, 1]} : vector<16x9xf32> to vector<16x1xf32>
    %c-2_i32 = arith.constant -2 : i32
    %73 = vector.broadcast %c-2_i32 : i32 to vector<16x16xi32>
    %74 = arith.cmpi eq, %14, %73 : vector<16x16xi32>
    %cst_33 = arith.constant 0.000000e+00 : f32
    %75 = vector.shape_cast %72 : vector<16x1xf32> to vector<16x1xf32>
    %76 = vector.broadcast %75 : vector<16x1xf32> to vector<16x16xf32>
    %77 = vector.broadcast %cst_33 : f32 to vector<16x16xf32>
    %78 = arith.select %74, %76, %77 : vector<16x16xi1>, vector<16x16xf32>
    %79 = arith.addf %71, %78 : vector<16x16xf32>
    %80 = vector.extract_strided_slice %55 {offsets = [0, 3], sizes = [16, 1], strides = [1, 1]} : vector<16x9xf32> to vector<16x1xf32>
    %c-1_i32 = arith.constant -1 : i32
    %81 = vector.broadcast %c-1_i32 : i32 to vector<16x16xi32>
    %82 = arith.cmpi eq, %14, %81 : vector<16x16xi32>
    %cst_34 = arith.constant 0.000000e+00 : f32
    %83 = vector.shape_cast %80 : vector<16x1xf32> to vector<16x1xf32>
    %84 = vector.broadcast %83 : vector<16x1xf32> to vector<16x16xf32>
    %85 = vector.broadcast %cst_34 : f32 to vector<16x16xf32>
    %86 = arith.select %82, %84, %85 : vector<16x16xi1>, vector<16x16xf32>
    %87 = arith.addf %79, %86 : vector<16x16xf32>
    %88 = vector.extract_strided_slice %55 {offsets = [0, 4], sizes = [16, 1], strides = [1, 1]} : vector<16x9xf32> to vector<16x1xf32>
    %c0_i32_35 = arith.constant 0 : i32
    %89 = vector.broadcast %c0_i32_35 : i32 to vector<16x16xi32>
    %90 = arith.cmpi eq, %14, %89 : vector<16x16xi32>
    %cst_36 = arith.constant 0.000000e+00 : f32
    %91 = vector.shape_cast %88 : vector<16x1xf32> to vector<16x1xf32>
    %92 = vector.broadcast %91 : vector<16x1xf32> to vector<16x16xf32>
    %93 = vector.broadcast %cst_36 : f32 to vector<16x16xf32>
    %94 = arith.select %90, %92, %93 : vector<16x16xi1>, vector<16x16xf32>
    %95 = arith.addf %87, %94 : vector<16x16xf32>
    %96 = vector.extract_strided_slice %55 {offsets = [0, 5], sizes = [16, 1], strides = [1, 1]} : vector<16x9xf32> to vector<16x1xf32>
    %c1_i32 = arith.constant 1 : i32
    %97 = vector.broadcast %c1_i32 : i32 to vector<16x16xi32>
    %98 = arith.cmpi eq, %14, %97 : vector<16x16xi32>
    %cst_37 = arith.constant 0.000000e+00 : f32
    %99 = vector.shape_cast %96 : vector<16x1xf32> to vector<16x1xf32>
    %100 = vector.broadcast %99 : vector<16x1xf32> to vector<16x16xf32>
    %101 = vector.broadcast %cst_37 : f32 to vector<16x16xf32>
    %102 = arith.select %98, %100, %101 : vector<16x16xi1>, vector<16x16xf32>
    %103 = arith.addf %95, %102 : vector<16x16xf32>
    %104 = vector.extract_strided_slice %55 {offsets = [0, 6], sizes = [16, 1], strides = [1, 1]} : vector<16x9xf32> to vector<16x1xf32>
    %c2_i32 = arith.constant 2 : i32
    %105 = vector.broadcast %c2_i32 : i32 to vector<16x16xi32>
    %106 = arith.cmpi eq, %14, %105 : vector<16x16xi32>
    %cst_38 = arith.constant 0.000000e+00 : f32
    %107 = vector.shape_cast %104 : vector<16x1xf32> to vector<16x1xf32>
    %108 = vector.broadcast %107 : vector<16x1xf32> to vector<16x16xf32>
    %109 = vector.broadcast %cst_38 : f32 to vector<16x16xf32>
    %110 = arith.select %106, %108, %109 : vector<16x16xi1>, vector<16x16xf32>
    %111 = arith.addf %103, %110 : vector<16x16xf32>
    %112 = vector.extract_strided_slice %55 {offsets = [0, 7], sizes = [16, 1], strides = [1, 1]} : vector<16x9xf32> to vector<16x1xf32>
    %c3_i32 = arith.constant 3 : i32
    %113 = vector.broadcast %c3_i32 : i32 to vector<16x16xi32>
    %114 = arith.cmpi eq, %14, %113 : vector<16x16xi32>
    %cst_39 = arith.constant 0.000000e+00 : f32
    %115 = vector.shape_cast %112 : vector<16x1xf32> to vector<16x1xf32>
    %116 = vector.broadcast %115 : vector<16x1xf32> to vector<16x16xf32>
    %117 = vector.broadcast %cst_39 : f32 to vector<16x16xf32>
    %118 = arith.select %114, %116, %117 : vector<16x16xi1>, vector<16x16xf32>
    %119 = arith.addf %111, %118 : vector<16x16xf32>
    %120 = vector.extract_strided_slice %55 {offsets = [0, 8], sizes = [16, 1], strides = [1, 1]} : vector<16x9xf32> to vector<16x1xf32>
    %c4_i32 = arith.constant 4 : i32
    %121 = vector.broadcast %c4_i32 : i32 to vector<16x16xi32>
    %122 = arith.cmpi eq, %14, %121 : vector<16x16xi32>
    %cst_40 = arith.constant 0.000000e+00 : f32
    %123 = vector.shape_cast %120 : vector<16x1xf32> to vector<16x1xf32>
    %124 = vector.broadcast %123 : vector<16x1xf32> to vector<16x16xf32>
    %125 = vector.broadcast %cst_40 : f32 to vector<16x16xf32>
    %126 = arith.select %122, %124, %125 : vector<16x16xi1>, vector<16x16xf32>
    %127 = arith.addf %119, %126 : vector<16x16xf32>
    %cst_41 = arith.constant -1.000000e+04 : f32
    %128 = vector.broadcast %cst_41 : f32 to vector<16x16xf32>
    %129 = arith.select %13, %127, %128 : vector<16x16xi1>, vector<16x16xf32>
    %cst_42 = arith.constant dense<0xFF800000> : vector<16xf32>
    %130 = vector.multi_reduction <maximumf>, %129, %cst_42 [1] : vector<16x16xf32> to vector<16xf32>
    %131 = vector.shape_cast %130 : vector<16xf32> to vector<16x1xf32>
    %132 = vector.broadcast %131 : vector<16x1xf32> to vector<16x16xf32>
    %133 = arith.subf %129, %132 : vector<16x16xf32>
    %134 = math.exp %133 : vector<16x16xf32>
    %cst_43 = arith.constant dense<0.000000e+00> : vector<16xf32>
    %135 = vector.multi_reduction <add>, %134, %cst_43 [1] : vector<16x16xf32> to vector<16xf32>
    %136 = vector.shape_cast %135 : vector<16xf32> to vector<16x1xf32>
    %137 = tpu.reciprocal %136 {approx = true} : vector<16x1xf32> -> vector<16x1xf32>
    %138 = vector.broadcast %137 : vector<16x1xf32> to vector<16x16xf32>
    %139 = arith.mulf %134, %138 : vector<16x16xf32>
    %140 = arith.truncf %139 : vector<16x16xf32> to vector<16x16xbf16>
    %cst_44 = arith.constant dense<0.000000e+00> : vector<16x32xf32>
    %141 = tpu.matmul %140, %53, %cst_44 {dimension_numbers = #tpu.dot_dimension_numbers<[1], [0], [0], [1], [0, 0, 1, 1], [], []>} : vector<16x16xbf16>, vector<16x32xbf16>, vector<16x32xf32> -> vector<16x32xf32>
    %c-4_i32_45 = arith.constant -4 : i32
    %142 = vector.broadcast %c-4_i32_45 : i32 to vector<16x16xi32>
    %143 = arith.cmpi eq, %14, %142 : vector<16x16xi32>
    %cst_46 = arith.constant 0.000000e+00 : f32
    %144 = vector.broadcast %cst_46 : f32 to vector<16x16xf32>
    %145 = arith.select %143, %139, %144 : vector<16x16xi1>, vector<16x16xf32>
    %cst_47 = arith.constant dense<0.000000e+00> : vector<16xf32>
    %146 = vector.multi_reduction <add>, %145, %cst_47 [1] : vector<16x16xf32> to vector<16xf32>
    %147 = vector.shape_cast %146 : vector<16xf32> to vector<16x1xf32>
    %148 = vector.extract_strided_slice %45 {offsets = [0, 0], sizes = [1, 32], strides = [1, 1]} : vector<9x32xf32> to vector<1x32xf32>
    %149 = vector.broadcast %147 : vector<16x1xf32> to vector<16x32xf32>
    %150 = vector.broadcast %148 : vector<1x32xf32> to vector<16x32xf32>
    %151 = arith.mulf %149, %150 : vector<16x32xf32>
    %152 = arith.addf %141, %151 : vector<16x32xf32>
    %c-3_i32_48 = arith.constant -3 : i32
    %153 = vector.broadcast %c-3_i32_48 : i32 to vector<16x16xi32>
    %154 = arith.cmpi eq, %14, %153 : vector<16x16xi32>
    %cst_49 = arith.constant 0.000000e+00 : f32
    %155 = vector.broadcast %cst_49 : f32 to vector<16x16xf32>
    %156 = arith.select %154, %139, %155 : vector<16x16xi1>, vector<16x16xf32>
    %cst_50 = arith.constant dense<0.000000e+00> : vector<16xf32>
    %157 = vector.multi_reduction <add>, %156, %cst_50 [1] : vector<16x16xf32> to vector<16xf32>
    %158 = vector.shape_cast %157 : vector<16xf32> to vector<16x1xf32>
    %159 = vector.extract_strided_slice %45 {offsets = [1, 0], sizes = [1, 32], strides = [1, 1]} : vector<9x32xf32> to vector<1x32xf32>
    %160 = vector.broadcast %158 : vector<16x1xf32> to vector<16x32xf32>
    %161 = vector.broadcast %159 : vector<1x32xf32> to vector<16x32xf32>
    %162 = arith.mulf %160, %161 : vector<16x32xf32>
    %163 = arith.addf %152, %162 : vector<16x32xf32>
    %c-2_i32_51 = arith.constant -2 : i32
    %164 = vector.broadcast %c-2_i32_51 : i32 to vector<16x16xi32>
    %165 = arith.cmpi eq, %14, %164 : vector<16x16xi32>
    %cst_52 = arith.constant 0.000000e+00 : f32
    %166 = vector.broadcast %cst_52 : f32 to vector<16x16xf32>
    %167 = arith.select %165, %139, %166 : vector<16x16xi1>, vector<16x16xf32>
    %cst_53 = arith.constant dense<0.000000e+00> : vector<16xf32>
    %168 = vector.multi_reduction <add>, %167, %cst_53 [1] : vector<16x16xf32> to vector<16xf32>
    %169 = vector.shape_cast %168 : vector<16xf32> to vector<16x1xf32>
    %170 = vector.extract_strided_slice %45 {offsets = [2, 0], sizes = [1, 32], strides = [1, 1]} : vector<9x32xf32> to vector<1x32xf32>
    %171 = vector.broadcast %169 : vector<16x1xf32> to vector<16x32xf32>
    %172 = vector.broadcast %170 : vector<1x32xf32> to vector<16x32xf32>
    %173 = arith.mulf %171, %172 : vector<16x32xf32>
    %174 = arith.addf %163, %173 : vector<16x32xf32>
    %c-1_i32_54 = arith.constant -1 : i32
    %175 = vector.broadcast %c-1_i32_54 : i32 to vector<16x16xi32>
    %176 = arith.cmpi eq, %14, %175 : vector<16x16xi32>
    %cst_55 = arith.constant 0.000000e+00 : f32
    %177 = vector.broadcast %cst_55 : f32 to vector<16x16xf32>
    %178 = arith.select %176, %139, %177 : vector<16x16xi1>, vector<16x16xf32>
    %cst_56 = arith.constant dense<0.000000e+00> : vector<16xf32>
    %179 = vector.multi_reduction <add>, %178, %cst_56 [1] : vector<16x16xf32> to vector<16xf32>
    %180 = vector.shape_cast %179 : vector<16xf32> to vector<16x1xf32>
    %181 = vector.extract_strided_slice %45 {offsets = [3, 0], sizes = [1, 32], strides = [1, 1]} : vector<9x32xf32> to vector<1x32xf32>
    %182 = vector.broadcast %180 : vector<16x1xf32> to vector<16x32xf32>
    %183 = vector.broadcast %181 : vector<1x32xf32> to vector<16x32xf32>
    %184 = arith.mulf %182, %183 : vector<16x32xf32>
    %185 = arith.addf %174, %184 : vector<16x32xf32>
    %c0_i32_57 = arith.constant 0 : i32
    %186 = vector.broadcast %c0_i32_57 : i32 to vector<16x16xi32>
    %187 = arith.cmpi eq, %14, %186 : vector<16x16xi32>
    %cst_58 = arith.constant 0.000000e+00 : f32
    %188 = vector.broadcast %cst_58 : f32 to vector<16x16xf32>
    %189 = arith.select %187, %139, %188 : vector<16x16xi1>, vector<16x16xf32>
    %cst_59 = arith.constant dense<0.000000e+00> : vector<16xf32>
    %190 = vector.multi_reduction <add>, %189, %cst_59 [1] : vector<16x16xf32> to vector<16xf32>
    %191 = vector.shape_cast %190 : vector<16xf32> to vector<16x1xf32>
    %192 = vector.extract_strided_slice %45 {offsets = [4, 0], sizes = [1, 32], strides = [1, 1]} : vector<9x32xf32> to vector<1x32xf32>
    %193 = vector.broadcast %191 : vector<16x1xf32> to vector<16x32xf32>
    %194 = vector.broadcast %192 : vector<1x32xf32> to vector<16x32xf32>
    %195 = arith.mulf %193, %194 : vector<16x32xf32>
    %196 = arith.addf %185, %195 : vector<16x32xf32>
    %c1_i32_60 = arith.constant 1 : i32
    %197 = vector.broadcast %c1_i32_60 : i32 to vector<16x16xi32>
    %198 = arith.cmpi eq, %14, %197 : vector<16x16xi32>
    %cst_61 = arith.constant 0.000000e+00 : f32
    %199 = vector.broadcast %cst_61 : f32 to vector<16x16xf32>
    %200 = arith.select %198, %139, %199 : vector<16x16xi1>, vector<16x16xf32>
    %cst_62 = arith.constant dense<0.000000e+00> : vector<16xf32>
    %201 = vector.multi_reduction <add>, %200, %cst_62 [1] : vector<16x16xf32> to vector<16xf32>
    %202 = vector.shape_cast %201 : vector<16xf32> to vector<16x1xf32>
    %203 = vector.extract_strided_slice %45 {offsets = [5, 0], sizes = [1, 32], strides = [1, 1]} : vector<9x32xf32> to vector<1x32xf32>
    %204 = vector.broadcast %202 : vector<16x1xf32> to vector<16x32xf32>
    %205 = vector.broadcast %203 : vector<1x32xf32> to vector<16x32xf32>
    %206 = arith.mulf %204, %205 : vector<16x32xf32>
    %207 = arith.addf %196, %206 : vector<16x32xf32>
    %c2_i32_63 = arith.constant 2 : i32
    %208 = vector.broadcast %c2_i32_63 : i32 to vector<16x16xi32>
    %209 = arith.cmpi eq, %14, %208 : vector<16x16xi32>
    %cst_64 = arith.constant 0.000000e+00 : f32
    %210 = vector.broadcast %cst_64 : f32 to vector<16x16xf32>
    %211 = arith.select %209, %139, %210 : vector<16x16xi1>, vector<16x16xf32>
    %cst_65 = arith.constant dense<0.000000e+00> : vector<16xf32>
    %212 = vector.multi_reduction <add>, %211, %cst_65 [1] : vector<16x16xf32> to vector<16xf32>
    %213 = vector.shape_cast %212 : vector<16xf32> to vector<16x1xf32>
    %214 = vector.extract_strided_slice %45 {offsets = [6, 0], sizes = [1, 32], strides = [1, 1]} : vector<9x32xf32> to vector<1x32xf32>
    %215 = vector.broadcast %213 : vector<16x1xf32> to vector<16x32xf32>
    %216 = vector.broadcast %214 : vector<1x32xf32> to vector<16x32xf32>
    %217 = arith.mulf %215, %216 : vector<16x32xf32>
    %218 = arith.addf %207, %217 : vector<16x32xf32>
    %c3_i32_66 = arith.constant 3 : i32
    %219 = vector.broadcast %c3_i32_66 : i32 to vector<16x16xi32>
    %220 = arith.cmpi eq, %14, %219 : vector<16x16xi32>
    %cst_67 = arith.constant 0.000000e+00 : f32
    %221 = vector.broadcast %cst_67 : f32 to vector<16x16xf32>
    %222 = arith.select %220, %139, %221 : vector<16x16xi1>, vector<16x16xf32>
    %cst_68 = arith.constant dense<0.000000e+00> : vector<16xf32>
    %223 = vector.multi_reduction <add>, %222, %cst_68 [1] : vector<16x16xf32> to vector<16xf32>
    %224 = vector.shape_cast %223 : vector<16xf32> to vector<16x1xf32>
    %225 = vector.extract_strided_slice %45 {offsets = [7, 0], sizes = [1, 32], strides = [1, 1]} : vector<9x32xf32> to vector<1x32xf32>
    %226 = vector.broadcast %224 : vector<16x1xf32> to vector<16x32xf32>
    %227 = vector.broadcast %225 : vector<1x32xf32> to vector<16x32xf32>
    %228 = arith.mulf %226, %227 : vector<16x32xf32>
    %229 = arith.addf %218, %228 : vector<16x32xf32>
    %c4_i32_69 = arith.constant 4 : i32
    %230 = vector.broadcast %c4_i32_69 : i32 to vector<16x16xi32>
    %231 = arith.cmpi eq, %14, %230 : vector<16x16xi32>
    %cst_70 = arith.constant 0.000000e+00 : f32
    %232 = vector.broadcast %cst_70 : f32 to vector<16x16xf32>
    %233 = arith.select %231, %139, %232 : vector<16x16xi1>, vector<16x16xf32>
    %cst_71 = arith.constant dense<0.000000e+00> : vector<16xf32>
    %234 = vector.multi_reduction <add>, %233, %cst_71 [1] : vector<16x16xf32> to vector<16xf32>
    %235 = vector.shape_cast %234 : vector<16xf32> to vector<16x1xf32>
    %236 = vector.extract_strided_slice %45 {offsets = [8, 0], sizes = [1, 32], strides = [1, 1]} : vector<9x32xf32> to vector<1x32xf32>
    %237 = vector.broadcast %235 : vector<16x1xf32> to vector<16x32xf32>
    %238 = vector.broadcast %236 : vector<1x32xf32> to vector<16x32xf32>
    %239 = arith.mulf %237, %238 : vector<16x32xf32>
    %240 = arith.addf %229, %239 : vector<16x32xf32>
    %c0_72 = arith.constant 0 : index
    %c0_73 = arith.constant 0 : index
    %241 = vector.load %arg30[%c0_72, %c0_73] : memref<16x64xf32, #tpu.memory_space<vmem>>, vector<16x32xf32>
    tpu.vector_store %arg30[%c0_72, %c0_73], %240 {strides = array<i32>} : memref<16x64xf32, #tpu.memory_space<vmem>>, vector<16x32xf32>,
    %242 = vector.extract_strided_slice %26 {offsets = [0, 32], sizes = [16, 32], strides = [1, 1]} : vector<16x64xf32> to vector<16x32xf32>
    %cst_74 = arith.constant 0.176776692 : f32
    %243 = vector.broadcast %cst_74 : f32 to vector<16x32xf32>
    %244 = arith.mulf %242, %243 : vector<16x32xf32>
    %245 = arith.truncf %244 : vector<16x32xf32> to vector<16x32xbf16>
    %246 = vector.extract_strided_slice %33 {offsets = [0, 32], sizes = [16, 32], strides = [1, 1]} : vector<16x64xf32> to vector<16x32xf32>
    %247 = arith.truncf %246 : vector<16x32xf32> to vector<16x32xbf16>
    %248 = vector.extract_strided_slice %40 {offsets = [0, 32], sizes = [16, 32], strides = [1, 1]} : vector<16x64xf32> to vector<16x32xf32>
    %249 = arith.truncf %248 : vector<16x32xf32> to vector<16x32xbf16>
    %cst_75 = arith.constant dense<0.000000e+00> : vector<16x16xf32>
    %250 = tpu.matmul %245, %247, %cst_75 {dimension_numbers = #tpu.dot_dimension_numbers<[1], [1], [0], [0], [0, 0, 1, 0], [], []>} : vector<16x32xbf16>, vector<16x32xbf16>, vector<16x16xf32> -> vector<16x16xf32>
    %cst_76 = arith.constant dense<0.000000e+00> : vector<16x9xf32>
    %251 = tpu.matmul %245, %43, %cst_76 {dimension_numbers = #tpu.dot_dimension_numbers<[1], [1], [0], [0], [0, 0, 1, 0], [], []>} : vector<16x32xbf16>, vector<9x32xbf16>, vector<16x9xf32> -> vector<16x9xf32>
    %252 = vector.extract_strided_slice %251 {offsets = [0, 0], sizes = [16, 1], strides = [1, 1]} : vector<16x9xf32> to vector<16x1xf32>
    %c-4_i32_77 = arith.constant -4 : i32
    %253 = vector.broadcast %c-4_i32_77 : i32 to vector<16x16xi32>
    %254 = arith.cmpi eq, %14, %253 : vector<16x16xi32>
    %cst_78 = arith.constant 0.000000e+00 : f32
    %255 = vector.shape_cast %252 : vector<16x1xf32> to vector<16x1xf32>
    %256 = vector.broadcast %255 : vector<16x1xf32> to vector<16x16xf32>
    %257 = vector.broadcast %cst_78 : f32 to vector<16x16xf32>
    %258 = arith.select %254, %256, %257 : vector<16x16xi1>, vector<16x16xf32>
    %259 = arith.addf %250, %258 : vector<16x16xf32>
    %260 = vector.extract_strided_slice %251 {offsets = [0, 1], sizes = [16, 1], strides = [1, 1]} : vector<16x9xf32> to vector<16x1xf32>
    %c-3_i32_79 = arith.constant -3 : i32
    %261 = vector.broadcast %c-3_i32_79 : i32 to vector<16x16xi32>
    %262 = arith.cmpi eq, %14, %261 : vector<16x16xi32>
    %cst_80 = arith.constant 0.000000e+00 : f32
    %263 = vector.shape_cast %260 : vector<16x1xf32> to vector<16x1xf32>
    %264 = vector.broadcast %263 : vector<16x1xf32> to vector<16x16xf32>
    %265 = vector.broadcast %cst_80 : f32 to vector<16x16xf32>
    %266 = arith.select %262, %264, %265 : vector<16x16xi1>, vector<16x16xf32>
    %267 = arith.addf %259, %266 : vector<16x16xf32>
    %268 = vector.extract_strided_slice %251 {offsets = [0, 2], sizes = [16, 1], strides = [1, 1]} : vector<16x9xf32> to vector<16x1xf32>
    %c-2_i32_81 = arith.constant -2 : i32
    %269 = vector.broadcast %c-2_i32_81 : i32 to vector<16x16xi32>
    %270 = arith.cmpi eq, %14, %269 : vector<16x16xi32>
    %cst_82 = arith.constant 0.000000e+00 : f32
    %271 = vector.shape_cast %268 : vector<16x1xf32> to vector<16x1xf32>
    %272 = vector.broadcast %271 : vector<16x1xf32> to vector<16x16xf32>
    %273 = vector.broadcast %cst_82 : f32 to vector<16x16xf32>
    %274 = arith.select %270, %272, %273 : vector<16x16xi1>, vector<16x16xf32>
    %275 = arith.addf %267, %274 : vector<16x16xf32>
    %276 = vector.extract_strided_slice %251 {offsets = [0, 3], sizes = [16, 1], strides = [1, 1]} : vector<16x9xf32> to vector<16x1xf32>
    %c-1_i32_83 = arith.constant -1 : i32
    %277 = vector.broadcast %c-1_i32_83 : i32 to vector<16x16xi32>
    %278 = arith.cmpi eq, %14, %277 : vector<16x16xi32>
    %cst_84 = arith.constant 0.000000e+00 : f32
    %279 = vector.shape_cast %276 : vector<16x1xf32> to vector<16x1xf32>
    %280 = vector.broadcast %279 : vector<16x1xf32> to vector<16x16xf32>
    %281 = vector.broadcast %cst_84 : f32 to vector<16x16xf32>
    %282 = arith.select %278, %280, %281 : vector<16x16xi1>, vector<16x16xf32>
    %283 = arith.addf %275, %282 : vector<16x16xf32>
    %284 = vector.extract_strided_slice %251 {offsets = [0, 4], sizes = [16, 1], strides = [1, 1]} : vector<16x9xf32> to vector<16x1xf32>
    %c0_i32_85 = arith.constant 0 : i32
    %285 = vector.broadcast %c0_i32_85 : i32 to vector<16x16xi32>
    %286 = arith.cmpi eq, %14, %285 : vector<16x16xi32>
    %cst_86 = arith.constant 0.000000e+00 : f32
    %287 = vector.shape_cast %284 : vector<16x1xf32> to vector<16x1xf32>
    %288 = vector.broadcast %287 : vector<16x1xf32> to vector<16x16xf32>
    %289 = vector.broadcast %cst_86 : f32 to vector<16x16xf32>
    %290 = arith.select %286, %288, %289 : vector<16x16xi1>, vector<16x16xf32>
    %291 = arith.addf %283, %290 : vector<16x16xf32>
    %292 = vector.extract_strided_slice %251 {offsets = [0, 5], sizes = [16, 1], strides = [1, 1]} : vector<16x9xf32> to vector<16x1xf32>
    %c1_i32_87 = arith.constant 1 : i32
    %293 = vector.broadcast %c1_i32_87 : i32 to vector<16x16xi32>
    %294 = arith.cmpi eq, %14, %293 : vector<16x16xi32>
    %cst_88 = arith.constant 0.000000e+00 : f32
    %295 = vector.shape_cast %292 : vector<16x1xf32> to vector<16x1xf32>
    %296 = vector.broadcast %295 : vector<16x1xf32> to vector<16x16xf32>
    %297 = vector.broadcast %cst_88 : f32 to vector<16x16xf32>
    %298 = arith.select %294, %296, %297 : vector<16x16xi1>, vector<16x16xf32>
    %299 = arith.addf %291, %298 : vector<16x16xf32>
    %300 = vector.extract_strided_slice %251 {offsets = [0, 6], sizes = [16, 1], strides = [1, 1]} : vector<16x9xf32> to vector<16x1xf32>
    %c2_i32_89 = arith.constant 2 : i32
    %301 = vector.broadcast %c2_i32_89 : i32 to vector<16x16xi32>
    %302 = arith.cmpi eq, %14, %301 : vector<16x16xi32>
    %cst_90 = arith.constant 0.000000e+00 : f32
    %303 = vector.shape_cast %300 : vector<16x1xf32> to vector<16x1xf32>
    %304 = vector.broadcast %303 : vector<16x1xf32> to vector<16x16xf32>
    %305 = vector.broadcast %cst_90 : f32 to vector<16x16xf32>
    %306 = arith.select %302, %304, %305 : vector<16x16xi1>, vector<16x16xf32>
    %307 = arith.addf %299, %306 : vector<16x16xf32>
    %308 = vector.extract_strided_slice %251 {offsets = [0, 7], sizes = [16, 1], strides = [1, 1]} : vector<16x9xf32> to vector<16x1xf32>
    %c3_i32_91 = arith.constant 3 : i32
    %309 = vector.broadcast %c3_i32_91 : i32 to vector<16x16xi32>
    %310 = arith.cmpi eq, %14, %309 : vector<16x16xi32>
    %cst_92 = arith.constant 0.000000e+00 : f32
    %311 = vector.shape_cast %308 : vector<16x1xf32> to vector<16x1xf32>
    %312 = vector.broadcast %311 : vector<16x1xf32> to vector<16x16xf32>
    %313 = vector.broadcast %cst_92 : f32 to vector<16x16xf32>
    %314 = arith.select %310, %312, %313 : vector<16x16xi1>, vector<16x16xf32>
    %315 = arith.addf %307, %314 : vector<16x16xf32>
    %316 = vector.extract_strided_slice %251 {offsets = [0, 8], sizes = [16, 1], strides = [1, 1]} : vector<16x9xf32> to vector<16x1xf32>
    %c4_i32_93 = arith.constant 4 : i32
    %317 = vector.broadcast %c4_i32_93 : i32 to vector<16x16xi32>
    %318 = arith.cmpi eq, %14, %317 : vector<16x16xi32>
    %cst_94 = arith.constant 0.000000e+00 : f32
    %319 = vector.shape_cast %316 : vector<16x1xf32> to vector<16x1xf32>
    %320 = vector.broadcast %319 : vector<16x1xf32> to vector<16x16xf32>
    %321 = vector.broadcast %cst_94 : f32 to vector<16x16xf32>
    %322 = arith.select %318, %320, %321 : vector<16x16xi1>, vector<16x16xf32>
    %323 = arith.addf %315, %322 : vector<16x16xf32>
    %cst_95 = arith.constant -1.000000e+04 : f32
    %324 = vector.broadcast %cst_95 : f32 to vector<16x16xf32>
    %325 = arith.select %13, %323, %324 : vector<16x16xi1>, vector<16x16xf32>
    %cst_96 = arith.constant dense<0xFF800000> : vector<16xf32>
    %326 = vector.multi_reduction <maximumf>, %325, %cst_96 [1] : vector<16x16xf32> to vector<16xf32>
    %327 = vector.shape_cast %326 : vector<16xf32> to vector<16x1xf32>
    %328 = vector.broadcast %327 : vector<16x1xf32> to vector<16x16xf32>
    %329 = arith.subf %325, %328 : vector<16x16xf32>
    %330 = math.exp %329 : vector<16x16xf32>
    %cst_97 = arith.constant dense<0.000000e+00> : vector<16xf32>
    %331 = vector.multi_reduction <add>, %330, %cst_97 [1] : vector<16x16xf32> to vector<16xf32>
    %332 = vector.shape_cast %331 : vector<16xf32> to vector<16x1xf32>
    %333 = tpu.reciprocal %332 {approx = true} : vector<16x1xf32> -> vector<16x1xf32>
    %334 = vector.broadcast %333 : vector<16x1xf32> to vector<16x16xf32>
    %335 = arith.mulf %330, %334 : vector<16x16xf32>
    %336 = arith.truncf %335 : vector<16x16xf32> to vector<16x16xbf16>
    %cst_98 = arith.constant dense<0.000000e+00> : vector<16x32xf32>
    %337 = tpu.matmul %336, %249, %cst_98 {dimension_numbers = #tpu.dot_dimension_numbers<[1], [0], [0], [1], [0, 0, 1, 1], [], []>} : vector<16x16xbf16>, vector<16x32xbf16>, vector<16x32xf32> -> vector<16x32xf32>
    %c-4_i32_99 = arith.constant -4 : i32
    %338 = vector.broadcast %c-4_i32_99 : i32 to vector<16x16xi32>
    %339 = arith.cmpi eq, %14, %338 : vector<16x16xi32>
    %cst_100 = arith.constant 0.000000e+00 : f32
    %340 = vector.broadcast %cst_100 : f32 to vector<16x16xf32>
    %341 = arith.select %339, %335, %340 : vector<16x16xi1>, vector<16x16xf32>
    %cst_101 = arith.constant dense<0.000000e+00> : vector<16xf32>
    %342 = vector.multi_reduction <add>, %341, %cst_101 [1] : vector<16x16xf32> to vector<16xf32>
    %343 = vector.shape_cast %342 : vector<16xf32> to vector<16x1xf32>
    %344 = vector.extract_strided_slice %45 {offsets = [0, 0], sizes = [1, 32], strides = [1, 1]} : vector<9x32xf32> to vector<1x32xf32>
    %345 = vector.broadcast %343 : vector<16x1xf32> to vector<16x32xf32>
    %346 = vector.broadcast %344 : vector<1x32xf32> to vector<16x32xf32>
    %347 = arith.mulf %345, %346 : vector<16x32xf32>
    %348 = arith.addf %337, %347 : vector<16x32xf32>
    %c-3_i32_102 = arith.constant -3 : i32
    %349 = vector.broadcast %c-3_i32_102 : i32 to vector<16x16xi32>
    %350 = arith.cmpi eq, %14, %349 : vector<16x16xi32>
    %cst_103 = arith.constant 0.000000e+00 : f32
    %351 = vector.broadcast %cst_103 : f32 to vector<16x16xf32>
    %352 = arith.select %350, %335, %351 : vector<16x16xi1>, vector<16x16xf32>
    %cst_104 = arith.constant dense<0.000000e+00> : vector<16xf32>
    %353 = vector.multi_reduction <add>, %352, %cst_104 [1] : vector<16x16xf32> to vector<16xf32>
    %354 = vector.shape_cast %353 : vector<16xf32> to vector<16x1xf32>
    %355 = vector.extract_strided_slice %45 {offsets = [1, 0], sizes = [1, 32], strides = [1, 1]} : vector<9x32xf32> to vector<1x32xf32>
    %356 = vector.broadcast %354 : vector<16x1xf32> to vector<16x32xf32>
    %357 = vector.broadcast %355 : vector<1x32xf32> to vector<16x32xf32>
    %358 = arith.mulf %356, %357 : vector<16x32xf32>
    %359 = arith.addf %348, %358 : vector<16x32xf32>
    %c-2_i32_105 = arith.constant -2 : i32
    %360 = vector.broadcast %c-2_i32_105 : i32 to vector<16x16xi32>
    %361 = arith.cmpi eq, %14, %360 : vector<16x16xi32>
    %cst_106 = arith.constant 0.000000e+00 : f32
    %362 = vector.broadcast %cst_106 : f32 to vector<16x16xf32>
    %363 = arith.select %361, %335, %362 : vector<16x16xi1>, vector<16x16xf32>
    %cst_107 = arith.constant dense<0.000000e+00> : vector<16xf32>
    %364 = vector.multi_reduction <add>, %363, %cst_107 [1] : vector<16x16xf32> to vector<16xf32>
    %365 = vector.shape_cast %364 : vector<16xf32> to vector<16x1xf32>
    %366 = vector.extract_strided_slice %45 {offsets = [2, 0], sizes = [1, 32], strides = [1, 1]} : vector<9x32xf32> to vector<1x32xf32>
    %367 = vector.broadcast %365 : vector<16x1xf32> to vector<16x32xf32>
    %368 = vector.broadcast %366 : vector<1x32xf32> to vector<16x32xf32>
    %369 = arith.mulf %367, %368 : vector<16x32xf32>
    %370 = arith.addf %359, %369 : vector<16x32xf32>
    %c-1_i32_108 = arith.constant -1 : i32
    %371 = vector.broadcast %c-1_i32_108 : i32 to vector<16x16xi32>
    %372 = arith.cmpi eq, %14, %371 : vector<16x16xi32>
    %cst_109 = arith.constant 0.000000e+00 : f32
    %373 = vector.broadcast %cst_109 : f32 to vector<16x16xf32>
    %374 = arith.select %372, %335, %373 : vector<16x16xi1>, vector<16x16xf32>
    %cst_110 = arith.constant dense<0.000000e+00> : vector<16xf32>
    %375 = vector.multi_reduction <add>, %374, %cst_110 [1] : vector<16x16xf32> to vector<16xf32>
    %376 = vector.shape_cast %375 : vector<16xf32> to vector<16x1xf32>
    %377 = vector.extract_strided_slice %45 {offsets = [3, 0], sizes = [1, 32], strides = [1, 1]} : vector<9x32xf32> to vector<1x32xf32>
    %378 = vector.broadcast %376 : vector<16x1xf32> to vector<16x32xf32>
    %379 = vector.broadcast %377 : vector<1x32xf32> to vector<16x32xf32>
    %380 = arith.mulf %378, %379 : vector<16x32xf32>
    %381 = arith.addf %370, %380 : vector<16x32xf32>
    %c0_i32_111 = arith.constant 0 : i32
    %382 = vector.broadcast %c0_i32_111 : i32 to vector<16x16xi32>
    %383 = arith.cmpi eq, %14, %382 : vector<16x16xi32>
    %cst_112 = arith.constant 0.000000e+00 : f32
    %384 = vector.broadcast %cst_112 : f32 to vector<16x16xf32>
    %385 = arith.select %383, %335, %384 : vector<16x16xi1>, vector<16x16xf32>
    %cst_113 = arith.constant dense<0.000000e+00> : vector<16xf32>
    %386 = vector.multi_reduction <add>, %385, %cst_113 [1] : vector<16x16xf32> to vector<16xf32>
    %387 = vector.shape_cast %386 : vector<16xf32> to vector<16x1xf32>
    %388 = vector.extract_strided_slice %45 {offsets = [4, 0], sizes = [1, 32], strides = [1, 1]} : vector<9x32xf32> to vector<1x32xf32>
    %389 = vector.broadcast %387 : vector<16x1xf32> to vector<16x32xf32>
    %390 = vector.broadcast %388 : vector<1x32xf32> to vector<16x32xf32>
    %391 = arith.mulf %389, %390 : vector<16x32xf32>
    %392 = arith.addf %381, %391 : vector<16x32xf32>
    %c1_i32_114 = arith.constant 1 : i32
    %393 = vector.broadcast %c1_i32_114 : i32 to vector<16x16xi32>
    %394 = arith.cmpi eq, %14, %393 : vector<16x16xi32>
    %cst_115 = arith.constant 0.000000e+00 : f32
    %395 = vector.broadcast %cst_115 : f32 to vector<16x16xf32>
    %396 = arith.select %394, %335, %395 : vector<16x16xi1>, vector<16x16xf32>
    %cst_116 = arith.constant dense<0.000000e+00> : vector<16xf32>
    %397 = vector.multi_reduction <add>, %396, %cst_116 [1] : vector<16x16xf32> to vector<16xf32>
    %398 = vector.shape_cast %397 : vector<16xf32> to vector<16x1xf32>
    %399 = vector.extract_strided_slice %45 {offsets = [5, 0], sizes = [1, 32], strides = [1, 1]} : vector<9x32xf32> to vector<1x32xf32>
    %400 = vector.broadcast %398 : vector<16x1xf32> to vector<16x32xf32>
    %401 = vector.broadcast %399 : vector<1x32xf32> to vector<16x32xf32>
    %402 = arith.mulf %400, %401 : vector<16x32xf32>
    %403 = arith.addf %392, %402 : vector<16x32xf32>
    %c2_i32_117 = arith.constant 2 : i32
    %404 = vector.broadcast %c2_i32_117 : i32 to vector<16x16xi32>
    %405 = arith.cmpi eq, %14, %404 : vector<16x16xi32>
    %cst_118 = arith.constant 0.000000e+00 : f32
    %406 = vector.broadcast %cst_118 : f32 to vector<16x16xf32>
    %407 = arith.select %405, %335, %406 : vector<16x16xi1>, vector<16x16xf32>
    %cst_119 = arith.constant dense<0.000000e+00> : vector<16xf32>
    %408 = vector.multi_reduction <add>, %407, %cst_119 [1] : vector<16x16xf32> to vector<16xf32>
    %409 = vector.shape_cast %408 : vector<16xf32> to vector<16x1xf32>
    %410 = vector.extract_strided_slice %45 {offsets = [6, 0], sizes = [1, 32], strides = [1, 1]} : vector<9x32xf32> to vector<1x32xf32>
    %411 = vector.broadcast %409 : vector<16x1xf32> to vector<16x32xf32>
    %412 = vector.broadcast %410 : vector<1x32xf32> to vector<16x32xf32>
    %413 = arith.mulf %411, %412 : vector<16x32xf32>
    %414 = arith.addf %403, %413 : vector<16x32xf32>
    %c3_i32_120 = arith.constant 3 : i32
    %415 = vector.broadcast %c3_i32_120 : i32 to vector<16x16xi32>
    %416 = arith.cmpi eq, %14, %415 : vector<16x16xi32>
    %cst_121 = arith.constant 0.000000e+00 : f32
    %417 = vector.broadcast %cst_121 : f32 to vector<16x16xf32>
    %418 = arith.select %416, %335, %417 : vector<16x16xi1>, vector<16x16xf32>
    %cst_122 = arith.constant dense<0.000000e+00> : vector<16xf32>
    %419 = vector.multi_reduction <add>, %418, %cst_122 [1] : vector<16x16xf32> to vector<16xf32>
    %420 = vector.shape_cast %419 : vector<16xf32> to vector<16x1xf32>
    %421 = vector.extract_strided_slice %45 {offsets = [7, 0], sizes = [1, 32], strides = [1, 1]} : vector<9x32xf32> to vector<1x32xf32>
    %422 = vector.broadcast %420 : vector<16x1xf32> to vector<16x32xf32>
    %423 = vector.broadcast %421 : vector<1x32xf32> to vector<16x32xf32>
    %424 = arith.mulf %422, %423 : vector<16x32xf32>
    %425 = arith.addf %414, %424 : vector<16x32xf32>
    %c4_i32_123 = arith.constant 4 : i32
    %426 = vector.broadcast %c4_i32_123 : i32 to vector<16x16xi32>
    %427 = arith.cmpi eq, %14, %426 : vector<16x16xi32>
    %cst_124 = arith.constant 0.000000e+00 : f32
    %428 = vector.broadcast %cst_124 : f32 to vector<16x16xf32>
    %429 = arith.select %427, %335, %428 : vector<16x16xi1>, vector<16x16xf32>
    %cst_125 = arith.constant dense<0.000000e+00> : vector<16xf32>
    %430 = vector.multi_reduction <add>, %429, %cst_125 [1] : vector<16x16xf32> to vector<16xf32>
    %431 = vector.shape_cast %430 : vector<16xf32> to vector<16x1xf32>
    %432 = vector.extract_strided_slice %45 {offsets = [8, 0], sizes = [1, 32], strides = [1, 1]} : vector<9x32xf32> to vector<1x32xf32>
    %433 = vector.broadcast %431 : vector<16x1xf32> to vector<16x32xf32>
    %434 = vector.broadcast %432 : vector<1x32xf32> to vector<16x32xf32>
    %435 = arith.mulf %433, %434 : vector<16x32xf32>
    %436 = arith.addf %425, %435 : vector<16x32xf32>
    %c0_126 = arith.constant 0 : index
    %c32 = arith.constant 32 : index
    %437 = vector.load %arg30[%c0_126, %c32] : memref<16x64xf32, #tpu.memory_space<vmem>>, vector<16x32xf32>
    tpu.vector_store %arg30[%c0_126, %c32], %436 {strides = array<i32>} : memref<16x64xf32, #tpu.memory_space<vmem>>, vector<16x32xf32>,
    %c0_127 = arith.constant 0 : index
    %c0_128 = arith.constant 0 : index
    %438 = vector.load %arg30[%c0_127, %c0_128] : memref<16x64xf32, #tpu.memory_space<vmem>>, vector<16x64xf32>
    %439 = arith.truncf %438 : vector<16x64xf32> to vector<16x64xbf16>
    %c0_129 = arith.constant 0 : index
    %c0_130 = arith.constant 0 : index
    %c0_131 = arith.constant 0 : index
    %440 = vector.load %arg13[%c0_129, %c0_130, %c0_131] : memref<1x64x64xbf16, #tpu.memory_space<vmem>>, vector<1x64x64xbf16>
    %441 = vector.shape_cast %440 : vector<1x64x64xbf16> to vector<64x64xbf16>
    %cst_132 = arith.constant dense<0.000000e+00> : vector<16x64xf32>
    %442 = tpu.matmul %439, %441, %cst_132 {dimension_numbers = #tpu.dot_dimension_numbers<[1], [0], [0], [1], [0, 0, 1, 1], [], []>} : vector<16x64xbf16>, vector<64x64xbf16>, vector<16x64xf32> -> vector<16x64xf32>
    %c0_133 = arith.constant 0 : index
    %c0_134 = arith.constant 0 : index
    %c0_135 = arith.constant 0 : index
    %443 = vector.load %arg14[%c0_133, %c0_134, %c0_135] : memref<1x1x64xf32, #tpu.memory_space<vmem>>, vector<1x1x64xf32>
    %444 = vector.shape_cast %443 : vector<1x1x64xf32> to vector<1x64xf32>
    %445 = vector.broadcast %444 : vector<1x64xf32> to vector<16x64xf32>
    %446 = arith.addf %442, %445 : vector<16x64xf32>
    %447 = arith.addf %18, %446 : vector<16x64xf32>
    %c0_136 = arith.constant 0 : index
    %c0_137 = arith.constant 0 : index
    %c0_138 = arith.constant 0 : index
    %448 = vector.load %arg17[%c0_136, %c0_137, %c0_138] : memref<1x1x64xf32, #tpu.memory_space<vmem>>, vector<1x1x64xf32>
    %449 = vector.shape_cast %448 : vector<1x1x64xf32> to vector<1x64xf32>
    %c0_139 = arith.constant 0 : index
    %c0_140 = arith.constant 0 : index
    %c0_141 = arith.constant 0 : index
    %450 = vector.load %arg18[%c0_139, %c0_140, %c0_141] : memref<1x1x64xf32, #tpu.memory_space<vmem>>, vector<1x1x64xf32>
    %451 = vector.shape_cast %450 : vector<1x1x64xf32> to vector<1x64xf32>
    %cst_142 = arith.constant dense<0.000000e+00> : vector<16xf32>
    %452 = vector.multi_reduction <add>, %447, %cst_142 [1] : vector<16x64xf32> to vector<16xf32>
    %453 = vector.shape_cast %452 : vector<16xf32> to vector<16x1xf32>
    %cst_143 = arith.constant 6.400000e+01 : f32
    %454 = vector.broadcast %cst_143 : f32 to vector<16x1xf32>
    %455 = arith.divf %453, %454 : vector<16x1xf32>
    %456 = vector.broadcast %455 : vector<16x1xf32> to vector<16x64xf32>
    %457 = arith.subf %447, %456 : vector<16x64xf32>
    %458 = arith.mulf %457, %457 : vector<16x64xf32>
    %cst_144 = arith.constant dense<0.000000e+00> : vector<16xf32>
    %459 = vector.multi_reduction <add>, %458, %cst_144 [1] : vector<16x64xf32> to vector<16xf32>
    %460 = vector.shape_cast %459 : vector<16xf32> to vector<16x1xf32>
    %cst_145 = arith.constant 6.400000e+01 : f32
    %461 = vector.broadcast %cst_145 : f32 to vector<16x1xf32>
    %462 = arith.divf %460, %461 : vector<16x1xf32>
    %463 = vector.broadcast %455 : vector<16x1xf32> to vector<16x64xf32>
    %464 = arith.subf %447, %463 : vector<16x64xf32>
    %cst_146 = arith.constant 9.99999974E-6 : f32
    %465 = vector.broadcast %cst_146 : f32 to vector<16x1xf32>
    %466 = arith.addf %462, %465 : vector<16x1xf32>
    %467 = math.rsqrt %466 : vector<16x1xf32>
    %468 = vector.broadcast %467 : vector<16x1xf32> to vector<16x64xf32>
    %469 = arith.mulf %464, %468 : vector<16x64xf32>
    %470 = vector.broadcast %449 : vector<1x64xf32> to vector<16x64xf32>
    %471 = arith.mulf %469, %470 : vector<16x64xf32>
    %472 = vector.broadcast %451 : vector<1x64xf32> to vector<16x64xf32>
    %473 = arith.addf %471, %472 : vector<16x64xf32>
    %474 = vector.broadcast %6 : vector<16x1xf32> to vector<16x64xf32>
    %475 = arith.mulf %473, %474 : vector<16x64xf32>
    %c0_147 = arith.constant 0 : index
    %c0_148 = arith.constant 0 : index
    %c0_149 = arith.constant 0 : index
    %476 = vector.load %arg20[%c0_147, %c0_148, %c0_149] : memref<1x1x128xf32, #tpu.memory_space<vmem>>, vector<1x1x128xf32>
    %477 = vector.shape_cast %476 : vector<1x1x128xf32> to vector<1x128xf32>
    %cst_150 = arith.constant 0.000000e+00 : f32
    %478 = vector.broadcast %cst_150 : f32 to vector<1x64xf32>
    %479 = vector.extract_strided_slice %475 {offsets = [0, 0], sizes = [15, 64], strides = [1, 1]} : vector<16x64xf32> to vector<15x64xf32>
    %480 = tpu.concatenate %478, %479 in 0 : vector<1x64xf32>, vector<15x64xf32> -> vector<16x64xf32>
    %481 = arith.truncf %480 : vector<16x64xf32> to vector<16x64xbf16>
    %c0_151 = arith.constant 0 : index
    %c0_152 = arith.constant 0 : index
    %c0_153 = arith.constant 0 : index
    %c0_154 = arith.constant 0 : index
    %482 = vector.load %arg19[%c0_151, %c0_152, %c0_153, %c0_154] : memref<1x3x64x128xbf16, #tpu.memory_space<vmem>>, vector<1x1x64x128xbf16>
    %483 = vector.shape_cast %482 : vector<1x1x64x128xbf16> to vector<64x128xbf16>
    %cst_155 = arith.constant dense<0.000000e+00> : vector<16x128xf32>
    %484 = tpu.matmul %481, %483, %cst_155 {dimension_numbers = #tpu.dot_dimension_numbers<[1], [0], [0], [1], [0, 0, 1, 1], [], []>} : vector<16x64xbf16>, vector<64x128xbf16>, vector<16x128xf32> -> vector<16x128xf32>
    %485 = vector.broadcast %477 : vector<1x128xf32> to vector<16x128xf32>
    %486 = arith.addf %485, %484 : vector<16x128xf32>
    %487 = arith.truncf %475 : vector<16x64xf32> to vector<16x64xbf16>
    %c0_156 = arith.constant 0 : index
    %c1 = arith.constant 1 : index
    %c0_157 = arith.constant 0 : index
    %c0_158 = arith.constant 0 : index
    %488 = vector.load %arg19[%c0_156, %c1, %c0_157, %c0_158] : memref<1x3x64x128xbf16, #tpu.memory_space<vmem>>, vector<1x1x64x128xbf16>
    %489 = vector.shape_cast %488 : vector<1x1x64x128xbf16> to vector<64x128xbf16>
    %cst_159 = arith.constant dense<0.000000e+00> : vector<16x128xf32>
    %490 = tpu.matmul %487, %489, %cst_159 {dimension_numbers = #tpu.dot_dimension_numbers<[1], [0], [0], [1], [0, 0, 1, 1], [], []>} : vector<16x64xbf16>, vector<64x128xbf16>, vector<16x128xf32> -> vector<16x128xf32>
    %491 = arith.addf %486, %490 : vector<16x128xf32>
    %cst_160 = arith.constant 0.000000e+00 : f32
    %492 = vector.broadcast %cst_160 : f32 to vector<1x64xf32>
    %493 = vector.extract_strided_slice %475 {offsets = [1, 0], sizes = [15, 64], strides = [1, 1]} : vector<16x64xf32> to vector<15x64xf32>
    %494 = tpu.concatenate %493, %492 in 0 : vector<15x64xf32>, vector<1x64xf32> -> vector<16x64xf32>
    %495 = arith.truncf %494 : vector<16x64xf32> to vector<16x64xbf16>
    %c0_161 = arith.constant 0 : index
    %c2 = arith.constant 2 : index
    %c0_162 = arith.constant 0 : index
    %c0_163 = arith.constant 0 : index
    %496 = vector.load %arg19[%c0_161, %c2, %c0_162, %c0_163] : memref<1x3x64x128xbf16, #tpu.memory_space<vmem>>, vector<1x1x64x128xbf16>
    %497 = vector.shape_cast %496 : vector<1x1x64x128xbf16> to vector<64x128xbf16>
    %cst_164 = arith.constant dense<0.000000e+00> : vector<16x128xf32>
    %498 = tpu.matmul %495, %497, %cst_164 {dimension_numbers = #tpu.dot_dimension_numbers<[1], [0], [0], [1], [0, 0, 1, 1], [], []>} : vector<16x64xbf16>, vector<64x128xbf16>, vector<16x128xf32> -> vector<16x128xf32>
    %499 = arith.addf %491, %498 : vector<16x128xf32>
    %cst_165 = arith.constant 0.000000e+00 : f32
    %500 = vector.broadcast %cst_165 : f32 to vector<16x128xf32>
    %501 = arith.maximumf %499, %500 : vector<16x128xf32>
    %502 = vector.broadcast %6 : vector<16x1xf32> to vector<16x128xf32>
    %503 = arith.mulf %501, %502 : vector<16x128xf32>
    %c0_166 = arith.constant 0 : index
    %c0_167 = arith.constant 0 : index
    %c0_168 = arith.constant 0 : index
    %504 = vector.load %arg22[%c0_166, %c0_167, %c0_168] : memref<1x1x64xf32, #tpu.memory_space<vmem>>, vector<1x1x64xf32>
    %505 = vector.shape_cast %504 : vector<1x1x64xf32> to vector<1x64xf32>
    %cst_169 = arith.constant 0.000000e+00 : f32
    %506 = vector.broadcast %cst_169 : f32 to vector<1x128xf32>
    %507 = vector.extract_strided_slice %503 {offsets = [0, 0], sizes = [15, 128], strides = [1, 1]} : vector<16x128xf32> to vector<15x128xf32>
    %508 = tpu.concatenate %506, %507 in 0 : vector<1x128xf32>, vector<15x128xf32> -> vector<16x128xf32>
    %509 = arith.truncf %508 : vector<16x128xf32> to vector<16x128xbf16>
    %c0_170 = arith.constant 0 : index
    %c0_171 = arith.constant 0 : index
    %c0_172 = arith.constant 0 : index
    %c0_173 = arith.constant 0 : index
    %510 = vector.load %arg21[%c0_170, %c0_171, %c0_172, %c0_173] : memref<1x3x128x64xbf16, #tpu.memory_space<vmem>>, vector<1x1x128x64xbf16>
    %511 = vector.shape_cast %510 : vector<1x1x128x64xbf16> to vector<128x64xbf16>
    %cst_174 = arith.constant dense<0.000000e+00> : vector<16x64xf32>
    %512 = tpu.matmul %509, %511, %cst_174 {dimension_numbers = #tpu.dot_dimension_numbers<[1], [0], [0], [1], [0, 0, 1, 1], [], []>} : vector<16x128xbf16>, vector<128x64xbf16>, vector<16x64xf32> -> vector<16x64xf32>
    %513 = vector.broadcast %505 : vector<1x64xf32> to vector<16x64xf32>
    %514 = arith.addf %513, %512 : vector<16x64xf32>
    %515 = arith.truncf %503 : vector<16x128xf32> to vector<16x128xbf16>
    %c0_175 = arith.constant 0 : index
    %c1_176 = arith.constant 1 : index
    %c0_177 = arith.constant 0 : index
    %c0_178 = arith.constant 0 : index
    %516 = vector.load %arg21[%c0_175, %c1_176, %c0_177, %c0_178] : memref<1x3x128x64xbf16, #tpu.memory_space<vmem>>, vector<1x1x128x64xbf16>
    %517 = vector.shape_cast %516 : vector<1x1x128x64xbf16> to vector<128x64xbf16>
    %cst_179 = arith.constant dense<0.000000e+00> : vector<16x64xf32>
    %518 = tpu.matmul %515, %517, %cst_179 {dimension_numbers = #tpu.dot_dimension_numbers<[1], [0], [0], [1], [0, 0, 1, 1], [], []>} : vector<16x128xbf16>, vector<128x64xbf16>, vector<16x64xf32> -> vector<16x64xf32>
    %519 = arith.addf %514, %518 : vector<16x64xf32>
    %cst_180 = arith.constant 0.000000e+00 : f32
    %520 = vector.broadcast %cst_180 : f32 to vector<1x128xf32>
    %521 = vector.extract_strided_slice %503 {offsets = [1, 0], sizes = [15, 128], strides = [1, 1]} : vector<16x128xf32> to vector<15x128xf32>
    %522 = tpu.concatenate %521, %520 in 0 : vector<15x128xf32>, vector<1x128xf32> -> vector<16x128xf32>
    %523 = arith.truncf %522 : vector<16x128xf32> to vector<16x128xbf16>
    %c0_181 = arith.constant 0 : index
    %c2_182 = arith.constant 2 : index
    %c0_183 = arith.constant 0 : index
    %c0_184 = arith.constant 0 : index
    %524 = vector.load %arg21[%c0_181, %c2_182, %c0_183, %c0_184] : memref<1x3x128x64xbf16, #tpu.memory_space<vmem>>, vector<1x1x128x64xbf16>
    %525 = vector.shape_cast %524 : vector<1x1x128x64xbf16> to vector<128x64xbf16>
    %cst_185 = arith.constant dense<0.000000e+00> : vector<16x64xf32>
    %526 = tpu.matmul %523, %525, %cst_185 {dimension_numbers = #tpu.dot_dimension_numbers<[1], [0], [0], [1], [0, 0, 1, 1], [], []>} : vector<16x128xbf16>, vector<128x64xbf16>, vector<16x64xf32> -> vector<16x64xf32>
    %527 = arith.addf %519, %526 : vector<16x64xf32>
    %528 = vector.broadcast %6 : vector<16x1xf32> to vector<16x64xf32>
    %529 = arith.mulf %527, %528 : vector<16x64xf32>
    %530 = arith.addf %473, %529 : vector<16x64xf32>
    %c0_186 = arith.constant 0 : index
    %c0_187 = arith.constant 0 : index
    %c0_188 = arith.constant 0 : index
    %531 = vector.load %arg23[%c0_186, %c0_187, %c0_188] : memref<1x1x64xf32, #tpu.memory_space<vmem>>, vector<1x1x64xf32>
    %532 = vector.shape_cast %531 : vector<1x1x64xf32> to vector<1x64xf32>
    %c0_189 = arith.constant 0 : index
    %c0_190 = arith.constant 0 : index
    %c0_191 = arith.constant 0 : index
    %533 = vector.load %arg24[%c0_189, %c0_190, %c0_191] : memref<1x1x64xf32, #tpu.memory_space<vmem>>, vector<1x1x64xf32>
    %534 = vector.shape_cast %533 : vector<1x1x64xf32> to vector<1x64xf32>
    %cst_192 = arith.constant dense<0.000000e+00> : vector<16xf32>
    %535 = vector.multi_reduction <add>, %530, %cst_192 [1] : vector<16x64xf32> to vector<16xf32>
    %536 = vector.shape_cast %535 : vector<16xf32> to vector<16x1xf32>
    %cst_193 = arith.constant 6.400000e+01 : f32
    %537 = vector.broadcast %cst_193 : f32 to vector<16x1xf32>
    %538 = arith.divf %536, %537 : vector<16x1xf32>
    %539 = vector.broadcast %538 : vector<16x1xf32> to vector<16x64xf32>
    %540 = arith.subf %530, %539 : vector<16x64xf32>
    %541 = arith.mulf %540, %540 : vector<16x64xf32>
    %cst_194 = arith.constant dense<0.000000e+00> : vector<16xf32>
    %542 = vector.multi_reduction <add>, %541, %cst_194 [1] : vector<16x64xf32> to vector<16xf32>
    %543 = vector.shape_cast %542 : vector<16xf32> to vector<16x1xf32>
    %cst_195 = arith.constant 6.400000e+01 : f32
    %544 = vector.broadcast %cst_195 : f32 to vector<16x1xf32>
    %545 = arith.divf %543, %544 : vector<16x1xf32>
    %546 = vector.broadcast %538 : vector<16x1xf32> to vector<16x64xf32>
    %547 = arith.subf %530, %546 : vector<16x64xf32>
    %cst_196 = arith.constant 9.99999974E-6 : f32
    %548 = vector.broadcast %cst_196 : f32 to vector<16x1xf32>
    %549 = arith.addf %545, %548 : vector<16x1xf32>
    %550 = math.rsqrt %549 : vector<16x1xf32>
    %551 = vector.broadcast %550 : vector<16x1xf32> to vector<16x64xf32>
    %552 = arith.mulf %547, %551 : vector<16x64xf32>
    %553 = vector.broadcast %532 : vector<1x64xf32> to vector<16x64xf32>
    %554 = arith.mulf %552, %553 : vector<16x64xf32>
    %555 = vector.broadcast %534 : vector<1x64xf32> to vector<16x64xf32>
    %556 = arith.addf %554, %555 : vector<16x64xf32>
    %c0_197 = arith.constant 0 : index
    %c0_198 = arith.constant 0 : index
    %557 = vector.load %arg29[%c0_197, %c0_198] : memref<16x64xf32, #tpu.memory_space<vmem>>, vector<16x64xf32>
    tpu.vector_store %arg29[%c0_197, %c0_198], %556 {strides = array<i32>} : memref<16x64xf32, #tpu.memory_space<vmem>>, vector<16x64xf32>,
    %c1_i32_199 = arith.constant 1 : i32
    %558 = arith.cmpi eq, %arg1, %c1_i32_199 : i32
    %559 = arith.extui %558 : i1 to i32
    %c0_i32_200 = arith.constant 0 : i32
    %560 = arith.cmpi ne, %559, %c0_i32_200 : i32
    scf.if %560 {
      %561 = vector.broadcast %6 : vector<16x1xf32> to vector<16x64xf32>
      %562 = arith.mulf %556, %561 : vector<16x64xf32>
      %c0_201 = arith.constant 0 : index
      %c0_202 = arith.constant 0 : index
      %c0_203 = arith.constant 0 : index
      %563 = vector.load %arg27[%c0_201, %c0_202, %c0_203] : memref<1x16x64xf32, #tpu.memory_space<vmem>>, vector<1x16x64xf32>
      %564 = vector.shape_cast %563 : vector<1x16x64xf32> to vector<16x64xf32>
      %565 = vector.shape_cast %562 : vector<16x64xf32> to vector<1x16x64xf32>
      tpu.vector_store %arg27[%c0_201, %c0_202, %c0_203], %565 {strides = array<i32>} : memref<1x16x64xf32, #tpu.memory_space<vmem>>, vector<1x16x64xf32>,
      %566 = arith.truncf %562 : vector<16x64xf32> to vector<16x64xbf16>
      %c0_204 = arith.constant 0 : index
      %c0_205 = arith.constant 0 : index
      %567 = vector.load %arg25[%c0_204, %c0_205] : memref<64x32xbf16, #tpu.memory_space<vmem>>, vector<64x32xbf16>
      %cst_206 = arith.constant dense<0.000000e+00> : vector<16x32xf32>
      %568 = tpu.matmul %566, %567, %cst_206 {dimension_numbers = #tpu.dot_dimension_numbers<[1], [0], [0], [1], [0, 0, 1, 1], [], []>} : vector<16x64xbf16>, vector<64x32xbf16>, vector<16x32xf32> -> vector<16x32xf32>
      %c0_207 = arith.constant 0 : index
      %c0_208 = arith.constant 0 : index
      %569 = vector.load %arg26[%c0_207, %c0_208] : memref<1x32xf32, #tpu.memory_space<vmem>>, vector<1x32xf32>
      %570 = vector.broadcast %569 : vector<1x32xf32> to vector<16x32xf32>
      %571 = arith.addf %568, %570 : vector<16x32xf32>
      %572 = vector.broadcast %6 : vector<16x1xf32> to vector<16x32xf32>
      %573 = arith.mulf %571, %572 : vector<16x32xf32>
      %c0_209 = arith.constant 0 : index
      %c0_210 = arith.constant 0 : index
      %c0_211 = arith.constant 0 : index
      %574 = vector.load %arg28[%c0_209, %c0_210, %c0_211] : memref<1x16x32xf32, #tpu.memory_space<vmem>>, vector<1x16x32xf32>
      %575 = vector.shape_cast %574 : vector<1x16x32xf32> to vector<16x32xf32>
      %576 = vector.shape_cast %573 : vector<16x32xf32> to vector<1x16x32xf32>
      tpu.vector_store %arg28[%c0_209, %c0_210, %c0_211], %576 {strides = array<i32>} : memref<1x16x32xf32, #tpu.memory_space<vmem>>, vector<1x16x32xf32>,
    } else {
    }
    return
  }
  func.func @transform_0(%arg0: i32, %arg1: i32, %arg2: memref<2xi32, #tpu.memory_space<smem>>) -> (i32, i32, i32) {
    %c0_i32 = arith.constant 0 : i32
    %c0_i32_0 = arith.constant 0 : i32
    %c0_i32_1 = arith.constant 0 : i32
    return %arg0, %c0_i32, %c0_i32_0 : i32, i32, i32
  }
  func.func @transform_1(%arg0: i32, %arg1: i32, %arg2: memref<2xi32, #tpu.memory_space<smem>>) -> (i32, i32, i32) {
    %c0_i32 = arith.constant 0 : i32
    %c0_i32_0 = arith.constant 0 : i32
    %c0_i32_1 = arith.constant 0 : i32
    return %arg0, %c0_i32, %c0_i32_0 : i32, i32, i32
  }
  func.func @transform_2(%arg0: i32, %arg1: i32, %arg2: memref<2xi32, #tpu.memory_space<smem>>) -> (i32, i32) {
    %c0_i32 = arith.constant 0 : i32
    %c0_i32_0 = arith.constant 0 : i32
    %c0_i32_1 = arith.constant 0 : i32
    return %c0_i32, %c0_i32_0 : i32, i32
  }
  func.func @transform_3(%arg0: i32, %arg1: i32, %arg2: memref<2xi32, #tpu.memory_space<smem>>) -> (i32, i32) {
    %c0_i32 = arith.constant 0 : i32
    %c0_i32_0 = arith.constant 0 : i32
    %c0_i32_1 = arith.constant 0 : i32
    return %c0_i32, %c0_i32_0 : i32, i32
  }
  func.func @transform_4(%arg0: i32, %arg1: i32, %arg2: memref<2xi32, #tpu.memory_space<smem>>) -> (i32, i32, i32) {
    %c0_i32 = arith.constant 0 : i32
    %c0_i32_0 = arith.constant 0 : i32
    %c0_i32_1 = arith.constant 0 : i32
    return %arg1, %c0_i32, %c0_i32_0 : i32, i32, i32
  }
  func.func @transform_5(%arg0: i32, %arg1: i32, %arg2: memref<2xi32, #tpu.memory_space<smem>>) -> (i32, i32, i32) {
    %c0_i32 = arith.constant 0 : i32
    %c0_i32_0 = arith.constant 0 : i32
    %c0_i32_1 = arith.constant 0 : i32
    return %arg1, %c0_i32, %c0_i32_0 : i32, i32, i32
  }
  func.func @transform_6(%arg0: i32, %arg1: i32, %arg2: memref<2xi32, #tpu.memory_space<smem>>) -> (i32, i32, i32) {
    %c0_i32 = arith.constant 0 : i32
    %c0_i32_0 = arith.constant 0 : i32
    %c0_i32_1 = arith.constant 0 : i32
    return %arg1, %c0_i32, %c0_i32_0 : i32, i32, i32
  }
  func.func @transform_7(%arg0: i32, %arg1: i32, %arg2: memref<2xi32, #tpu.memory_space<smem>>) -> (i32, i32, i32) {
    %c0_i32 = arith.constant 0 : i32
    %c0_i32_0 = arith.constant 0 : i32
    %c0_i32_1 = arith.constant 0 : i32
    return %arg1, %c0_i32, %c0_i32_0 : i32, i32, i32
  }
  func.func @transform_8(%arg0: i32, %arg1: i32, %arg2: memref<2xi32, #tpu.memory_space<smem>>) -> (i32, i32, i32) {
    %c0_i32 = arith.constant 0 : i32
    %c0_i32_0 = arith.constant 0 : i32
    %c0_i32_1 = arith.constant 0 : i32
    return %arg1, %c0_i32, %c0_i32_0 : i32, i32, i32
  }
  func.func @transform_9(%arg0: i32, %arg1: i32, %arg2: memref<2xi32, #tpu.memory_space<smem>>) -> (i32, i32, i32) {
    %c0_i32 = arith.constant 0 : i32
    %c0_i32_0 = arith.constant 0 : i32
    %c0_i32_1 = arith.constant 0 : i32
    return %arg1, %c0_i32, %c0_i32_0 : i32, i32, i32
  }
  func.func @transform_10(%arg0: i32, %arg1: i32, %arg2: memref<2xi32, #tpu.memory_space<smem>>) -> (i32, i32, i32) {
    %c0_i32 = arith.constant 0 : i32
    %c0_i32_0 = arith.constant 0 : i32
    %c0_i32_1 = arith.constant 0 : i32
    return %arg1, %c0_i32, %c0_i32_0 : i32, i32, i32
  }
  func.func @transform_11(%arg0: i32, %arg1: i32, %arg2: memref<2xi32, #tpu.memory_space<smem>>) -> (i32, i32, i32) {
    %c0_i32 = arith.constant 0 : i32
    %c0_i32_0 = arith.constant 0 : i32
    %c0_i32_1 = arith.constant 0 : i32
    return %arg1, %c0_i32, %c0_i32_0 : i32, i32, i32
  }
  func.func @transform_12(%arg0: i32, %arg1: i32, %arg2: memref<2xi32, #tpu.memory_space<smem>>) -> (i32, i32, i32) {
    %c0_i32 = arith.constant 0 : i32
    %c0_i32_0 = arith.constant 0 : i32
    %c0_i32_1 = arith.constant 0 : i32
    return %arg1, %c0_i32, %c0_i32_0 : i32, i32, i32
  }
  func.func @transform_13(%arg0: i32, %arg1: i32, %arg2: memref<2xi32, #tpu.memory_space<smem>>) -> (i32, i32, i32) {
    %c0_i32 = arith.constant 0 : i32
    %c0_i32_0 = arith.constant 0 : i32
    %c0_i32_1 = arith.constant 0 : i32
    return %arg1, %c0_i32, %c0_i32_0 : i32, i32, i32
  }
  func.func @transform_14(%arg0: i32, %arg1: i32, %arg2: memref<2xi32, #tpu.memory_space<smem>>) -> (i32, i32, i32) {
    %c0_i32 = arith.constant 0 : i32
    %c0_i32_0 = arith.constant 0 : i32
    %c0_i32_1 = arith.constant 0 : i32
    return %arg1, %c0_i32, %c0_i32_0 : i32, i32, i32
  }
  func.func @transform_15(%arg0: i32, %arg1: i32, %arg2: memref<2xi32, #tpu.memory_space<smem>>) -> (i32, i32, i32) {
    %c0_i32 = arith.constant 0 : i32
    %c0_i32_0 = arith.constant 0 : i32
    %c0_i32_1 = arith.constant 0 : i32
    return %arg1, %c0_i32, %c0_i32_0 : i32, i32, i32
  }
  func.func @transform_16(%arg0: i32, %arg1: i32, %arg2: memref<2xi32, #tpu.memory_space<smem>>) -> (i32, i32, i32, i32) {
    %c0_i32 = arith.constant 0 : i32
    %c0_i32_0 = arith.constant 0 : i32
    %c0_i32_1 = arith.constant 0 : i32
    %c0_i32_2 = arith.constant 0 : i32
    return %arg1, %c0_i32, %c0_i32_0, %c0_i32_1 : i32, i32, i32, i32
  }
  func.func @transform_17(%arg0: i32, %arg1: i32, %arg2: memref<2xi32, #tpu.memory_space<smem>>) -> (i32, i32, i32) {
    %c0_i32 = arith.constant 0 : i32
    %c0_i32_0 = arith.constant 0 : i32
    %c0_i32_1 = arith.constant 0 : i32
    return %arg1, %c0_i32, %c0_i32_0 : i32, i32, i32
  }
  func.func @transform_18(%arg0: i32, %arg1: i32, %arg2: memref<2xi32, #tpu.memory_space<smem>>) -> (i32, i32, i32, i32) {
    %c0_i32 = arith.constant 0 : i32
    %c0_i32_0 = arith.constant 0 : i32
    %c0_i32_1 = arith.constant 0 : i32
    %c0_i32_2 = arith.constant 0 : i32
    return %arg1, %c0_i32, %c0_i32_0, %c0_i32_1 : i32, i32, i32, i32
  }
  func.func @transform_19(%arg0: i32, %arg1: i32, %arg2: memref<2xi32, #tpu.memory_space<smem>>) -> (i32, i32, i32) {
    %c0_i32 = arith.constant 0 : i32
    %c0_i32_0 = arith.constant 0 : i32
    %c0_i32_1 = arith.constant 0 : i32
    return %arg1, %c0_i32, %c0_i32_0 : i32, i32, i32
  }
  func.func @transform_20(%arg0: i32, %arg1: i32, %arg2: memref<2xi32, #tpu.memory_space<smem>>) -> (i32, i32, i32) {
    %c0_i32 = arith.constant 0 : i32
    %c0_i32_0 = arith.constant 0 : i32
    %c0_i32_1 = arith.constant 0 : i32
    return %arg1, %c0_i32, %c0_i32_0 : i32, i32, i32
  }
  func.func @transform_21(%arg0: i32, %arg1: i32, %arg2: memref<2xi32, #tpu.memory_space<smem>>) -> (i32, i32, i32) {
    %c0_i32 = arith.constant 0 : i32
    %c0_i32_0 = arith.constant 0 : i32
    %c0_i32_1 = arith.constant 0 : i32
    return %arg1, %c0_i32, %c0_i32_0 : i32, i32, i32
  }
  func.func @transform_22(%arg0: i32, %arg1: i32, %arg2: memref<2xi32, #tpu.memory_space<smem>>) -> (i32, i32) {
    %c0_i32 = arith.constant 0 : i32
    %c0_i32_0 = arith.constant 0 : i32
    %c0_i32_1 = arith.constant 0 : i32
    return %c0_i32, %c0_i32_0 : i32, i32
  }
  func.func @transform_23(%arg0: i32, %arg1: i32, %arg2: memref<2xi32, #tpu.memory_space<smem>>) -> (i32, i32) {
    %c0_i32 = arith.constant 0 : i32
    %c0_i32_0 = arith.constant 0 : i32
    %c0_i32_1 = arith.constant 0 : i32
    return %c0_i32, %c0_i32_0 : i32, i32
  }
  func.func @transform_24(%arg0: i32, %arg1: i32, %arg2: memref<2xi32, #tpu.memory_space<smem>>) -> (i32, i32, i32) {
    %c0_i32 = arith.constant 0 : i32
    %c0_i32_0 = arith.constant 0 : i32
    %c0_i32_1 = arith.constant 0 : i32
    return %arg0, %c0_i32, %c0_i32_0 : i32, i32, i32
  }
  func.func @transform_25(%arg0: i32, %arg1: i32, %arg2: memref<2xi32, #tpu.memory_space<smem>>) -> (i32, i32, i32) {
    %c0_i32 = arith.constant 0 : i32
    %c0_i32_0 = arith.constant 0 : i32
    %c0_i32_1 = arith.constant 0 : i32
    return %arg0, %c0_i32, %c0_i32_0 : i32, i32, i32
  }
}

</mosaic_0001>

<llo_original>
// kernel: tpu_custom_call.1
$region0: #{tpu_custom_call.1}
  #allocation0 [shape = 'u32[]', space=smem, size = 0x4, offset = 0x4, fixed_abs, tag = 'smem constant byte address 0x4 - core index']
  #allocation1 [shape = 'u32[144,128]{1,0:T(1,128)}', space=vmem, size = 0x12000, scoped, tag = 'internal scratch']
  #allocation2 [shape = 'f32[16,64]{1,0:T(8,128)}', space=vmem, size = 0x2000, scoped, tag = 'scratch operand']
  #allocation3 [shape = 'f32[16,64]{1,0:T(8,128)}', space=vmem, size = 0x2000, scoped, tag = 'scratch operand']
  #allocation4 [shape = 's32[1]{0}', space=sflag, size = 0x4, scoped, tag = 'scoped memory for tpu_custom_call.1']
  #allocation5 [shape = 'u8[512]{0}', space=smem, size = 0x200, scoped, tag = 'prefetched SMEM operand 0']
  %s0 = inlined_call_operand.vmem [shape: s32[2], index: 0, kind: input, shape index: {}]
  %s1 = inlined_call_operand.vmem [shape: f32[2,16,64], index: 1, kind: input, shape index: {}]
  %s2 = inlined_call_operand.vmem [shape: bf16[2,16,1792], index: 2, kind: input, shape index: {}]
  %s3 = inlined_call_operand.vmem [shape: bf16[1792,64], index: 3, kind: input, shape index: {}]
  %s4 = inlined_call_operand.vmem [shape: f32[1,64], index: 4, kind: input, shape index: {}]
  %s5 = inlined_call_operand.vmem [shape: bf16[2,64,64], index: 5, kind: input, shape index: {}]
  %s6 = inlined_call_operand.vmem [shape: f32[2,1,64], index: 6, kind: input, shape index: {}]
  %s7 = inlined_call_operand.vmem [shape: bf16[2,64,64], index: 7, kind: input, shape index: {}]
  %s8 = inlined_call_operand.vmem [shape: f32[2,1,64], index: 8, kind: input, shape index: {}]
  %s9 = inlined_call_operand.vmem [shape: bf16[2,64,64], index: 9, kind: input, shape index: {}]
  %s10 = inlined_call_operand.vmem [shape: f32[2,1,64], index: 10, kind: input, shape index: {}]
  %s11 = inlined_call_operand.vmem [shape: bf16[2,64,64], index: 11, kind: input, shape index: {}]
  %s12 = inlined_call_operand.vmem [shape: f32[2,1,64], index: 12, kind: input, shape index: {}]
  %s13 = inlined_call_operand.vmem [shape: f32[2,9,32], index: 13, kind: input, shape index: {}]
  %s14 = inlined_call_operand.vmem [shape: f32[2,9,32], index: 14, kind: input, shape index: {}]
  %s15 = inlined_call_operand.vmem [shape: f32[2,1,64], index: 15, kind: input, shape index: {}]
  %s16 = inlined_call_operand.vmem [shape: f32[2,1,64], index: 16, kind: input, shape index: {}]
  %s17 = inlined_call_operand.vmem [shape: bf16[2,3,64,128], index: 17, kind: input, shape index: {}]
  %s18 = inlined_call_operand.vmem [shape: f32[2,1,128], index: 18, kind: input, shape index: {}]
  %s19 = inlined_call_operand.vmem [shape: bf16[2,3,128,64], index: 19, kind: input, shape index: {}]
  %s20 = inlined_call_operand.vmem [shape: f32[2,1,64], index: 20, kind: input, shape index: {}]
  %s21 = inlined_call_operand.vmem [shape: f32[2,1,64], index: 21, kind: input, shape index: {}]
  %s22 = inlined_call_operand.vmem [shape: f32[2,1,64], index: 22, kind: input, shape index: {}]
  %s23 = inlined_call_operand.vmem [shape: bf16[64,32], index: 23, kind: input, shape index: {}]
  %s24 = inlined_call_operand.vmem [shape: f32[1,32], index: 24, kind: input, shape index: {}]
  %s25 = inlined_call_operand.hbm [shape: f32[2,16,64], index: 25, kind: output, shape index: {0}]
  %s26 = inlined_call_operand.hbm [shape: f32[2,16,32], index: 26, kind: output, shape index: {1}]
  %27 = xla_tuple %s25, %s26
  %s28 = sld [smem:[#allocation0]]
  $region145: #{tpu_custom_call.1} parent=0
    _
  %s30 = ssub.s32 1, %s28
  %s31 = scalar_select 0, %s30, %s28
  %s32 = sshll.u32 %s0, 4
  %s33 = int_to_ptr.vmem [resolvable:$true] %s32
  %35 = dma.vmem_to_smem %s33, 16, [#allocation5], [#allocation4]
  %36 = dma.done [#allocation4], 16
  %37 = sfence
  $region1: #{tpu_custom_call.1} parent=0
    #allocation6 [shape = 'u8[16384]{0}', space=vmem, size = 0x4000, scoped, tag = 'output window, operand 0']
    #allocation7 [shape = 's32[2]{0}', space=sflag, size = 0x8, scoped, tag = 'scoped memory for tpu_custom_call.1']
    #allocation8 [shape = 'u8[16384]{0}', space=vmem, size = 0x4000, scoped, tag = 'output window, operand 1']
    #allocation9 [shape = 's32[2]{0}', space=sflag, size = 0x8, scoped, tag = 'scoped memory for tpu_custom_call.1']
    %38 = vsyncpa [#allocation7], 0
    %s39 = scalar_lea.sflag [#allocation7], 1
    %40 = vsyncpa %s39, 0
    %41 = vsyncpa [#allocation9], 0
    %s42 = scalar_lea.sflag [#allocation9], 1
    %43 = vsyncpa %s42, 0
    loop: start=0, step=1, limit=6
    $region2: #{tpu_custom_call.1} parent=1 // loop_pre_header
      _
    $region3: #{tpu_custom_call.1} parent=1 // loop_header
      %s45 = sphi 0, %s49
      %p46 = scmp.ge.s32.totalorder %s45, 6
      %s52 = sphi 0, %s64
      %s53 = sphi 0, %s60
      %s54 = sphi 0, %s52
      %s55 = sphi 0, %s53
      %s56 = sphi 0, %s54
      %s57 = sphi 0, %s55
      %s67 = sphi 0, %s69
      %s70 = sphi 0, %s67
      %s71 = sphi 0, %s70
      %s87 = sphi 0, %s71
      %s93 = sphi 0, %s95
      %s96 = sphi 0, %s93
      %s97 = sphi 0, %s96
      %s113 = sphi 0, %s97
      %s117 = sphi 0, %s117
      %s119 = sphi 0, %s117
      %s120 = sphi 0, %s119
      %s134 = sphi 0, %s120
      %s138 = sphi 0, %s138
      %s140 = sphi 0, %s138
      %s141 = sphi 0, %s140
      %s155 = sphi 0, %s141
      %s161 = sphi 0, %s163
      %s164 = sphi 0, %s161
      %s165 = sphi 0, %s164
      %s181 = sphi 0, %s165
      %s187 = sphi 0, %s189
      %s190 = sphi 0, %s187
      %s191 = sphi 0, %s190
      %s207 = sphi 0, %s191
      %s213 = sphi 0, %s215
      %s216 = sphi 0, %s213
      %s217 = sphi 0, %s216
      %s233 = sphi 0, %s217
      %s239 = sphi 0, %s241
      %s242 = sphi 0, %s239
      %s243 = sphi 0, %s242
      %s259 = sphi 0, %s243
      %s265 = sphi 0, %s267
      %s268 = sphi 0, %s265
      %s269 = sphi 0, %s268
      %s285 = sphi 0, %s269
      %s291 = sphi 0, %s293
      %s294 = sphi 0, %s291
      %s295 = sphi 0, %s294
      %s311 = sphi 0, %s295
      %s317 = sphi 0, %s319
      %s320 = sphi 0, %s317
      %s321 = sphi 0, %s320
      %s337 = sphi 0, %s321
      %s343 = sphi 0, %s345
      %s346 = sphi 0, %s343
      %s347 = sphi 0, %s346
      %s363 = sphi 0, %s347
      %s369 = sphi 0, %s371
      %s372 = sphi 0, %s369
      %s373 = sphi 0, %s372
      %s389 = sphi 0, %s373
      %s395 = sphi 0, %s397
      %s398 = sphi 0, %s395
      %s399 = sphi 0, %s398
      %s415 = sphi 0, %s399
      %s421 = sphi 0, %s423
      %s424 = sphi 0, %s421
      %s425 = sphi 0, %s424
      %s441 = sphi 0, %s425
      %s447 = sphi 0, %s449
      %s450 = sphi 0, %s447
      %s451 = sphi 0, %s450
      %s467 = sphi 0, %s451
      %s473 = sphi 0, %s475
      %s476 = sphi 0, %s473
      %s477 = sphi 0, %s476
      %s493 = sphi 0, %s477
      %s499 = sphi 0, %s501
      %s502 = sphi 0, %s499
      %s503 = sphi 0, %s502
      %s519 = sphi 0, %s503
      %s525 = sphi 0, %s527
      %s528 = sphi 0, %s525
      %s529 = sphi 0, %s528
      %s545 = sphi 0, %s529
      %s551 = sphi 0, %s553
      %s554 = sphi 0, %s551
      %s555 = sphi 0, %s554
      %s571 = sphi 0, %s555
      %s577 = sphi 0, %s579
      %s580 = sphi 0, %s577
      %s581 = sphi 0, %s580
      %s597 = sphi 0, %s581
      %s603 = sphi 0, %s605
      %s606 = sphi 0, %s603
      %s607 = sphi 0, %s606
      %s623 = sphi 0, %s607
      %s627 = sphi 0, %s627
      %s629 = sphi 0, %s627
      %s630 = sphi 0, %s629
      %s644 = sphi 0, %s630
      %s648 = sphi 0, %s648
      %s650 = sphi 0, %s648
      %s651 = sphi 0, %s650
      %s665 = sphi 0, %s651
      %s671 = sphi 0, %s673
      %s674 = sphi 0, %s671
      %s675 = sphi 0, %s674
      %s691 = sphi 0, %s675
      %s697 = sphi 0, %s699
      %s700 = sphi 0, %s697
      %s701 = sphi 0, %s700
      %s717 = sphi 0, %s701
    $region4: #{tpu_custom_call.1} parent=1 // loop_header_branch
      %48 = sbr.rel (%p46) target = $region8
    $region5: #{tpu_custom_call.1} parent=1 // loop_body
      %s50 = ssub.s32 %s45, 1
      %s51 = ssub.s32 %s45, 2
      %s58 = sadd.s32 1, %s53
      %p59 = scmp.ge.s32.totalorder %s58, 2
      %s60 = scalar_select %p59, 0, %s58
      %s61 = sadd.s32 1, %s52
      %s62 = scalar_select %p59, %s61, %s52
      %p63 = scmp.ge.s32.totalorder %s62, 2
      %s64 = scalar_select %p63, 0, %s62
      %s65 = ssub.s32 %s52, %s64
      %p66 = scmp.eq.s32.totalorder %s65, 0
      %s68 = sadd.s32 %s67, 1
      %s69 = scalar_select %p66, %s67, %s68
      %p72 = pneg %p66
      %p73 = scmp.eq.s32.totalorder %s45, 3
      %p74 = por %p72, %p73
      %p75 = scmp.ne.s32.totalorder %s67, %s70
      %p76 = scmp.eq.s32.totalorder %s45, 0
      %p77 = por %p75, %p76
      %p78 = scmp.ne.s32.totalorder %s67, %s70
      %p79 = scmp.eq.s32.totalorder %s50, 3
      %p80 = por %p78, %p79
      %p81 = scmp.ne.s32.totalorder %s70, %s71
      %p82 = scmp.eq.s32.totalorder %s50, 0
      %p83 = por %p81, %p82
      %p84 = scmp.ne.s32.totalorder %s70, %s71
      %p85 = scmp.eq.s32.totalorder %s51, 3
      %p86 = por %p84, %p85
      %p88 = scmp.ne.s32.totalorder %s71, %s87
      %p89 = scmp.eq.s32.totalorder %s51, 0
      %p90 = por %p88, %p89
      %s91 = ssub.s32 %s52, %s64
      %p92 = scmp.eq.s32.totalorder %s91, 0
      %s94 = sadd.s32 %s93, 1
      %s95 = scalar_select %p92, %s93, %s94
      %p98 = pneg %p92
      %p99 = scmp.eq.s32.totalorder %s45, 3
      %p100 = por %p98, %p99
      %p101 = scmp.ne.s32.totalorder %s93, %s96
      %p102 = scmp.eq.s32.totalorder %s45, 0
      %p103 = por %p101, %p102
      %p104 = scmp.ne.s32.totalorder %s93, %s96
      %p105 = scmp.eq.s32.totalorder %s50, 3
      %p106 = por %p104, %p105
      %p107 = scmp.ne.s32.totalorder %s96, %s97
      %p108 = scmp.eq.s32.totalorder %s50, 0
      %p109 = por %p107, %p108
      %p110 = scmp.ne.s32.totalorder %s96, %s97
      %p111 = scmp.eq.s32.totalorder %s51, 3
      %p112 = por %p110, %p111
      %p114 = scmp.ne.s32.totalorder %s97, %s113
      %p115 = scmp.eq.s32.totalorder %s51, 0
      %p116 = por %p114, %p115
      %s118 = sadd.s32 %s117, 1
      %p121 = scmp.eq.s32.totalorder %s45, 3
      %p122 = scmp.ne.s32.totalorder %s117, %s119
      %p123 = scmp.eq.s32.totalorder %s45, 0
      %p124 = por %p122, %p123
      %p125 = scmp.ne.s32.totalorder %s117, %s119
      %p126 = scmp.eq.s32.totalorder %s50, 3
      %p127 = por %p125, %p126
      %p128 = scmp.ne.s32.totalorder %s119, %s120
      %p129 = scmp.eq.s32.totalorder %s50, 0
      %p130 = por %p128, %p129
      %p131 = scmp.ne.s32.totalorder %s119, %s120
      %p132 = scmp.eq.s32.totalorder %s51, 3
      %p133 = por %p131, %p132
      %p135 = scmp.ne.s32.totalorder %s120, %s134
      %p136 = scmp.eq.s32.totalorder %s51, 0
      %p137 = por %p135, %p136
      %s139 = sadd.s32 %s138, 1
      %p142 = scmp.eq.s32.totalorder %s45, 3
      %p143 = scmp.ne.s32.totalorder %s138, %s140
      %p144 = scmp.eq.s32.totalorder %s45, 0
      %p145 = por %p143, %p144
      %p146 = scmp.ne.s32.totalorder %s138, %s140
      %p147 = scmp.eq.s32.totalorder %s50, 3
      %p148 = por %p146, %p147
      %p149 = scmp.ne.s32.totalorder %s140, %s141
      %p150 = scmp.eq.s32.totalorder %s50, 0
      %p151 = por %p149, %p150
      %p152 = scmp.ne.s32.totalorder %s140, %s141
      %p153 = scmp.eq.s32.totalorder %s51, 3
      %p154 = por %p152, %p153
      %p156 = scmp.ne.s32.totalorder %s141, %s155
      %p157 = scmp.eq.s32.totalorder %s51, 0
      %p158 = por %p156, %p157
      %s159 = ssub.s32 %s53, %s60
      %p160 = scmp.eq.s32.totalorder %s159, 0
      %s162 = sadd.s32 %s161, 1
      %s163 = scalar_select %p160, %s161, %s162
      %p166 = pneg %p160
      %p167 = scmp.eq.s32.totalorder %s45, 3
      %p168 = por %p166, %p167
      %p169 = scmp.ne.s32.totalorder %s161, %s164
      %p170 = scmp.eq.s32.totalorder %s45, 0
      %p171 = por %p169, %p170
      %p172 = scmp.ne.s32.totalorder %s161, %s164
      %p173 = scmp.eq.s32.totalorder %s50, 3
      %p174 = por %p172, %p173
      %p175 = scmp.ne.s32.totalorder %s164, %s165
      %p176 = scmp.eq.s32.totalorder %s50, 0
      %p177 = por %p175, %p176
      %p178 = scmp.ne.s32.totalorder %s164, %s165
      %p179 = scmp.eq.s32.totalorder %s51, 3
      %p180 = por %p178, %p179
      %p182 = scmp.ne.s32.totalorder %s165, %s181
      %p183 = scmp.eq.s32.totalorder %s51, 0
      %p184 = por %p182, %p183
      %s185 = ssub.s32 %s53, %s60
      %p186 = scmp.eq.s32.totalorder %s185, 0
      %s188 = sadd.s32 %s187, 1
      %s189 = scalar_select %p186, %s187, %s188
      %p192 = pneg %p186
      %p193 = scmp.eq.s32.totalorder %s45, 3
      %p194 = por %p192, %p193
      %p195 = scmp.ne.s32.totalorder %s187, %s190
      %p196 = scmp.eq.s32.totalorder %s45, 0
      %p197 = por %p195, %p196
      %p198 = scmp.ne.s32.totalorder %s187, %s190
      %p199 = scmp.eq.s32.totalorder %s50, 3
      %p200 = por %p198, %p199
      %p201 = scmp.ne.s32.totalorder %s190, %s191
      %p202 = scmp.eq.s32.totalorder %s50, 0
      %p203 = por %p201, %p202
      %p204 = scmp.ne.s32.totalorder %s190, %s191
      %p205 = scmp.eq.s32.totalorder %s51, 3
      %p206 = por %p204, %p205
      %p208 = scmp.ne.s32.totalorder %s191, %s207
      %p209 = scmp.eq.s32.totalorder %s51, 0
      %p210 = por %p208, %p209
      %s211 = ssub.s32 %s53, %s60
      %p212 = scmp.eq.s32.totalorder %s211, 0
      %s214 = sadd.s32 %s213, 1
      %s215 = scalar_select %p212, %s213, %s214
      %p218 = pneg %p212
      %p219 = scmp.eq.s32.totalorder %s45, 3
      %p220 = por %p218, %p219
      %p221 = scmp.ne.s32.totalorder %s213, %s216
      %p222 = scmp.eq.s32.totalorder %s45, 0
      %p223 = por %p221, %p222
      %p224 = scmp.ne.s32.totalorder %s213, %s216
      %p225 = scmp.eq.s32.totalorder %s50, 3
      %p226 = por %p224, %p225
      %p227 = scmp.ne.s32.totalorder %s216, %s217
      %p228 = scmp.eq.s32.totalorder %s50, 0
      %p229 = por %p227, %p228
      %p230 = scmp.ne.s32.totalorder %s216, %s217
      %p231 = scmp.eq.s32.totalorder %s51, 3
      %p232 = por %p230, %p231
      %p234 = scmp.ne.s32.totalorder %s217, %s233
      %p235 = scmp.eq.s32.totalorder %s51, 0
      %p236 = por %p234, %p235
      %s237 = ssub.s32 %s53, %s60
      %p238 = scmp.eq.s32.totalorder %s237, 0
      %s240 = sadd.s32 %s239, 1
      %s241 = scalar_select %p238, %s239, %s240
      %p244 = pneg %p238
      %p245 = scmp.eq.s32.totalorder %s45, 3
      %p246 = por %p244, %p245
      %p247 = scmp.ne.s32.totalorder %s239, %s242
      %p248 = scmp.eq.s32.totalorder %s45, 0
      %p249 = por %p247, %p248
      %p250 = scmp.ne.s32.totalorder %s239, %s242
      %p251 = scmp.eq.s32.totalorder %s50, 3
      %p252 = por %p250, %p251
      %p253 = scmp.ne.s32.totalorder %s242, %s243
      %p254 = scmp.eq.s32.totalorder %s50, 0
      %p255 = por %p253, %p254
      %p256 = scmp.ne.s32.totalorder %s242, %s243
      %p257 = scmp.eq.s32.totalorder %s51, 3
      %p258 = por %p256, %p257
      %p260 = scmp.ne.s32.totalorder %s243, %s259
      %p261 = scmp.eq.s32.totalorder %s51, 0
      %p262 = por %p260, %p261
      %s263 = ssub.s32 %s53, %s60
      %p264 = scmp.eq.s32.totalorder %s263, 0
      %s266 = sadd.s32 %s265, 1
      %s267 = scalar_select %p264, %s265, %s266
      %p270 = pneg %p264
      %p271 = scmp.eq.s32.totalorder %s45, 3
      %p272 = por %p270, %p271
      %p273 = scmp.ne.s32.totalorder %s265, %s268
      %p274 = scmp.eq.s32.totalorder %s45, 0
      %p275 = por %p273, %p274
      %p276 = scmp.ne.s32.totalorder %s265, %s268
      %p277 = scmp.eq.s32.totalorder %s50, 3
      %p278 = por %p276, %p277
      %p279 = scmp.ne.s32.totalorder %s268, %s269
      %p280 = scmp.eq.s32.totalorder %s50, 0
      %p281 = por %p279, %p280
      %p282 = scmp.ne.s32.totalorder %s268, %s269
      %p283 = scmp.eq.s32.totalorder %s51, 3
      %p284 = por %p282, %p283
      %p286 = scmp.ne.s32.totalorder %s269, %s285
      %p287 = scmp.eq.s32.totalorder %s51, 0
      %p288 = por %p286, %p287
      %s289 = ssub.s32 %s53, %s60
      %p290 = scmp.eq.s32.totalorder %s289, 0
      %s292 = sadd.s32 %s291, 1
      %s293 = scalar_select %p290, %s291, %s292
      %p296 = pneg %p290
      %p297 = scmp.eq.s32.totalorder %s45, 3
      %p298 = por %p296, %p297
      %p299 = scmp.ne.s32.totalorder %s291, %s294
      %p300 = scmp.eq.s32.totalorder %s45, 0
      %p301 = por %p299, %p300
      %p302 = scmp.ne.s32.totalorder %s291, %s294
      %p303 = scmp.eq.s32.totalorder %s50, 3
      %p304 = por %p302, %p303
      %p305 = scmp.ne.s32.totalorder %s294, %s295
      %p306 = scmp.eq.s32.totalorder %s50, 0
      %p307 = por %p305, %p306
      %p308 = scmp.ne.s32.totalorder %s294, %s295
      %p309 = scmp.eq.s32.totalorder %s51, 3
      %p310 = por %p308, %p309
      %p312 = scmp.ne.s32.totalorder %s295, %s311
      %p313 = scmp.eq.s32.totalorder %s51, 0
      %p314 = por %p312, %p313
      %s315 = ssub.s32 %s53, %s60
      %p316 = scmp.eq.s32.totalorder %s315, 0
      %s318 = sadd.s32 %s317, 1
      %s319 = scalar_select %p316, %s317, %s318
      %p322 = pneg %p316
      %p323 = scmp.eq.s32.totalorder %s45, 3
      %p324 = por %p322, %p323
      %p325 = scmp.ne.s32.totalorder %s317, %s320
      %p326 = scmp.eq.s32.totalorder %s45, 0
      %p327 = por %p325, %p326
      %p328 = scmp.ne.s32.totalorder %s317, %s320
      %p329 = scmp.eq.s32.totalorder %s50, 3
      %p330 = por %p328, %p329
      %p331 = scmp.ne.s32.totalorder %s320, %s321
      %p332 = scmp.eq.s32.totalorder %s50, 0
      %p333 = por %p331, %p332
      %p334 = scmp.ne.s32.totalorder %s320, %s321
      %p335 = scmp.eq.s32.totalorder %s51, 3
      %p336 = por %p334, %p335
      %p338 = scmp.ne.s32.totalorder %s321, %s337
      %p339 = scmp.eq.s32.totalorder %s51, 0
      %p340 = por %p338, %p339
      %s341 = ssub.s32 %s53, %s60
      %p342 = scmp.eq.s32.totalorder %s341, 0
      %s344 = sadd.s32 %s343, 1
      %s345 = scalar_select %p342, %s343, %s344
      %p348 = pneg %p342
      %p349 = scmp.eq.s32.totalorder %s45, 3
      %p350 = por %p348, %p349
      %p351 = scmp.ne.s32.totalorder %s343, %s346
      %p352 = scmp.eq.s32.totalorder %s45, 0
      %p353 = por %p351, %p352
      %p354 = scmp.ne.s32.totalorder %s343, %s346
      %p355 = scmp.eq.s32.totalorder %s50, 3
      %p356 = por %p354, %p355
      %p357 = scmp.ne.s32.totalorder %s346, %s347
      %p358 = scmp.eq.s32.totalorder %s50, 0
      %p359 = por %p357, %p358
      %p360 = scmp.ne.s32.totalorder %s346, %s347
      %p361 = scmp.eq.s32.totalorder %s51, 3
      %p362 = por %p360, %p361
      %p364 = scmp.ne.s32.totalorder %s347, %s363
      %p365 = scmp.eq.s32.totalorder %s51, 0
      %p366 = por %p364, %p365
      %s367 = ssub.s32 %s53, %s60
      %p368 = scmp.eq.s32.totalorder %s367, 0
      %s370 = sadd.s32 %s369, 1
      %s371 = scalar_select %p368, %s369, %s370
      %p374 = pneg %p368
      %p375 = scmp.eq.s32.totalorder %s45, 3
      %p376 = por %p374, %p375
      %p377 = scmp.ne.s32.totalorder %s369, %s372
      %p378 = scmp.eq.s32.totalorder %s45, 0
      %p379 = por %p377, %p378
      %p380 = scmp.ne.s32.totalorder %s369, %s372
      %p381 = scmp.eq.s32.totalorder %s50, 3
      %p382 = por %p380, %p381
      %p383 = scmp.ne.s32.totalorder %s372, %s373
      %p384 = scmp.eq.s32.totalorder %s50, 0
      %p385 = por %p383, %p384
      %p386 = scmp.ne.s32.totalorder %s372, %s373
      %p387 = scmp.eq.s32.totalorder %s51, 3
      %p388 = por %p386, %p387
      %p390 = scmp.ne.s32.totalorder %s373, %s389
      %p391 = scmp.eq.s32.totalorder %s51, 0
      %p392 = por %p390, %p391
      %s393 = ssub.s32 %s53, %s60
      %p394 = scmp.eq.s32.totalorder %s393, 0
      %s396 = sadd.s32 %s395, 1
      %s397 = scalar_select %p394, %s395, %s396
      %p400 = pneg %p394
      %p401 = scmp.eq.s32.totalorder %s45, 3
      %p402 = por %p400, %p401
      %p403 = scmp.ne.s32.totalorder %s395, %s398
      %p404 = scmp.eq.s32.totalorder %s45, 0
      %p405 = por %p403, %p404
      %p406 = scmp.ne.s32.totalorder %s395, %s398
      %p407 = scmp.eq.s32.totalorder %s50, 3
      %p408 = por %p406, %p407
      %p409 = scmp.ne.s32.totalorder %s398, %s399
      %p410 = scmp.eq.s32.totalorder %s50, 0
      %p411 = por %p409, %p410
      %p412 = scmp.ne.s32.totalorder %s398, %s399
      %p413 = scmp.eq.s32.totalorder %s51, 3
      %p414 = por %p412, %p413
      %p416 = scmp.ne.s32.totalorder %s399, %s415
      %p417 = scmp.eq.s32.totalorder %s51, 0
      %p418 = por %p416, %p417
      %s419 = ssub.s32 %s53, %s60
      %p420 = scmp.eq.s32.totalorder %s419, 0
      %s422 = sadd.s32 %s421, 1
      %s423 = scalar_select %p420, %s421, %s422
      %p426 = pneg %p420
      %p427 = scmp.eq.s32.totalorder %s45, 3
      %p428 = por %p426, %p427
      %p429 = scmp.ne.s32.totalorder %s421, %s424
      %p430 = scmp.eq.s32.totalorder %s45, 0
      %p431 = por %p429, %p430
      %p432 = scmp.ne.s32.totalorder %s421, %s424
      %p433 = scmp.eq.s32.totalorder %s50, 3
      %p434 = por %p432, %p433
      %p435 = scmp.ne.s32.totalorder %s424, %s425
      %p436 = scmp.eq.s32.totalorder %s50, 0
      %p437 = por %p435, %p436
      %p438 = scmp.ne.s32.totalorder %s424, %s425
      %p439 = scmp.eq.s32.totalorder %s51, 3
      %p440 = por %p438, %p439
      %p442 = scmp.ne.s32.totalorder %s425, %s441
      %p443 = scmp.eq.s32.totalorder %s51, 0
      %p444 = por %p442, %p443
      %s445 = ssub.s32 %s53, %s60
      %p446 = scmp.eq.s32.totalorder %s445, 0
      %s448 = sadd.s32 %s447, 1
      %s449 = scalar_select %p446, %s447, %s448
      %p452 = pneg %p446
      %p453 = scmp.eq.s32.totalorder %s45, 3
      %p454 = por %p452, %p453
      %p455 = scmp.ne.s32.totalorder %s447, %s450
      %p456 = scmp.eq.s32.totalorder %s45, 0
      %p457 = por %p455, %p456
      %p458 = scmp.ne.s32.totalorder %s447, %s450
      %p459 = scmp.eq.s32.totalorder %s50, 3
      %p460 = por %p458, %p459
      %p461 = scmp.ne.s32.totalorder %s450, %s451
      %p462 = scmp.eq.s32.totalorder %s50, 0
      %p463 = por %p461, %p462
      %p464 = scmp.ne.s32.totalorder %s450, %s451
      %p465 = scmp.eq.s32.totalorder %s51, 3
      %p466 = por %p464, %p465
      %p468 = scmp.ne.s32.totalorder %s451, %s467
      %p469 = scmp.eq.s32.totalorder %s51, 0
      %p470 = por %p468, %p469
      %s471 = ssub.s32 %s53, %s60
      %p472 = scmp.eq.s32.totalorder %s471, 0
      %s474 = sadd.s32 %s473, 1
      %s475 = scalar_select %p472, %s473, %s474
      %p478 = pneg %p472
      %p479 = scmp.eq.s32.totalorder %s45, 3
      %p480 = por %p478, %p479
      %p481 = scmp.ne.s32.totalorder %s473, %s476
      %p482 = scmp.eq.s32.totalorder %s45, 0
      %p483 = por %p481, %p482
      %p484 = scmp.ne.s32.totalorder %s473, %s476
      %p485 = scmp.eq.s32.totalorder %s50, 3
      %p486 = por %p484, %p485
      %p487 = scmp.ne.s32.totalorder %s476, %s477
      %p488 = scmp.eq.s32.totalorder %s50, 0
      %p489 = por %p487, %p488
      %p490 = scmp.ne.s32.totalorder %s476, %s477
      %p491 = scmp.eq.s32.totalorder %s51, 3
      %p492 = por %p490, %p491
      %p494 = scmp.ne.s32.totalorder %s477, %s493
      %p495 = scmp.eq.s32.totalorder %s51, 0
      %p496 = por %p494, %p495
      %s497 = ssub.s32 %s53, %s60
      %p498 = scmp.eq.s32.totalorder %s497, 0
      %s500 = sadd.s32 %s499, 1
      %s501 = scalar_select %p498, %s499, %s500
      %p504 = pneg %p498
      %p505 = scmp.eq.s32.totalorder %s45, 3
      %p506 = por %p504, %p505
      %p507 = scmp.ne.s32.totalorder %s499, %s502
      %p508 = scmp.eq.s32.totalorder %s45, 0
      %p509 = por %p507, %p508
      %p510 = scmp.ne.s32.totalorder %s499, %s502
      %p511 = scmp.eq.s32.totalorder %s50, 3
      %p512 = por %p510, %p511
      %p513 = scmp.ne.s32.totalorder %s502, %s503
      %p514 = scmp.eq.s32.totalorder %s50, 0
      %p515 = por %p513, %p514
      %p516 = scmp.ne.s32.totalorder %s502, %s503
      %p517 = scmp.eq.s32.totalorder %s51, 3
      %p518 = por %p516, %p517
      %p520 = scmp.ne.s32.totalorder %s503, %s519
      %p521 = scmp.eq.s32.totalorder %s51, 0
      %p522 = por %p520, %p521
      %s523 = ssub.s32 %s53, %s60
      %p524 = scmp.eq.s32.totalorder %s523, 0
      %s526 = sadd.s32 %s525, 1
      %s527 = scalar_select %p524, %s525, %s526
      %p530 = pneg %p524
      %p531 = scmp.eq.s32.totalorder %s45, 3
      %p532 = por %p530, %p531
      %p533 = scmp.ne.s32.totalorder %s525, %s528
      %p534 = scmp.eq.s32.totalorder %s45, 0
      %p535 = por %p533, %p534
      %p536 = scmp.ne.s32.totalorder %s525, %s528
      %p537 = scmp.eq.s32.totalorder %s50, 3
      %p538 = por %p536, %p537
      %p539 = scmp.ne.s32.totalorder %s528, %s529
      %p540 = scmp.eq.s32.totalorder %s50, 0
      %p541 = por %p539, %p540
      %p542 = scmp.ne.s32.totalorder %s528, %s529
      %p543 = scmp.eq.s32.totalorder %s51, 3
      %p544 = por %p542, %p543
      %p546 = scmp.ne.s32.totalorder %s529, %s545
      %p547 = scmp.eq.s32.totalorder %s51, 0
      %p548 = por %p546, %p547
      %s549 = ssub.s32 %s53, %s60
      %p550 = scmp.eq.s32.totalorder %s549, 0
      %s552 = sadd.s32 %s551, 1
      %s553 = scalar_select %p550, %s551, %s552
      %p556 = pneg %p550
      %p557 = scmp.eq.s32.totalorder %s45, 3
      %p558 = por %p556, %p557
      %p559 = scmp.ne.s32.totalorder %s551, %s554
      %p560 = scmp.eq.s32.totalorder %s45, 0
      %p561 = por %p559, %p560
      %p562 = scmp.ne.s32.totalorder %s551, %s554
      %p563 = scmp.eq.s32.totalorder %s50, 3
      %p564 = por %p562, %p563
      %p565 = scmp.ne.s32.totalorder %s554, %s555
      %p566 = scmp.eq.s32.totalorder %s50, 0
      %p567 = por %p565, %p566
      %p568 = scmp.ne.s32.totalorder %s554, %s555
      %p569 = scmp.eq.s32.totalorder %s51, 3
      %p570 = por %p568, %p569
      %p572 = scmp.ne.s32.totalorder %s555, %s571
      %p573 = scmp.eq.s32.totalorder %s51, 0
      %p574 = por %p572, %p573
      %s575 = ssub.s32 %s53, %s60
      %p576 = scmp.eq.s32.totalorder %s575, 0
      %s578 = sadd.s32 %s577, 1
      %s579 = scalar_select %p576, %s577, %s578
      %p582 = pneg %p576
      %p583 = scmp.eq.s32.totalorder %s45, 3
      %p584 = por %p582, %p583
      %p585 = scmp.ne.s32.totalorder %s577, %s580
      %p586 = scmp.eq.s32.totalorder %s45, 0
      %p587 = por %p585, %p586
      %p588 = scmp.ne.s32.totalorder %s577, %s580
      %p589 = scmp.eq.s32.totalorder %s50, 3
      %p590 = por %p588, %p589
      %p591 = scmp.ne.s32.totalorder %s580, %s581
      %p592 = scmp.eq.s32.totalorder %s50, 0
      %p593 = por %p591, %p592
      %p594 = scmp.ne.s32.totalorder %s580, %s581
      %p595 = scmp.eq.s32.totalorder %s51, 3
      %p596 = por %p594, %p595
      %p598 = scmp.ne.s32.totalorder %s581, %s597
      %p599 = scmp.eq.s32.totalorder %s51, 0
      %p600 = por %p598, %p599
      %s601 = ssub.s32 %s53, %s60
      %p602 = scmp.eq.s32.totalorder %s601, 0
      %s604 = sadd.s32 %s603, 1
      %s605 = scalar_select %p602, %s603, %s604
      %p608 = pneg %p602
      %p609 = scmp.eq.s32.totalorder %s45, 3
      %p610 = por %p608, %p609
      %p611 = scmp.ne.s32.totalorder %s603, %s606
      %p612 = scmp.eq.s32.totalorder %s45, 0
      %p613 = por %p611, %p612
      %p614 = scmp.ne.s32.totalorder %s603, %s606
      %p615 = scmp.eq.s32.totalorder %s50, 3
      %p616 = por %p614, %p615
      %p617 = scmp.ne.s32.totalorder %s606, %s607
      %p618 = scmp.eq.s32.totalorder %s50, 0
      %p619 = por %p617, %p618
      %p620 = scmp.ne.s32.totalorder %s606, %s607
      %p621 = scmp.eq.s32.totalorder %s51, 3
      %p622 = por %p620, %p621
      %p624 = scmp.ne.s32.totalorder %s607, %s623
      %p625 = scmp.eq.s32.totalorder %s51, 0
      %p626 = por %p624, %p625
      %s628 = sadd.s32 %s627, 1
      %p631 = scmp.eq.s32.totalorder %s45, 3
      %p632 = scmp.ne.s32.totalorder %s627, %s629
      %p633 = scmp.eq.s32.totalorder %s45, 0
      %p634 = por %p632, %p633
      %p635 = scmp.ne.s32.totalorder %s627, %s629
      %p636 = scmp.eq.s32.totalorder %s50, 3
      %p637 = por %p635, %p636
      %p638 = scmp.ne.s32.totalorder %s629, %s630
      %p639 = scmp.eq.s32.totalorder %s50, 0
      %p640 = por %p638, %p639
      %p641 = scmp.ne.s32.totalorder %s629, %s630
      %p642 = scmp.eq.s32.totalorder %s51, 3
      %p643 = por %p641, %p642
      %p645 = scmp.ne.s32.totalorder %s630, %s644
      %p646 = scmp.eq.s32.totalorder %s51, 0
      %p647 = por %p645, %p646
      %s649 = sadd.s32 %s648, 1
      %p652 = scmp.eq.s32.totalorder %s45, 3
      %p653 = scmp.ne.s32.totalorder %s648, %s650
      %p654 = scmp.eq.s32.totalorder %s45, 0
      %p655 = por %p653, %p654
      %p656 = scmp.ne.s32.totalorder %s648, %s650
      %p657 = scmp.eq.s32.totalorder %s50, 3
      %p658 = por %p656, %p657
      %p659 = scmp.ne.s32.totalorder %s650, %s651
      %p660 = scmp.eq.s32.totalorder %s50, 0
      %p661 = por %p659, %p660
      %p662 = scmp.ne.s32.totalorder %s650, %s651
      %p663 = scmp.eq.s32.totalorder %s51, 3
      %p664 = por %p662, %p663
      %p666 = scmp.ne.s32.totalorder %s651, %s665
      %p667 = scmp.eq.s32.totalorder %s51, 0
      %p668 = por %p666, %p667
      %s669 = ssub.s32 %s52, %s64
      %p670 = scmp.eq.s32.totalorder %s669, 0
      %s672 = sadd.s32 %s671, 1
      %s673 = scalar_select %p670, %s671, %s672
      %p676 = pneg %p670
      %p677 = scmp.eq.s32.totalorder %s45, 3
      %p678 = por %p676, %p677
      %p679 = scmp.ne.s32.totalorder %s671, %s674
      %p680 = scmp.eq.s32.totalorder %s45, 0
      %p681 = por %p679, %p680
      %p682 = scmp.ne.s32.totalorder %s671, %s674
      %p683 = scmp.eq.s32.totalorder %s50, 3
      %p684 = por %p682, %p683
      %p685 = scmp.ne.s32.totalorder %s674, %s675
      %p686 = scmp.eq.s32.totalorder %s50, 0
      %p687 = por %p685, %p686
      %p688 = scmp.ne.s32.totalorder %s674, %s675
      %p689 = scmp.eq.s32.totalorder %s51, 3
      %p690 = por %p688, %p689
      %p692 = scmp.ne.s32.totalorder %s675, %s691
      %p693 = scmp.eq.s32.totalorder %s51, 0
      %p694 = por %p692, %p693
      %s695 = ssub.s32 %s52, %s64
      %p696 = scmp.eq.s32.totalorder %s695, 0
      %s698 = sadd.s32 %s697, 1
      %s699 = scalar_select %p696, %s697, %s698
      %p702 = pneg %p696
      %p703 = scmp.eq.s32.totalorder %s45, 3
      %p704 = por %p702, %p703
      %p705 = scmp.ne.s32.totalorder %s697, %s700
      %p706 = scmp.eq.s32.totalorder %s45, 0
      %p707 = por %p705, %p706
      %p708 = scmp.ne.s32.totalorder %s697, %s700
      %p709 = scmp.eq.s32.totalorder %s50, 3
      %p710 = por %p708, %p709
      %p711 = scmp.ne.s32.totalorder %s700, %s701
      %p712 = scmp.eq.s32.totalorder %s50, 0
      %p713 = por %p711, %p712
      %p714 = scmp.ne.s32.totalorder %s700, %s701
      %p715 = scmp.eq.s32.totalorder %s51, 3
      %p716 = por %p714, %p715
      %p718 = scmp.ne.s32.totalorder %s701, %s717
      %p719 = scmp.eq.s32.totalorder %s51, 0
      %p720 = por %p718, %p719
      %p721 = scmp.le.s32.totalorder 1, %s45
      %p722 = scmp.lt.s32.totalorder %s45, 5
      %p723 = pnand %p721, %p722
      %p724 = pneg %p723
      // Predicated region
      $region9: #{tpu_custom_call.1} parent=5 // pred_check
        _
      $region10: #{tpu_custom_call.1} parent=5 // pred_check_branch
        %726 = sbr.rel (%p723) target = $region12
      $region11: #{tpu_custom_call.1} parent=5 // pred_region
        %s727 = ssub.s32 %s45, 1
        // Predicated region
        $region13: #{tpu_custom_call.1} parent=11 // pred_check
          %p728 = pneg %p130
        $region14: #{tpu_custom_call.1} parent=11 // pred_check_branch
          %730 = sbr.rel (%p728) target = $region16
        $region15: #{tpu_custom_call.1} parent=11 // pred_region
          _
        $region16: #{tpu_custom_call.1} parent=11 // pred_fallthru
          _
        // Predicated region
        $region17: #{tpu_custom_call.1} parent=11 // pred_check
          %p731 = pneg %p151
        $region18: #{tpu_custom_call.1} parent=11 // pred_check_branch
          %733 = sbr.rel (%p731) target = $region20
        $region19: #{tpu_custom_call.1} parent=11 // pred_region
          _
        $region20: #{tpu_custom_call.1} parent=11 // pred_fallthru
          _
        // Predicated region
        $region21: #{tpu_custom_call.1} parent=11 // pred_check
          %p734 = pneg %p640
        $region22: #{tpu_custom_call.1} parent=11 // pred_check_branch
          %736 = sbr.rel (%p734) target = $region24
        $region23: #{tpu_custom_call.1} parent=11 // pred_region
          _
        $region24: #{tpu_custom_call.1} parent=11 // pred_fallthru
          _
        // Predicated region
        $region25: #{tpu_custom_call.1} parent=11 // pred_check
          %p737 = pneg %p661
        $region26: #{tpu_custom_call.1} parent=11 // pred_check_branch
          %739 = sbr.rel (%p737) target = $region28
        $region27: #{tpu_custom_call.1} parent=11 // pred_region
          _
        $region28: #{tpu_custom_call.1} parent=11 // pred_fallthru
          _
      $region12: #{tpu_custom_call.1} parent=5 // pred_fallthru
        _
      %p740 = scmp.lt.s32.totalorder %s45, 4
      // Predicated region
      $region29: #{tpu_custom_call.1} parent=5 // pred_check
        %p741 = pneg %p740
      $region30: #{tpu_custom_call.1} parent=5 // pred_check_branch
        %743 = sbr.rel (%p741) target = $region32
      $region31: #{tpu_custom_call.1} parent=5 // pred_region
        // Predicated region
        $region33: #{tpu_custom_call.1} parent=31 // pred_check
          %p744 = pneg %p77
        $region34: #{tpu_custom_call.1} parent=31 // pred_check_branch
          %746 = sbr.rel (%p744) target = $region36
        $region35: #{tpu_custom_call.1} parent=31 // pred_region
          %p747 = scmp.lt.s32.totalorder %s52, 1
          %s748 = scalar_select %p747, %s52, 1
          %s749 = smul.addr %s748, 2
          %s750 = smul.addr %s749, 8
          %s751 = scalar_lea.vmem %s1, %s750
        $region36: #{tpu_custom_call.1} parent=31 // pred_fallthru
          _
        // Predicated region
        $region37: #{tpu_custom_call.1} parent=31 // pred_check
          %p752 = pneg %p103
        $region38: #{tpu_custom_call.1} parent=31 // pred_check_branch
          %754 = sbr.rel (%p752) target = $region40
        $region39: #{tpu_custom_call.1} parent=31 // pred_region
          %p755 = scmp.lt.s32.totalorder %s52, 1
          %s756 = scalar_select %p755, %s52, 1
          %s757 = smul.addr %s756, 28
          %s758 = smul.addr %s757, 4
          %s759 = scalar_lea.vmem %s2, %s758
        $region40: #{tpu_custom_call.1} parent=31 // pred_fallthru
          _
        // Predicated region
        $region41: #{tpu_custom_call.1} parent=31 // pred_check
          %p760 = pneg %p171
        $region42: #{tpu_custom_call.1} parent=31 // pred_check_branch
          %762 = sbr.rel (%p760) target = $region44
        $region43: #{tpu_custom_call.1} parent=31 // pred_region
          %p763 = scmp.lt.s32.totalorder %s53, 1
          %s764 = scalar_select %p763, %s53, 1
          %s765 = smul.addr %s764, 8
          %s766 = smul.addr %s765, 4
          %s767 = scalar_lea.vmem %s5, %s766
        $region44: #{tpu_custom_call.1} parent=31 // pred_fallthru
          _
        // Predicated region
        $region45: #{tpu_custom_call.1} parent=31 // pred_check
          %p768 = pneg %p197
        $region46: #{tpu_custom_call.1} parent=31 // pred_check_branch
          %770 = sbr.rel (%p768) target = $region48
        $region47: #{tpu_custom_call.1} parent=31 // pred_region
          %p771 = scmp.lt.s32.totalorder %s53, 1
          %s772 = scalar_select %p771, %s53, 1
          %s773 = scalar_lea.vmem %s6, %s772
        $region48: #{tpu_custom_call.1} parent=31 // pred_fallthru
          _
        // Predicated region
        $region49: #{tpu_custom_call.1} parent=31 // pred_check
          %p774 = pneg %p223
        $region50: #{tpu_custom_call.1} parent=31 // pred_check_branch
          %776 = sbr.rel (%p774) target = $region52
        $region51: #{tpu_custom_call.1} parent=31 // pred_region
          %p777 = scmp.lt.s32.totalorder %s53, 1
          %s778 = scalar_select %p777, %s53, 1
          %s779 = smul.addr %s778, 8
          %s780 = smul.addr %s779, 4
          %s781 = scalar_lea.vmem %s7, %s780
        $region52: #{tpu_custom_call.1} parent=31 // pred_fallthru
          _
        // Predicated region
        $region53: #{tpu_custom_call.1} parent=31 // pred_check
          %p782 = pneg %p249
        $region54: #{tpu_custom_call.1} parent=31 // pred_check_branch
          %784 = sbr.rel (%p782) target = $region56
        $region55: #{tpu_custom_call.1} parent=31 // pred_region
          %p785 = scmp.lt.s32.totalorder %s53, 1
          %s786 = scalar_select %p785, %s53, 1
          %s787 = scalar_lea.vmem %s8, %s786
        $region56: #{tpu_custom_call.1} parent=31 // pred_fallthru
          _
        // Predicated region
        $region57: #{tpu_custom_call.1} parent=31 // pred_check
          %p788 = pneg %p275
        $region58: #{tpu_custom_call.1} parent=31 // pred_check_branch
          %790 = sbr.rel (%p788) target = $region60
        $region59: #{tpu_custom_call.1} parent=31 // pred_region
          %p791 = scmp.lt.s32.totalorder %s53, 1
          %s792 = scalar_select %p791, %s53, 1
          %s793 = smul.addr %s792, 8
          %s794 = smul.addr %s793, 4
          %s795 = scalar_lea.vmem %s9, %s794
        $region60: #{tpu_custom_call.1} parent=31 // pred_fallthru
          _
        // Predicated region
        $region61: #{tpu_custom_call.1} parent=31 // pred_check
          %p796 = pneg %p301
        $region62: #{tpu_custom_call.1} parent=31 // pred_check_branch
          %798 = sbr.rel (%p796) target = $region64
        $region63: #{tpu_custom_call.1} parent=31 // pred_region
          %p799 = scmp.lt.s32.totalorder %s53, 1
          %s800 = scalar_select %p799, %s53, 1
          %s801 = scalar_lea.vmem %s10, %s800
        $region64: #{tpu_custom_call.1} parent=31 // pred_fallthru
          _
        // Predicated region
        $region65: #{tpu_custom_call.1} parent=31 // pred_check
          %p802 = pneg %p327
        $region66: #{tpu_custom_call.1} parent=31 // pred_check_branch
          %804 = sbr.rel (%p802) target = $region68
        $region67: #{tpu_custom_call.1} parent=31 // pred_region
          %p805 = scmp.lt.s32.totalorder %s53, 1
          %s806 = scalar_select %p805, %s53, 1
          %s807 = smul.addr %s806, 8
          %s808 = smul.addr %s807, 4
          %s809 = scalar_lea.vmem %s11, %s808
        $region68: #{tpu_custom_call.1} parent=31 // pred_fallthru
          _
        // Predicated region
        $region69: #{tpu_custom_call.1} parent=31 // pred_check
          %p810 = pneg %p353
        $region70: #{tpu_custom_call.1} parent=31 // pred_check_branch
          %812 = sbr.rel (%p810) target = $region72
        $region71: #{tpu_custom_call.1} parent=31 // pred_region
          %p813 = scmp.lt.s32.totalorder %s53, 1
          %s814 = scalar_select %p813, %s53, 1
          %s815 = scalar_lea.vmem %s12, %s814
        $region72: #{tpu_custom_call.1} parent=31 // pred_fallthru
          _
        // Predicated region
        $region73: #{tpu_custom_call.1} parent=31 // pred_check
          %p816 = pneg %p379
        $region74: #{tpu_custom_call.1} parent=31 // pred_check_branch
          %818 = sbr.rel (%p816) target = $region76
        $region75: #{tpu_custom_call.1} parent=31 // pred_region
          %p819 = scmp.lt.s32.totalorder %s53, 1
          %s820 = scalar_select %p819, %s53, 1
          %s821 = smul.addr %s820, 2
          %s822 = smul.addr %s821, 8
          %s823 = scalar_lea.vmem %s13, %s822
        $region76: #{tpu_custom_call.1} parent=31 // pred_fallthru
          _
        // Predicated region
        $region77: #{tpu_custom_call.1} parent=31 // pred_check
          %p824 = pneg %p405
        $region78: #{tpu_custom_call.1} parent=31 // pred_check_branch
          %826 = sbr.rel (%p824) target = $region80
        $region79: #{tpu_custom_call.1} parent=31 // pred_region
          %p827 = scmp.lt.s32.totalorder %s53, 1
          %s828 = scalar_select %p827, %s53, 1
          %s829 = smul.addr %s828, 2
          %s830 = smul.addr %s829, 8
          %s831 = scalar_lea.vmem %s14, %s830
        $region80: #{tpu_custom_call.1} parent=31 // pred_fallthru
          _
        // Predicated region
        $region81: #{tpu_custom_call.1} parent=31 // pred_check
          %p832 = pneg %p431
        $region82: #{tpu_custom_call.1} parent=31 // pred_check_branch
          %834 = sbr.rel (%p832) target = $region84
        $region83: #{tpu_custom_call.1} parent=31 // pred_region
          %p835 = scmp.lt.s32.totalorder %s53, 1
          %s836 = scalar_select %p835, %s53, 1
          %s837 = scalar_lea.vmem %s15, %s836
        $region84: #{tpu_custom_call.1} parent=31 // pred_fallthru
          _
        // Predicated region
        $region85: #{tpu_custom_call.1} parent=31 // pred_check
          %p838 = pneg %p457
        $region86: #{tpu_custom_call.1} parent=31 // pred_check_branch
          %840 = sbr.rel (%p838) target = $region88
        $region87: #{tpu_custom_call.1} parent=31 // pred_region
          %p841 = scmp.lt.s32.totalorder %s53, 1
          %s842 = scalar_select %p841, %s53, 1
          %s843 = scalar_lea.vmem %s16, %s842
        $region88: #{tpu_custom_call.1} parent=31 // pred_fallthru
          _
        // Predicated region
        $region89: #{tpu_custom_call.1} parent=31 // pred_check
          %p844 = pneg %p483
        $region90: #{tpu_custom_call.1} parent=31 // pred_check_branch
          %846 = sbr.rel (%p844) target = $region92
        $region91: #{tpu_custom_call.1} parent=31 // pred_region
          %p847 = scmp.lt.s32.totalorder %s53, 1
          %s848 = scalar_select %p847, %s53, 1
          %s849 = smul.addr %s848, 24
          %s850 = smul.addr %s849, 4
          %s851 = scalar_lea.vmem %s17, %s850
        $region92: #{tpu_custom_call.1} parent=31 // pred_fallthru
          _
        // Predicated region
        $region93: #{tpu_custom_call.1} parent=31 // pred_check
          %p852 = pneg %p509
        $region94: #{tpu_custom_call.1} parent=31 // pred_check_branch
          %854 = sbr.rel (%p852) target = $region96
        $region95: #{tpu_custom_call.1} parent=31 // pred_region
          %p855 = scmp.lt.s32.totalorder %s53, 1
          %s856 = scalar_select %p855, %s53, 1
          %s857 = scalar_lea.vmem %s18, %s856
        $region96: #{tpu_custom_call.1} parent=31 // pred_fallthru
          _
        // Predicated region
        $region97: #{tpu_custom_call.1} parent=31 // pred_check
          %p858 = pneg %p535
        $region98: #{tpu_custom_call.1} parent=31 // pred_check_branch
          %860 = sbr.rel (%p858) target = $region100
        $region99: #{tpu_custom_call.1} parent=31 // pred_region
          %p861 = scmp.lt.s32.totalorder %s53, 1
          %s862 = scalar_select %p861, %s53, 1
          %s863 = smul.addr %s862, 48
          %s864 = smul.addr %s863, 4
          %s865 = scalar_lea.vmem %s19, %s864
        $region100: #{tpu_custom_call.1} parent=31 // pred_fallthru
          _
        // Predicated region
        $region101: #{tpu_custom_call.1} parent=31 // pred_check
          %p866 = pneg %p561
        $region102: #{tpu_custom_call.1} parent=31 // pred_check_branch
          %868 = sbr.rel (%p866) target = $region104
        $region103: #{tpu_custom_call.1} parent=31 // pred_region
          %p869 = scmp.lt.s32.totalorder %s53, 1
          %s870 = scalar_select %p869, %s53, 1
          %s871 = scalar_lea.vmem %s20, %s870
        $region104: #{tpu_custom_call.1} parent=31 // pred_fallthru
          _
        // Predicated region
        $region105: #{tpu_custom_call.1} parent=31 // pred_check
          %p872 = pneg %p587
        $region106: #{tpu_custom_call.1} parent=31 // pred_check_branch
          %874 = sbr.rel (%p872) target = $region108
        $region107: #{tpu_custom_call.1} parent=31 // pred_region
          %p875 = scmp.lt.s32.totalorder %s53, 1
          %s876 = scalar_select %p875, %s53, 1
          %s877 = scalar_lea.vmem %s21, %s876
        $region108: #{tpu_custom_call.1} parent=31 // pred_fallthru
          _
        // Predicated region
        $region109: #{tpu_custom_call.1} parent=31 // pred_check
          %p878 = pneg %p613
        $region110: #{tpu_custom_call.1} parent=31 // pred_check_branch
          %880 = sbr.rel (%p878) target = $region112
        $region111: #{tpu_custom_call.1} parent=31 // pred_region
          %p881 = scmp.lt.s32.totalorder %s53, 1
          %s882 = scalar_select %p881, %s53, 1
          %s883 = scalar_lea.vmem %s22, %s882
        $region112: #{tpu_custom_call.1} parent=31 // pred_fallthru
          _
      $region32: #{tpu_custom_call.1} parent=5 // pred_fallthru
        _
      %p884 = scmp.le.s32.totalorder 1, %s45
      %p885 = scmp.lt.s32.totalorder %s45, 5
      %p886 = pnand %p884, %p885
      %p887 = pneg %p886
      // Predicated region
      $region113: #{tpu_custom_call.1} parent=5 // pred_check
        _
      $region114: #{tpu_custom_call.1} parent=5 // pred_check_branch
        %889 = sbr.rel (%p886) target = $region116
      $region115: #{tpu_custom_call.1} parent=5 // pred_region
        %s890 = ssub.s32 %s45, 1
        %p891 = scmp.lt.s32.totalorder %s54, 1
        %s892 = scalar_select %p891, %s54, 1
        %s893 = smul.addr %s892, 2
        %s894 = smul.addr %s893, 8
        %s895 = scalar_lea.vmem %s1, %s894
        %p896 = pneg %p83
        %p897 = pneg %p80
        %p898 = scmp.lt.s32.totalorder %s54, 1
        %s899 = scalar_select %p898, %s54, 1
        %s900 = smul.addr %s899, 28
        %s901 = smul.addr %s900, 4
        %s902 = scalar_lea.vmem %s2, %s901
        %p903 = pneg %p109
        %p904 = pneg %p106
        %p905 = pneg %p130
        %p906 = pneg %p127
        %p907 = pneg %p151
        %p908 = pneg %p148
        %p909 = scmp.lt.s32.totalorder %s55, 1
        %s910 = scalar_select %p909, %s55, 1
        %s911 = smul.addr %s910, 8
        %s912 = smul.addr %s911, 4
        %s913 = scalar_lea.vmem %s5, %s912
        %p914 = pneg %p177
        %p915 = pneg %p174
        %p916 = scmp.lt.s32.totalorder %s55, 1
        %s917 = scalar_select %p916, %s55, 1
        %s918 = scalar_lea.vmem %s6, %s917
        %p919 = pneg %p203
        %p920 = pneg %p200
        %p921 = scmp.lt.s32.totalorder %s55, 1
        %s922 = scalar_select %p921, %s55, 1
        %s923 = smul.addr %s922, 8
        %s924 = smul.addr %s923, 4
        %s925 = scalar_lea.vmem %s7, %s924
        %p926 = pneg %p229
        %p927 = pneg %p226
        %p928 = scmp.lt.s32.totalorder %s55, 1
        %s929 = scalar_select %p928, %s55, 1
        %s930 = scalar_lea.vmem %s8, %s929
        %p931 = pneg %p255
        %p932 = pneg %p252
        %p933 = scmp.lt.s32.totalorder %s55, 1
        %s934 = scalar_select %p933, %s55, 1
        %s935 = smul.addr %s934, 8
        %s936 = smul.addr %s935, 4
        %s937 = scalar_lea.vmem %s9, %s936
        %p938 = pneg %p281
        %p939 = pneg %p278
        %p940 = scmp.lt.s32.totalorder %s55, 1
        %s941 = scalar_select %p940, %s55, 1
        %s942 = scalar_lea.vmem %s10, %s941
        %p943 = pneg %p307
        %p944 = pneg %p304
        %p945 = scmp.lt.s32.totalorder %s55, 1
        %s946 = scalar_select %p945, %s55, 1
        %s947 = smul.addr %s946, 8
        %s948 = smul.addr %s947, 4
        %s949 = scalar_lea.vmem %s11, %s948
        %p950 = pneg %p333
        %p951 = pneg %p330
        %p952 = scmp.lt.s32.totalorder %s55, 1
        %s953 = scalar_select %p952, %s55, 1
        %s954 = scalar_lea.vmem %s12, %s953
        %p955 = pneg %p359
        %p956 = pneg %p356
        %p957 = scmp.lt.s32.totalorder %s55, 1
        %s958 = scalar_select %p957, %s55, 1
        %s959 = smul.addr %s958, 2
        %s960 = smul.addr %s959, 8
        %s961 = scalar_lea.vmem %s13, %s960
        %p962 = pneg %p385
        %p963 = pneg %p382
        %p964 = scmp.lt.s32.totalorder %s55, 1
        %s965 = scalar_select %p964, %s55, 1
        %s966 = smul.addr %s965, 2
        %s967 = smul.addr %s966, 8
        %s968 = scalar_lea.vmem %s14, %s967
        %p969 = pneg %p411
        %p970 = pneg %p408
        %p971 = scmp.lt.s32.totalorder %s55, 1
        %s972 = scalar_select %p971, %s55, 1
        %s973 = scalar_lea.vmem %s15, %s972
        %p974 = pneg %p437
        %p975 = pneg %p434
        %p976 = scmp.lt.s32.totalorder %s55, 1
        %s977 = scalar_select %p976, %s55, 1
        %s978 = scalar_lea.vmem %s16, %s977
        %p979 = pneg %p463
        %p980 = pneg %p460
        %p981 = scmp.lt.s32.totalorder %s55, 1
        %s982 = scalar_select %p981, %s55, 1
        %s983 = smul.addr %s982, 24
        %s984 = smul.addr %s983, 4
        %s985 = scalar_lea.vmem %s17, %s984
        %p986 = pneg %p489
        %p987 = pneg %p486
        %p988 = scmp.lt.s32.totalorder %s55, 1
        %s989 = scalar_select %p988, %s55, 1
        %s990 = scalar_lea.vmem %s18, %s989
        %p991 = pneg %p515
        %p992 = pneg %p512
        %p993 = scmp.lt.s32.totalorder %s55, 1
        %s994 = scalar_select %p993, %s55, 1
        %s995 = smul.addr %s994, 48
        %s996 = smul.addr %s995, 4
        %s997 = scalar_lea.vmem %s19, %s996
        %p998 = pneg %p541
        %p999 = pneg %p538
        %p1000 = scmp.lt.s32.totalorder %s55, 1
        %s1001 = scalar_select %p1000, %s55, 1
        %s1002 = scalar_lea.vmem %s20, %s1001
        %p1003 = pneg %p567
        %p1004 = pneg %p564
        %p1005 = scmp.lt.s32.totalorder %s55, 1
        %s1006 = scalar_select %p1005, %s55, 1
        %s1007 = scalar_lea.vmem %s21, %s1006
        %p1008 = pneg %p593
        %p1009 = pneg %p590
        %p1010 = scmp.lt.s32.totalorder %s55, 1
        %s1011 = scalar_select %p1010, %s55, 1
        %s1012 = scalar_lea.vmem %s22, %s1011
        %p1013 = pneg %p619
        %p1014 = pneg %p616
        %p1015 = pneg %p640
        %p1016 = pneg %p637
        %p1017 = pneg %p661
        %p1018 = pneg %p658
        %p1019 = pneg %p687
        %p1020 = pneg %p684
        %s1021 = sand.u32 %s674, 1
        %s1022 = scalar_lea.sflag [#allocation7], %s1021
        %s1023 = sand.u32 %s674, 1
        %s1024 = smul.addr %s1023, 16
        %s1025 = scalar_lea.vmem [#allocation6], %s1024
        %p1026 = pneg %p713
        %p1027 = pneg %p710
        %s1028 = sand.u32 %s700, 1
        %s1029 = scalar_lea.sflag [#allocation9], %s1028
        %s1030 = sand.u32 %s700, 1
        %s1031 = smul.addr %s1030, 16
        %s1032 = scalar_lea.vmem [#allocation8], %s1031
        %p1033 = scmp.lt.s32.totalorder %s54, 1
        %s1034 = scalar_select %p1033, %s54, 1
        %s1035 = smul.addr %s1034, 2
        %s1036 = smul.addr %s1035, 8
        %s1037 = scalar_lea.vmem %s1, %s1036
        %p1038 = scmp.lt.s32.totalorder %s54, 1
        %s1039 = scalar_select %p1038, %s54, 1
        %s1040 = smul.addr %s1039, 28
        %s1041 = smul.addr %s1040, 4
        %s1042 = scalar_lea.vmem %s2, %s1041
        %p1043 = scmp.lt.s32.totalorder %s55, 1
        %s1044 = scalar_select %p1043, %s55, 1
        %s1045 = smul.addr %s1044, 8
        %s1046 = smul.addr %s1045, 4
        %s1047 = scalar_lea.vmem %s5, %s1046
        %p1048 = scmp.lt.s32.totalorder %s55, 1
        %s1049 = scalar_select %p1048, %s55, 1
        %s1050 = scalar_lea.vmem %s6, %s1049
        %p1051 = scmp.lt.s32.totalorder %s55, 1
        %s1052 = scalar_select %p1051, %s55, 1
        %s1053 = smul.addr %s1052, 8
        %s1054 = smul.addr %s1053, 4
        %s1055 = scalar_lea.vmem %s7, %s1054
        %p1056 = scmp.lt.s32.totalorder %s55, 1
        %s1057 = scalar_select %p1056, %s55, 1
        %s1058 = scalar_lea.vmem %s8, %s1057
        %p1059 = scmp.lt.s32.totalorder %s55, 1
        %s1060 = scalar_select %p1059, %s55, 1
        %s1061 = smul.addr %s1060, 8
        %s1062 = smul.addr %s1061, 4
        %s1063 = scalar_lea.vmem %s9, %s1062
        %p1064 = scmp.lt.s32.totalorder %s55, 1
        %s1065 = scalar_select %p1064, %s55, 1
        %s1066 = scalar_lea.vmem %s10, %s1065
        %p1067 = scmp.lt.s32.totalorder %s55, 1
        %s1068 = scalar_select %p1067, %s55, 1
        %s1069 = smul.addr %s1068, 8
        %s1070 = smul.addr %s1069, 4
        %s1071 = scalar_lea.vmem %s11, %s1070
        %p1072 = scmp.lt.s32.totalorder %s55, 1
        %s1073 = scalar_select %p1072, %s55, 1
        %s1074 = scalar_lea.vmem %s12, %s1073
        %p1075 = scmp.lt.s32.totalorder %s55, 1
        %s1076 = scalar_select %p1075, %s55, 1
        %s1077 = smul.addr %s1076, 2
        %s1078 = smul.addr %s1077, 8
        %s1079 = scalar_lea.vmem %s13, %s1078
        %p1080 = scmp.lt.s32.totalorder %s55, 1
        %s1081 = scalar_select %p1080, %s55, 1
        %s1082 = smul.addr %s1081, 2
        %s1083 = smul.addr %s1082, 8
        %s1084 = scalar_lea.vmem %s14, %s1083
        %p1085 = scmp.lt.s32.totalorder %s55, 1
        %s1086 = scalar_select %p1085, %s55, 1
        %s1087 = scalar_lea.vmem %s15, %s1086
        %p1088 = scmp.lt.s32.totalorder %s55, 1
        %s1089 = scalar_select %p1088, %s55, 1
        %s1090 = scalar_lea.vmem %s16, %s1089
        %p1091 = scmp.lt.s32.totalorder %s55, 1
        %s1092 = scalar_select %p1091, %s55, 1
        %s1093 = smul.addr %s1092, 24
        %s1094 = smul.addr %s1093, 4
        %s1095 = scalar_lea.vmem %s17, %s1094
        %p1096 = scmp.lt.s32.totalorder %s55, 1
        %s1097 = scalar_select %p1096, %s55, 1
        %s1098 = scalar_lea.vmem %s18, %s1097
        %p1099 = scmp.lt.s32.totalorder %s55, 1
        %s1100 = scalar_select %p1099, %s55, 1
        %s1101 = smul.addr %s1100, 48
        %s1102 = smul.addr %s1101, 4
        %s1103 = scalar_lea.vmem %s19, %s1102
        %p1104 = scmp.lt.s32.totalorder %s55, 1
        %s1105 = scalar_select %p1104, %s55, 1
        %s1106 = scalar_lea.vmem %s20, %s1105
        %p1107 = scmp.lt.s32.totalorder %s55, 1
        %s1108 = scalar_select %p1107, %s55, 1
        %s1109 = scalar_lea.vmem %s21, %s1108
        %p1110 = scmp.lt.s32.totalorder %s55, 1
        %s1111 = scalar_select %p1110, %s55, 1
        %s1112 = scalar_lea.vmem %s22, %s1111
        %s1114 = sld [smem:[#allocation5 + %s54]]
        %v1115 = vlaneseq
        %v1116 = vshrl.u32 %v1115, 7
        %v1117 = vadd.s32 %v1116, 8
        %v1118 = vstv %s1114
        %vm1119 = vcmp.lt.s32.totalorder %v1116, %v1118
        %vm1120 = vcmp.lt.s32.totalorder %v1117, %v1118
        %v1121 = vsel %vm1119, 1, 0
        %v1122 = vsel %vm1120, 1, 0
        %v1123 = vcvt.s32.f32 %v1121
        %v1124 = vcvt.s32.f32 %v1122
        %v1125 = vlaneseq
        %v1126 = vand.u32 %v1125, 127
        %vm1127 = vcmp.lt.s32.totalorder %v1126, %v1118
        %vm1128 = vmand %vm1119, %vm1127
        %vm1129 = vmand %vm1120, %vm1127
        %v1130 = vsub.s32 %v1126, %v1116
        %v1131 = vsub.s32 %v1126, %v1117
        %p1132 = scmp.eq.s32.totalorder %s55, 0
        // Predicated region
        $region117: #{tpu_custom_call.1} parent=115 // pred_check
          %p1133 = pneg %p1132
        $region118: #{tpu_custom_call.1} parent=115 // pred_check_branch
          %1135 = sbr.rel (%p1133) target = $region120
        $region119: #{tpu_custom_call.1} parent=115 // pred_region
          %v1136 = vld [vmem:[%s1042] sm:$0xff]
          %v1137 = vld [vmem:[%s1042 + $0x8] sm:$0xff]
          %v1138 = vld [vmem:[%s1042 + $0x10] sm:$0xff]
          %v1139 = vld [vmem:[%s1042 + $0x18] sm:$0xff]
          %v1140 = vld [vmem:[%s1042 + $0x20] sm:$0xff]
          %v1141 = vld [vmem:[%s1042 + $0x28] sm:$0xff]
          %v1142 = vld [vmem:[%s1042 + $0x30] sm:$0xff]
          %v1143 = vld [vmem:[%s1042 + $0x38] sm:$0xff]
          %v1144 = vld [vmem:[%s1042 + $0x40] sm:$0xff]
          %v1145 = vld [vmem:[%s1042 + $0x48] sm:$0xff]
          %v1146 = vld [vmem:[%s1042 + $0x50] sm:$0xff]
          %v1147 = vld [vmem:[%s1042 + $0x58] sm:$0xff]
          %v1148 = vld [vmem:[%s1042 + $0x60] sm:$0xff]
          %v1149 = vld [vmem:[%s1042 + $0x68] sm:$0xff]
          %v1150 = vld [vmem:[%s3] sm:$0xf]
          %v1151 = vld [vmem:[%s3 + $0x4] sm:$0xf]
          %v1152 = vld [vmem:[%s3 + $0x8] sm:$0xf]
          %v1153 = vld [vmem:[%s3 + $0xc] sm:$0xf]
          %v1154 = vld [vmem:[%s3 + $0x10] sm:$0xf]
          %v1155 = vld [vmem:[%s3 + $0x14] sm:$0xf]
          %v1156 = vld [vmem:[%s3 + $0x18] sm:$0xf]
          %v1157 = vld [vmem:[%s3 + $0x1c] sm:$0xf]
          %v1158 = vld [vmem:[%s3 + $0x20] sm:$0xf]
          %v1159 = vld [vmem:[%s3 + $0x24] sm:$0xf]
          %v1160 = vld [vmem:[%s3 + $0x28] sm:$0xf]
          %v1161 = vld [vmem:[%s3 + $0x2c] sm:$0xf]
          %v1162 = vld [vmem:[%s3 + $0x30] sm:$0xf]
          %v1163 = vld [vmem:[%s3 + $0x34] sm:$0xf]
          %v1164 = vld [vmem:[%s3 + $0x38] sm:$0xf]
          %v1165 = vld [vmem:[%s3 + $0x3c] sm:$0xf]
          %v1166 = vld [vmem:[%s3 + $0x40] sm:$0xf]
          %v1167 = vld [vmem:[%s3 + $0x44] sm:$0xf]
          %v1168 = vld [vmem:[%s3 + $0x48] sm:$0xf]
          %v1169 = vld [vmem:[%s3 + $0x4c] sm:$0xf]
          %v1170 = vld [vmem:[%s3 + $0x50] sm:$0xf]
          %v1171 = vld [vmem:[%s3 + $0x54] sm:$0xf]
          %v1172 = vld [vmem:[%s3 + $0x58] sm:$0xf]
          %v1173 = vld [vmem:[%s3 + $0x5c] sm:$0xf]
          %v1174 = vld [vmem:[%s3 + $0x60] sm:$0xf]
          %v1175 = vld [vmem:[%s3 + $0x64] sm:$0xf]
          %v1176 = vld [vmem:[%s3 + $0x68] sm:$0xf]
          %v1177 = vld [vmem:[%s3 + $0x6c] sm:$0xf]
          %v1178 = vld [vmem:[%s3 + $0x70] sm:$0xf]
          %v1179 = vld [vmem:[%s3 + $0x74] sm:$0xf]
          %v1180 = vld [vmem:[%s3 + $0x78] sm:$0xf]
          %v1181 = vld [vmem:[%s3 + $0x7c] sm:$0xf]
          %v1182 = vld [vmem:[%s3 + $0x80] sm:$0xf]
          %v1183 = vld [vmem:[%s3 + $0x84] sm:$0xf]
          %v1184 = vld [vmem:[%s3 + $0x88] sm:$0xf]
          %v1185 = vld [vmem:[%s3 + $0x8c] sm:$0xf]
          %v1186 = vld [vmem:[%s3 + $0x90] sm:$0xf]
          %v1187 = vld [vmem:[%s3 + $0x94] sm:$0xf]
          %v1188 = vld [vmem:[%s3 + $0x98] sm:$0xf]
          %v1189 = vld [vmem:[%s3 + $0x9c] sm:$0xf]
          %v1190 = vld [vmem:[%s3 + $0xa0] sm:$0xf]
          %v1191 = vld [vmem:[%s3 + $0xa4] sm:$0xf]
          %v1192 = vld [vmem:[%s3 + $0xa8] sm:$0xf]
          %v1193 = vld [vmem:[%s3 + $0xac] sm:$0xf]
          %v1194 = vld [vmem:[%s3 + $0xb0] sm:$0xf]
          %v1195 = vld [vmem:[%s3 + $0xb4] sm:$0xf]
          %v1196 = vld [vmem:[%s3 + $0xb8] sm:$0xf]
          %v1197 = vld [vmem:[%s3 + $0xbc] sm:$0xf]
          %v1198 = vld [vmem:[%s3 + $0xc0] sm:$0xf]
          %v1199 = vld [vmem:[%s3 + $0xc4] sm:$0xf]
          %v1200 = vld [vmem:[%s3 + $0xc8] sm:$0xf]
          %v1201 = vld [vmem:[%s3 + $0xcc] sm:$0xf]
          %v1202 = vld [vmem:[%s3 + $0xd0] sm:$0xf]
          %v1203 = vld [vmem:[%s3 + $0xd4] sm:$0xf]
          %v1204 = vld [vmem:[%s3 + $0xd8] sm:$0xf]
          %v1205 = vld [vmem:[%s3 + $0xdc] sm:$0xf]
          %v1206 = vld [vmem:[%s3 + $0xe0] sm:$0xf]
          %v1207 = vld [vmem:[%s3 + $0xe4] sm:$0xf]
          %v1208 = vld [vmem:[%s3 + $0xe8] sm:$0xf]
          %v1209 = vld [vmem:[%s3 + $0xec] sm:$0xf]
          %v1210 = vld [vmem:[%s3 + $0xf0] sm:$0xf]
          %v1211 = vld [vmem:[%s3 + $0xf4] sm:$0xf]
          %v1212 = vld [vmem:[%s3 + $0xf8] sm:$0xf]
          %v1213 = vld [vmem:[%s3 + $0xfc] sm:$0xf]
          %v1214 = vld [vmem:[%s3 + $0x100] sm:$0xf]
          %v1215 = vld [vmem:[%s3 + $0x104] sm:$0xf]
          %v1216 = vld [vmem:[%s3 + $0x108] sm:$0xf]
          %v1217 = vld [vmem:[%s3 + $0x10c] sm:$0xf]
          %v1218 = vld [vmem:[%s3 + $0x110] sm:$0xf]
          %v1219 = vld [vmem:[%s3 + $0x114] sm:$0xf]
          %v1220 = vld [vmem:[%s3 + $0x118] sm:$0xf]
          %v1221 = vld [vmem:[%s3 + $0x11c] sm:$0xf]
          %v1222 = vld [vmem:[%s3 + $0x120] sm:$0xf]
          %v1223 = vld [vmem:[%s3 + $0x124] sm:$0xf]
          %v1224 = vld [vmem:[%s3 + $0x128] sm:$0xf]
          %v1225 = vld [vmem:[%s3 + $0x12c] sm:$0xf]
          %v1226 = vld [vmem:[%s3 + $0x130] sm:$0xf]
          %v1227 = vld [vmem:[%s3 + $0x134] sm:$0xf]
          %v1228 = vld [vmem:[%s3 + $0x138] sm:$0xf]
          %v1229 = vld [vmem:[%s3 + $0x13c] sm:$0xf]
          %v1230 = vld [vmem:[%s3 + $0x140] sm:$0xf]
          %v1231 = vld [vmem:[%s3 + $0x144] sm:$0xf]
          %v1232 = vld [vmem:[%s3 + $0x148] sm:$0xf]
          %v1233 = vld [vmem:[%s3 + $0x14c] sm:$0xf]
          %v1234 = vld [vmem:[%s3 + $0x150] sm:$0xf]
          %v1235 = vld [vmem:[%s3 + $0x154] sm:$0xf]
          %v1236 = vld [vmem:[%s3 + $0x158] sm:$0xf]
          %v1237 = vld [vmem:[%s3 + $0x15c] sm:$0xf]
          %v1238 = vld [vmem:[%s3 + $0x160] sm:$0xf]
          %v1239 = vld [vmem:[%s3 + $0x164] sm:$0xf]
          %v1240 = vld [vmem:[%s3 + $0x168] sm:$0xf]
          %v1241 = vld [vmem:[%s3 + $0x16c] sm:$0xf]
          %v1242 = vld [vmem:[%s3 + $0x170] sm:$0xf]
          %v1243 = vld [vmem:[%s3 + $0x174] sm:$0xf]
          %v1244 = vld [vmem:[%s3 + $0x178] sm:$0xf]
          %v1245 = vld [vmem:[%s3 + $0x17c] sm:$0xf]
          %v1246 = vld [vmem:[%s3 + $0x180] sm:$0xf]
          %v1247 = vld [vmem:[%s3 + $0x184] sm:$0xf]
          %v1248 = vld [vmem:[%s3 + $0x188] sm:$0xf]
          %v1249 = vld [vmem:[%s3 + $0x18c] sm:$0xf]
          %v1250 = vld [vmem:[%s3 + $0x190] sm:$0xf]
          %v1251 = vld [vmem:[%s3 + $0x194] sm:$0xf]
          %v1252 = vld [vmem:[%s3 + $0x198] sm:$0xf]
          %v1253 = vld [vmem:[%s3 + $0x19c] sm:$0xf]
          %v1254 = vld [vmem:[%s3 + $0x1a0] sm:$0xf]
          %v1255 = vld [vmem:[%s3 + $0x1a4] sm:$0xf]
          %v1256 = vld [vmem:[%s3 + $0x1a8] sm:$0xf]
          %v1257 = vld [vmem:[%s3 + $0x1ac] sm:$0xf]
          %v1258 = vld [vmem:[%s3 + $0x1b0] sm:$0xf]
          %v1259 = vld [vmem:[%s3 + $0x1b4] sm:$0xf]
          %v1260 = vld [vmem:[%s3 + $0x1b8] sm:$0xf]
          %v1261 = vld [vmem:[%s3 + $0x1bc] sm:$0xf]
          %v1262 = vld [vmem:[%s3 + $0x1c0] sm:$0xf]
          %v1263 = vld [vmem:[%s3 + $0x1c4] sm:$0xf]
          %v1264 = vld [vmem:[%s3 + $0x1c8] sm:$0xf]
          %v1265 = vld [vmem:[%s3 + $0x1cc] sm:$0xf]
          %v1266 = vld [vmem:[%s3 + $0x1d0] sm:$0xf]
          %v1267 = vld [vmem:[%s3 + $0x1d4] sm:$0xf]
          %v1268 = vld [vmem:[%s3 + $0x1d8] sm:$0xf]
          %v1269 = vld [vmem:[%s3 + $0x1dc] sm:$0xf]
          %v1270 = vld [vmem:[%s3 + $0x1e0] sm:$0xf]
          %v1271 = vld [vmem:[%s3 + $0x1e4] sm:$0xf]
          %v1272 = vld [vmem:[%s3 + $0x1e8] sm:$0xf]
          %v1273 = vld [vmem:[%s3 + $0x1ec] sm:$0xf]
          %v1274 = vld [vmem:[%s3 + $0x1f0] sm:$0xf]
          %v1275 = vld [vmem:[%s3 + $0x1f4] sm:$0xf]
          %v1276 = vld [vmem:[%s3 + $0x1f8] sm:$0xf]
          %v1277 = vld [vmem:[%s3 + $0x1fc] sm:$0xf]
          %v1278 = vld [vmem:[%s3 + $0x200] sm:$0xf]
          %v1279 = vld [vmem:[%s3 + $0x204] sm:$0xf]
          %v1280 = vld [vmem:[%s3 + $0x208] sm:$0xf]
          %v1281 = vld [vmem:[%s3 + $0x20c] sm:$0xf]
          %v1282 = vld [vmem:[%s3 + $0x210] sm:$0xf]
          %v1283 = vld [vmem:[%s3 + $0x214] sm:$0xf]
          %v1284 = vld [vmem:[%s3 + $0x218] sm:$0xf]
          %v1285 = vld [vmem:[%s3 + $0x21c] sm:$0xf]
          %v1286 = vld [vmem:[%s3 + $0x220] sm:$0xf]
          %v1287 = vld [vmem:[%s3 + $0x224] sm:$0xf]
          %v1288 = vld [vmem:[%s3 + $0x228] sm:$0xf]
          %v1289 = vld [vmem:[%s3 + $0x22c] sm:$0xf]
          %v1290 = vld [vmem:[%s3 + $0x230] sm:$0xf]
          %v1291 = vld [vmem:[%s3 + $0x234] sm:$0xf]
          %v1292 = vld [vmem:[%s3 + $0x238] sm:$0xf]
          %v1293 = vld [vmem:[%s3 + $0x23c] sm:$0xf]
          %v1294 = vld [vmem:[%s3 + $0x240] sm:$0xf]
          %v1295 = vld [vmem:[%s3 + $0x244] sm:$0xf]
          %v1296 = vld [vmem:[%s3 + $0x248] sm:$0xf]
          %v1297 = vld [vmem:[%s3 + $0x24c] sm:$0xf]
          %v1298 = vld [vmem:[%s3 + $0x250] sm:$0xf]
          %v1299 = vld [vmem:[%s3 + $0x254] sm:$0xf]
          %v1300 = vld [vmem:[%s3 + $0x258] sm:$0xf]
          %v1301 = vld [vmem:[%s3 + $0x25c] sm:$0xf]
          %v1302 = vld [vmem:[%s3 + $0x260] sm:$0xf]
          %v1303 = vld [vmem:[%s3 + $0x264] sm:$0xf]
          %v1304 = vld [vmem:[%s3 + $0x268] sm:$0xf]
          %v1305 = vld [vmem:[%s3 + $0x26c] sm:$0xf]
          %v1306 = vld [vmem:[%s3 + $0x270] sm:$0xf]
          %v1307 = vld [vmem:[%s3 + $0x274] sm:$0xf]
          %v1308 = vld [vmem:[%s3 + $0x278] sm:$0xf]
          %v1309 = vld [vmem:[%s3 + $0x27c] sm:$0xf]
          %v1310 = vld [vmem:[%s3 + $0x280] sm:$0xf]
          %v1311 = vld [vmem:[%s3 + $0x284] sm:$0xf]
          %v1312 = vld [vmem:[%s3 + $0x288] sm:$0xf]
          %v1313 = vld [vmem:[%s3 + $0x28c] sm:$0xf]
          %v1314 = vld [vmem:[%s3 + $0x290] sm:$0xf]
          %v1315 = vld [vmem:[%s3 + $0x294] sm:$0xf]
          %v1316 = vld [vmem:[%s3 + $0x298] sm:$0xf]
          %v1317 = vld [vmem:[%s3 + $0x29c] sm:$0xf]
          %v1318 = vld [vmem:[%s3 + $0x2a0] sm:$0xf]
          %v1319 = vld [vmem:[%s3 + $0x2a4] sm:$0xf]
          %v1320 = vld [vmem:[%s3 + $0x2a8] sm:$0xf]
          %v1321 = vld [vmem:[%s3 + $0x2ac] sm:$0xf]
          %v1322 = vld [vmem:[%s3 + $0x2b0] sm:$0xf]
          %v1323 = vld [vmem:[%s3 + $0x2b4] sm:$0xf]
          %v1324 = vld [vmem:[%s3 + $0x2b8] sm:$0xf]
          %v1325 = vld [vmem:[%s3 + $0x2bc] sm:$0xf]
          %v1326 = vld [vmem:[%s3 + $0x2c0] sm:$0xf]
          %v1327 = vld [vmem:[%s3 + $0x2c4] sm:$0xf]
          %v1328 = vld [vmem:[%s3 + $0x2c8] sm:$0xf]
          %v1329 = vld [vmem:[%s3 + $0x2cc] sm:$0xf]
          %v1330 = vld [vmem:[%s3 + $0x2d0] sm:$0xf]
          %v1331 = vld [vmem:[%s3 + $0x2d4] sm:$0xf]
          %v1332 = vld [vmem:[%s3 + $0x2d8] sm:$0xf]
          %v1333 = vld [vmem:[%s3 + $0x2dc] sm:$0xf]
          %v1334 = vld [vmem:[%s3 + $0x2e0] sm:$0xf]
          %v1335 = vld [vmem:[%s3 + $0x2e4] sm:$0xf]
          %v1336 = vld [vmem:[%s3 + $0x2e8] sm:$0xf]
          %v1337 = vld [vmem:[%s3 + $0x2ec] sm:$0xf]
          %v1338 = vld [vmem:[%s3 + $0x2f0] sm:$0xf]
          %v1339 = vld [vmem:[%s3 + $0x2f4] sm:$0xf]
          %v1340 = vld [vmem:[%s3 + $0x2f8] sm:$0xf]
          %v1341 = vld [vmem:[%s3 + $0x2fc] sm:$0xf]
          %v1342 = vld [vmem:[%s3 + $0x300] sm:$0xf]
          %v1343 = vld [vmem:[%s3 + $0x304] sm:$0xf]
          %v1344 = vld [vmem:[%s3 + $0x308] sm:$0xf]
          %v1345 = vld [vmem:[%s3 + $0x30c] sm:$0xf]
          %v1346 = vld [vmem:[%s3 + $0x310] sm:$0xf]
          %v1347 = vld [vmem:[%s3 + $0x314] sm:$0xf]
          %v1348 = vld [vmem:[%s3 + $0x318] sm:$0xf]
          %v1349 = vld [vmem:[%s3 + $0x31c] sm:$0xf]
          %v1350 = vld [vmem:[%s3 + $0x320] sm:$0xf]
          %v1351 = vld [vmem:[%s3 + $0x324] sm:$0xf]
          %v1352 = vld [vmem:[%s3 + $0x328] sm:$0xf]
          %v1353 = vld [vmem:[%s3 + $0x32c] sm:$0xf]
          %v1354 = vld [vmem:[%s3 + $0x330] sm:$0xf]
          %v1355 = vld [vmem:[%s3 + $0x334] sm:$0xf]
          %v1356 = vld [vmem:[%s3 + $0x338] sm:$0xf]
          %v1357 = vld [vmem:[%s3 + $0x33c] sm:$0xf]
          %v1358 = vld [vmem:[%s3 + $0x340] sm:$0xf]
          %v1359 = vld [vmem:[%s3 + $0x344] sm:$0xf]
          %v1360 = vld [vmem:[%s3 + $0x348] sm:$0xf]
          %v1361 = vld [vmem:[%s3 + $0x34c] sm:$0xf]
          %v1362 = vld [vmem:[%s3 + $0x350] sm:$0xf]
          %v1363 = vld [vmem:[%s3 + $0x354] sm:$0xf]
          %v1364 = vld [vmem:[%s3 + $0x358] sm:$0xf]
          %v1365 = vld [vmem:[%s3 + $0x35c] sm:$0xf]
          %v1366 = vld [vmem:[%s3 + $0x360] sm:$0xf]
          %v1367 = vld [vmem:[%s3 + $0x364] sm:$0xf]
          %v1368 = vld [vmem:[%s3 + $0x368] sm:$0xf]
          %v1369 = vld [vmem:[%s3 + $0x36c] sm:$0xf]
          %v1370 = vld [vmem:[%s3 + $0x370] sm:$0xf]
          %v1371 = vld [vmem:[%s3 + $0x374] sm:$0xf]
          %v1372 = vld [vmem:[%s3 + $0x378] sm:$0xf]
          %v1373 = vld [vmem:[%s3 + $0x37c] sm:$0xf]
          %v1374 = vld [vmem:[%s4] sm:$0x1]
          %v1376 = vlaneseq
          %v1377 = vshrl.u32 %v1376, 7
          %v1378 = vsub.s32 0, %v1377
          %v1379 = vrot.slane %v1374, %v1378
          %v1395 = vunpack.c.l.b16 %v1136
          %v1396 = vunpack.c.h.b16 %v1136
          %v1397 = vunpack.c.l.b16 %v1137
          %v1398 = vunpack.c.h.b16 %v1137
          %v1399 = vunpack.c.l.b16 %v1138
          %v1400 = vunpack.c.h.b16 %v1138
          %v1401 = vunpack.c.l.b16 %v1139
          %v1402 = vunpack.c.h.b16 %v1139
          %v1403 = vunpack.c.l.b16 %v1140
          %v1404 = vunpack.c.h.b16 %v1140
          %v1405 = vunpack.c.l.b16 %v1141
          %v1406 = vunpack.c.h.b16 %v1141
          %v1407 = vunpack.c.l.b16 %v1142
          %v1408 = vunpack.c.h.b16 %v1142
          %v1409 = vunpack.c.l.b16 %v1143
          %v1410 = vunpack.c.h.b16 %v1143
          %v1411 = vunpack.c.l.b16 %v1144
          %v1412 = vunpack.c.h.b16 %v1144
          %v1413 = vunpack.c.l.b16 %v1145
          %v1414 = vunpack.c.h.b16 %v1145
          %v1415 = vunpack.c.l.b16 %v1146
          %v1416 = vunpack.c.h.b16 %v1146
          %v1417 = vunpack.c.l.b16 %v1147
          %v1418 = vunpack.c.h.b16 %v1147
          %v1419 = vunpack.c.l.b16 %v1148
          %v1420 = vunpack.c.h.b16 %v1148
          %v1421 = vunpack.c.l.b16 %v1149
          %v1422 = vunpack.c.h.b16 %v1149
          %v1423 = vpack.c.b16 %v1409, %v1395
          %v1424 = vpack.c.b16 %v1410, %v1396
          %v1425 = vpack.c.b16 %v1411, %v1397
          %v1426 = vpack.c.b16 %v1412, %v1398
          %v1427 = vpack.c.b16 %v1413, %v1399
          %v1428 = vpack.c.b16 %v1414, %v1400
          %v1429 = vpack.c.b16 %v1415, %v1401
          %v1430 = vpack.c.b16 %v1416, %v1402
          %v1431 = vpack.c.b16 %v1417, %v1403
          %v1432 = vpack.c.b16 %v1418, %v1404
          %v1433 = vpack.c.b16 %v1419, %v1405
          %v1434 = vpack.c.b16 %v1420, %v1406
          %v1435 = vpack.c.b16 %v1421, %v1407
          %v1436 = vpack.c.b16 %v1422, %v1408
          %v1675 = vunpack.c.l.b16 %v1150
          %v1676 = vunpack.c.l.b16 %v1151
          %v1677 = vunpack.c.l.b16 %v1152
          %v1678 = vunpack.c.l.b16 %v1153
          %v1679 = vunpack.c.l.b16 %v1154
          %v1680 = vunpack.c.l.b16 %v1155
          %v1681 = vunpack.c.l.b16 %v1156
          %v1682 = vunpack.c.l.b16 %v1157
          %v1683 = vunpack.c.l.b16 %v1158
          %v1684 = vunpack.c.l.b16 %v1159
          %v1685 = vunpack.c.l.b16 %v1160
          %v1686 = vunpack.c.l.b16 %v1161
          %v1687 = vunpack.c.l.b16 %v1162
          %v1688 = vunpack.c.l.b16 %v1163
          %v1689 = vunpack.c.l.b16 %v1164
          %v1690 = vunpack.c.l.b16 %v1165
          %v1691 = vunpack.c.l.b16 %v1166
          %v1692 = vunpack.c.l.b16 %v1167
          %v1693 = vunpack.c.l.b16 %v1168
          %v1694 = vunpack.c.l.b16 %v1169
          %v1695 = vunpack.c.l.b16 %v1170
          %v1696 = vunpack.c.l.b16 %v1171
          %v1697 = vunpack.c.l.b16 %v1172
          %v1698 = vunpack.c.l.b16 %v1173
          %v1699 = vunpack.c.l.b16 %v1174
          %v1700 = vunpack.c.l.b16 %v1175
          %v1701 = vunpack.c.l.b16 %v1176
          %v1702 = vunpack.c.l.b16 %v1177
          %v1703 = vunpack.c.l.b16 %v1178
          %v1704 = vunpack.c.l.b16 %v1179
          %v1705 = vunpack.c.l.b16 %v1180
          %v1706 = vunpack.c.l.b16 %v1181
          %v1707 = vunpack.c.l.b16 %v1182
          %v1708 = vunpack.c.l.b16 %v1183
          %v1709 = vunpack.c.l.b16 %v1184
          %v1710 = vunpack.c.l.b16 %v1185
          %v1711 = vunpack.c.l.b16 %v1186
          %v1712 = vunpack.c.l.b16 %v1187
          %v1713 = vunpack.c.l.b16 %v1188
          %v1714 = vunpack.c.l.b16 %v1189
          %v1715 = vunpack.c.l.b16 %v1190
          %v1716 = vunpack.c.l.b16 %v1191
          %v1717 = vunpack.c.l.b16 %v1192
          %v1718 = vunpack.c.l.b16 %v1193
          %v1719 = vunpack.c.l.b16 %v1194
          %v1720 = vunpack.c.l.b16 %v1195
          %v1721 = vunpack.c.l.b16 %v1196
          %v1722 = vunpack.c.l.b16 %v1197
          %v1723 = vunpack.c.l.b16 %v1198
          %v1724 = vunpack.c.l.b16 %v1199
          %v1725 = vunpack.c.l.b16 %v1200
          %v1726 = vunpack.c.l.b16 %v1201
          %v1727 = vunpack.c.l.b16 %v1202
          %v1728 = vunpack.c.l.b16 %v1203
          %v1729 = vunpack.c.l.b16 %v1204
          %v1730 = vunpack.c.l.b16 %v1205
          %v1731 = vunpack.c.l.b16 %v1206
          %v1732 = vunpack.c.l.b16 %v1207
          %v1733 = vunpack.c.l.b16 %v1208
          %v1734 = vunpack.c.l.b16 %v1209
          %v1735 = vunpack.c.l.b16 %v1210
          %v1736 = vunpack.c.l.b16 %v1211
          %v1737 = vunpack.c.l.b16 %v1212
          %v1738 = vunpack.c.l.b16 %v1213
          %v1739 = vunpack.c.l.b16 %v1214
          %v1740 = vunpack.c.l.b16 %v1215
          %v1741 = vunpack.c.l.b16 %v1216
          %v1742 = vunpack.c.l.b16 %v1217
          %v1743 = vunpack.c.l.b16 %v1218
          %v1744 = vunpack.c.l.b16 %v1219
          %v1745 = vunpack.c.l.b16 %v1220
          %v1746 = vunpack.c.l.b16 %v1221
          %v1747 = vunpack.c.l.b16 %v1222
          %v1748 = vunpack.c.l.b16 %v1223
          %v1749 = vunpack.c.l.b16 %v1224
          %v1750 = vunpack.c.l.b16 %v1225
          %v1751 = vunpack.c.l.b16 %v1226
          %v1752 = vunpack.c.l.b16 %v1227
          %v1753 = vunpack.c.l.b16 %v1228
          %v1754 = vunpack.c.l.b16 %v1229
          %v1755 = vunpack.c.l.b16 %v1230
          %v1756 = vunpack.c.l.b16 %v1231
          %v1757 = vunpack.c.l.b16 %v1232
          %v1758 = vunpack.c.l.b16 %v1233
          %v1759 = vunpack.c.l.b16 %v1234
          %v1760 = vunpack.c.l.b16 %v1235
          %v1761 = vunpack.c.l.b16 %v1236
          %v1762 = vunpack.c.l.b16 %v1237
          %v1763 = vunpack.c.l.b16 %v1238
          %v1764 = vunpack.c.l.b16 %v1239
          %v1765 = vunpack.c.l.b16 %v1240
          %v1766 = vunpack.c.l.b16 %v1241
          %v1767 = vunpack.c.l.b16 %v1242
          %v1768 = vunpack.c.l.b16 %v1243
          %v1769 = vunpack.c.l.b16 %v1244
          %v1770 = vunpack.c.l.b16 %v1245
          %v1771 = vunpack.c.l.b16 %v1246
          %v1772 = vunpack.c.l.b16 %v1247
          %v1773 = vunpack.c.l.b16 %v1248
          %v1774 = vunpack.c.l.b16 %v1249
          %v1775 = vunpack.c.l.b16 %v1250
          %v1776 = vunpack.c.l.b16 %v1251
          %v1777 = vunpack.c.l.b16 %v1252
          %v1778 = vunpack.c.l.b16 %v1253
          %v1779 = vunpack.c.l.b16 %v1254
          %v1780 = vunpack.c.l.b16 %v1255
          %v1781 = vunpack.c.l.b16 %v1256
          %v1782 = vunpack.c.l.b16 %v1257
          %v1783 = vunpack.c.l.b16 %v1258
          %v1784 = vunpack.c.l.b16 %v1259
          %v1785 = vunpack.c.l.b16 %v1260
          %v1786 = vunpack.c.l.b16 %v1261
          %v1787 = vunpack.c.l.b16 %v1262
          %v1788 = vunpack.c.l.b16 %v1263
          %v1789 = vunpack.c.l.b16 %v1264
          %v1790 = vunpack.c.l.b16 %v1265
          %v1791 = vunpack.c.l.b16 %v1266
          %v1792 = vunpack.c.l.b16 %v1267
          %v1793 = vunpack.c.l.b16 %v1268
          %v1794 = vunpack.c.l.b16 %v1269
          %v1795 = vunpack.c.l.b16 %v1270
          %v1796 = vunpack.c.l.b16 %v1271
          %v1797 = vunpack.c.l.b16 %v1272
          %v1798 = vunpack.c.l.b16 %v1273
          %v1799 = vunpack.c.l.b16 %v1274
          %v1800 = vunpack.c.l.b16 %v1275
          %v1801 = vunpack.c.l.b16 %v1276
          %v1802 = vunpack.c.l.b16 %v1277
          %v1803 = vunpack.c.l.b16 %v1278
          %v1804 = vunpack.c.l.b16 %v1279
          %v1805 = vunpack.c.l.b16 %v1280
          %v1806 = vunpack.c.l.b16 %v1281
          %v1807 = vunpack.c.l.b16 %v1282
          %v1808 = vunpack.c.l.b16 %v1283
          %v1809 = vunpack.c.l.b16 %v1284
          %v1810 = vunpack.c.l.b16 %v1285
          %v1811 = vunpack.c.l.b16 %v1286
          %v1812 = vunpack.c.l.b16 %v1287
          %v1813 = vunpack.c.l.b16 %v1288
          %v1814 = vunpack.c.l.b16 %v1289
          %v1815 = vunpack.c.l.b16 %v1290
          %v1816 = vunpack.c.l.b16 %v1291
          %v1817 = vunpack.c.l.b16 %v1292
          %v1818 = vunpack.c.l.b16 %v1293
          %v1819 = vunpack.c.l.b16 %v1294
          %v1820 = vunpack.c.l.b16 %v1295
          %v1821 = vunpack.c.l.b16 %v1296
          %v1822 = vunpack.c.l.b16 %v1297
          %v1823 = vunpack.c.l.b16 %v1298
          %v1824 = vunpack.c.l.b16 %v1299
          %v1825 = vunpack.c.l.b16 %v1300
          %v1826 = vunpack.c.l.b16 %v1301
          %v1827 = vunpack.c.l.b16 %v1302
          %v1828 = vunpack.c.l.b16 %v1303
          %v1829 = vunpack.c.l.b16 %v1304
          %v1830 = vunpack.c.l.b16 %v1305
          %v1831 = vunpack.c.l.b16 %v1306
          %v1832 = vunpack.c.l.b16 %v1307
          %v1833 = vunpack.c.l.b16 %v1308
          %v1834 = vunpack.c.l.b16 %v1309
          %v1835 = vunpack.c.l.b16 %v1310
          %v1836 = vunpack.c.l.b16 %v1311
          %v1837 = vunpack.c.l.b16 %v1312
          %v1838 = vunpack.c.l.b16 %v1313
          %v1839 = vunpack.c.l.b16 %v1314
          %v1840 = vunpack.c.l.b16 %v1315
          %v1841 = vunpack.c.l.b16 %v1316
          %v1842 = vunpack.c.l.b16 %v1317
          %v1843 = vunpack.c.l.b16 %v1318
          %v1844 = vunpack.c.l.b16 %v1319
          %v1845 = vunpack.c.l.b16 %v1320
          %v1846 = vunpack.c.l.b16 %v1321
          %v1847 = vunpack.c.l.b16 %v1322
          %v1848 = vunpack.c.l.b16 %v1323
          %v1849 = vunpack.c.l.b16 %v1324
          %v1850 = vunpack.c.l.b16 %v1325
          %v1851 = vunpack.c.l.b16 %v1326
          %v1852 = vunpack.c.l.b16 %v1327
          %v1853 = vunpack.c.l.b16 %v1328
          %v1854 = vunpack.c.l.b16 %v1329
          %v1855 = vunpack.c.l.b16 %v1330
          %v1856 = vunpack.c.l.b16 %v1331
          %v1857 = vunpack.c.l.b16 %v1332
          %v1858 = vunpack.c.l.b16 %v1333
          %v1859 = vunpack.c.l.b16 %v1334
          %v1860 = vunpack.c.l.b16 %v1335
          %v1861 = vunpack.c.l.b16 %v1336
          %v1862 = vunpack.c.l.b16 %v1337
          %v1863 = vunpack.c.l.b16 %v1338
          %v1864 = vunpack.c.l.b16 %v1339
          %v1865 = vunpack.c.l.b16 %v1340
          %v1866 = vunpack.c.l.b16 %v1341
          %v1867 = vunpack.c.l.b16 %v1342
          %v1868 = vunpack.c.l.b16 %v1343
          %v1869 = vunpack.c.l.b16 %v1344
          %v1870 = vunpack.c.l.b16 %v1345
          %v1871 = vunpack.c.l.b16 %v1346
          %v1872 = vunpack.c.l.b16 %v1347
          %v1873 = vunpack.c.l.b16 %v1348
          %v1874 = vunpack.c.l.b16 %v1349
          %v1875 = vunpack.c.l.b16 %v1350
          %v1876 = vunpack.c.l.b16 %v1351
          %v1877 = vunpack.c.l.b16 %v1352
          %v1878 = vunpack.c.l.b16 %v1353
          %v1879 = vunpack.c.l.b16 %v1354
          %v1880 = vunpack.c.l.b16 %v1355
          %v1881 = vunpack.c.l.b16 %v1356
          %v1882 = vunpack.c.l.b16 %v1357
          %v1883 = vunpack.c.l.b16 %v1358
          %v1884 = vunpack.c.l.b16 %v1359
          %v1885 = vunpack.c.l.b16 %v1360
          %v1886 = vunpack.c.l.b16 %v1361
          %v1887 = vunpack.c.l.b16 %v1362
          %v1888 = vunpack.c.l.b16 %v1363
          %v1889 = vunpack.c.l.b16 %v1364
          %v1890 = vunpack.c.l.b16 %v1365
          %v1891 = vunpack.c.l.b16 %v1366
          %v1892 = vunpack.c.l.b16 %v1367
          %v1893 = vunpack.c.l.b16 %v1368
          %v1894 = vunpack.c.l.b16 %v1369
          %v1895 = vunpack.c.l.b16 %v1370
          %v1896 = vunpack.c.l.b16 %v1371
          %v1897 = vunpack.c.l.b16 %v1372
          %v1898 = vunpack.c.l.b16 %v1373
          %v1899 = vpack.c.b16 %v1676, %v1675
          %v1900 = vpack.c.b16 %v1678, %v1677
          %v1901 = vpack.c.b16 %v1680, %v1679
          %v1902 = vpack.c.b16 %v1682, %v1681
          %v1903 = vpack.c.b16 %v1684, %v1683
          %v1904 = vpack.c.b16 %v1686, %v1685
          %v1905 = vpack.c.b16 %v1688, %v1687
          %v1906 = vpack.c.b16 %v1690, %v1689
          %v1907 = vpack.c.b16 %v1692, %v1691
          %v1908 = vpack.c.b16 %v1694, %v1693
          %v1909 = vpack.c.b16 %v1696, %v1695
          %v1910 = vpack.c.b16 %v1698, %v1697
          %v1911 = vpack.c.b16 %v1700, %v1699
          %v1912 = vpack.c.b16 %v1702, %v1701
          %v1913 = vpack.c.b16 %v1704, %v1703
          %v1914 = vpack.c.b16 %v1706, %v1705
          %v1915 = vpack.c.b16 %v1708, %v1707
          %v1916 = vpack.c.b16 %v1710, %v1709
          %v1917 = vpack.c.b16 %v1712, %v1711
          %v1918 = vpack.c.b16 %v1714, %v1713
          %v1919 = vpack.c.b16 %v1716, %v1715
          %v1920 = vpack.c.b16 %v1718, %v1717
          %v1921 = vpack.c.b16 %v1720, %v1719
          %v1922 = vpack.c.b16 %v1722, %v1721
          %v1923 = vpack.c.b16 %v1724, %v1723
          %v1924 = vpack.c.b16 %v1726, %v1725
          %v1925 = vpack.c.b16 %v1728, %v1727
          %v1926 = vpack.c.b16 %v1730, %v1729
          %v1927 = vpack.c.b16 %v1732, %v1731
          %v1928 = vpack.c.b16 %v1734, %v1733
          %v1929 = vpack.c.b16 %v1736, %v1735
          %v1930 = vpack.c.b16 %v1738, %v1737
          %v1931 = vpack.c.b16 %v1740, %v1739
          %v1932 = vpack.c.b16 %v1742, %v1741
          %v1933 = vpack.c.b16 %v1744, %v1743
          %v1934 = vpack.c.b16 %v1746, %v1745
          %v1935 = vpack.c.b16 %v1748, %v1747
          %v1936 = vpack.c.b16 %v1750, %v1749
          %v1937 = vpack.c.b16 %v1752, %v1751
          %v1938 = vpack.c.b16 %v1754, %v1753
          %v1939 = vpack.c.b16 %v1756, %v1755
          %v1940 = vpack.c.b16 %v1758, %v1757
          %v1941 = vpack.c.b16 %v1760, %v1759
          %v1942 = vpack.c.b16 %v1762, %v1761
          %v1943 = vpack.c.b16 %v1764, %v1763
          %v1944 = vpack.c.b16 %v1766, %v1765
          %v1945 = vpack.c.b16 %v1768, %v1767
          %v1946 = vpack.c.b16 %v1770, %v1769
          %v1947 = vpack.c.b16 %v1772, %v1771
          %v1948 = vpack.c.b16 %v1774, %v1773
          %v1949 = vpack.c.b16 %v1776, %v1775
          %v1950 = vpack.c.b16 %v1778, %v1777
          %v1951 = vpack.c.b16 %v1780, %v1779
          %v1952 = vpack.c.b16 %v1782, %v1781
          %v1953 = vpack.c.b16 %v1784, %v1783
          %v1954 = vpack.c.b16 %v1786, %v1785
          %v1955 = vpack.c.b16 %v1788, %v1787
          %v1956 = vpack.c.b16 %v1790, %v1789
          %v1957 = vpack.c.b16 %v1792, %v1791
          %v1958 = vpack.c.b16 %v1794, %v1793
          %v1959 = vpack.c.b16 %v1796, %v1795
          %v1960 = vpack.c.b16 %v1798, %v1797
          %v1961 = vpack.c.b16 %v1800, %v1799
          %v1962 = vpack.c.b16 %v1802, %v1801
          %v1963 = vpack.c.b16 %v1804, %v1803
          %v1964 = vpack.c.b16 %v1806, %v1805
          %v1965 = vpack.c.b16 %v1808, %v1807
          %v1966 = vpack.c.b16 %v1810, %v1809
          %v1967 = vpack.c.b16 %v1812, %v1811
          %v1968 = vpack.c.b16 %v1814, %v1813
          %v1969 = vpack.c.b16 %v1816, %v1815
          %v1970 = vpack.c.b16 %v1818, %v1817
          %v1971 = vpack.c.b16 %v1820, %v1819
          %v1972 = vpack.c.b16 %v1822, %v1821
          %v1973 = vpack.c.b16 %v1824, %v1823
          %v1974 = vpack.c.b16 %v1826, %v1825
          %v1975 = vpack.c.b16 %v1828, %v1827
          %v1976 = vpack.c.b16 %v1830, %v1829
          %v1977 = vpack.c.b16 %v1832, %v1831
          %v1978 = vpack.c.b16 %v1834, %v1833
          %v1979 = vpack.c.b16 %v1836, %v1835
          %v1980 = vpack.c.b16 %v1838, %v1837
          %v1981 = vpack.c.b16 %v1840, %v1839
          %v1982 = vpack.c.b16 %v1842, %v1841
          %v1983 = vpack.c.b16 %v1844, %v1843
          %v1984 = vpack.c.b16 %v1846, %v1845
          %v1985 = vpack.c.b16 %v1848, %v1847
          %v1986 = vpack.c.b16 %v1850, %v1849
          %v1987 = vpack.c.b16 %v1852, %v1851
          %v1988 = vpack.c.b16 %v1854, %v1853
          %v1989 = vpack.c.b16 %v1856, %v1855
          %v1990 = vpack.c.b16 %v1858, %v1857
          %v1991 = vpack.c.b16 %v1860, %v1859
          %v1992 = vpack.c.b16 %v1862, %v1861
          %v1993 = vpack.c.b16 %v1864, %v1863
          %v1994 = vpack.c.b16 %v1866, %v1865
          %v1995 = vpack.c.b16 %v1868, %v1867
          %v1996 = vpack.c.b16 %v1870, %v1869
          %v1997 = vpack.c.b16 %v1872, %v1871
          %v1998 = vpack.c.b16 %v1874, %v1873
          %v1999 = vpack.c.b16 %v1876, %v1875
          %v2000 = vpack.c.b16 %v1878, %v1877
          %v2001 = vpack.c.b16 %v1880, %v1879
          %v2002 = vpack.c.b16 %v1882, %v1881
          %v2003 = vpack.c.b16 %v1884, %v1883
          %v2004 = vpack.c.b16 %v1886, %v1885
          %v2005 = vpack.c.b16 %v1888, %v1887
          %v2006 = vpack.c.b16 %v1890, %v1889
          %v2007 = vpack.c.b16 %v1892, %v1891
          %v2008 = vpack.c.b16 %v1894, %v1893
          %v2009 = vpack.c.b16 %v1896, %v1895
          %v2010 = vpack.c.b16 %v1898, %v1897
          %2123 = vmatprep.subr.bf16.mxu0 0
          %2124 = vmatpush1.bf16.msra.mxu0 %v1899
          %2125 = vmatprep.subr.bf16.mxu0 0
          %2126 = vmatpush1.bf16.msra.mxu0 %v1900
          %2127 = vmatprep.subr.bf16.mxu0 0
          %2128 = vmatpush1.bf16.msra.mxu0 %v1901
          %2129 = vmatprep.subr.bf16.mxu0 0
          %2130 = vmatpush1.bf16.msra.mxu0 %v1902
          %2131 = vmatprep.subr.bf16.mxu0 0
          %2132 = vmatpush1.bf16.msra.mxu0 %v1903
          %2133 = vmatprep.subr.bf16.mxu0 0
          %2134 = vmatpush1.bf16.msra.mxu0 %v1904
          %2135 = vmatprep.subr.bf16.mxu0 0
          %2136 = vmatpush1.bf16.msra.mxu0 %v1905
          %2137 = vmatprep.subr.bf16.mxu0 0
          %2138 = vmatpush1.bf16.msra.mxu0 %v1906
          %2139 = vmatprep.subr.bf16.mxu0 0
          %2140 = vmatpush1.bf16.msra.mxu0 %v1907
          %2141 = vmatprep.subr.bf16.mxu0 0
          %2142 = vmatpush1.bf16.msra.mxu0 %v1908
          %2143 = vmatprep.subr.bf16.mxu0 0
          %2144 = vmatpush1.bf16.msra.mxu0 %v1909
          %2145 = vmatprep.subr.bf16.mxu0 0
          %2146 = vmatpush1.bf16.msra.mxu0 %v1910
          %2147 = vmatprep.subr.bf16.mxu0 0
          %2148 = vmatpush1.bf16.msra.mxu0 %v1911
          %2149 = vmatprep.subr.bf16.mxu0 0
          %2150 = vmatpush1.bf16.msra.mxu0 %v1912
          %2151 = vmatprep.subr.bf16.mxu0 0
          %2152 = vmatpush1.bf16.msra.mxu0 %v1913
          %2153 = vmatprep.subr.bf16.mxu0 0
          %2154 = vmatpush1.bf16.msra.mxu0 %v1914
          %2155 = vmatprep.mubr.bf16.mxu0 %v1424
          %2156 = vmatmul.mubr.bf16.gmra.mrb[0].mxu0 %v1423
          %v2157 = vpop.f32.mrb[0].mxu0
          %v2158 = vadd.f32 %v1379, %v2157
          %v2159 = vpop.f32.mrb[0].mxu0
          %v2160 = vpop.f32.mrb[0].mxu0
          %v2161 = vadd.f32 %v1379, %v2160
          %v2162 = vpop.f32.mrb[0].mxu0
          %2163 = vdwg.mxu0
          %2164 = vmatprep.subr.bf16.mxu0 0
          %2165 = vmatpush1.bf16.msra.mxu0 %v1915
          %2166 = vmatprep.subr.bf16.mxu0 0
          %2167 = vmatpush1.bf16.msra.mxu0 %v1916
          %2168 = vmatprep.subr.bf16.mxu0 0
          %2169 = vmatpush1.bf16.msra.mxu0 %v1917
          %2170 = vmatprep.subr.bf16.mxu0 0
          %2171 = vmatpush1.bf16.msra.mxu0 %v1918
          %2172 = vmatprep.subr.bf16.mxu0 0
          %2173 = vmatpush1.bf16.msra.mxu0 %v1919
          %2174 = vmatprep.subr.bf16.mxu0 0
          %2175 = vmatpush1.bf16.msra.mxu0 %v1920
          %2176 = vmatprep.subr.bf16.mxu0 0
          %2177 = vmatpush1.bf16.msra.mxu0 %v1921
          %2178 = vmatprep.subr.bf16.mxu0 0
          %2179 = vmatpush1.bf16.msra.mxu0 %v1922
          %2180 = vmatprep.subr.bf16.mxu0 0
          %2181 = vmatpush1.bf16.msra.mxu0 %v1923
          %2182 = vmatprep.subr.bf16.mxu0 0
          %2183 = vmatpush1.bf16.msra.mxu0 %v1924
          %2184 = vmatprep.subr.bf16.mxu0 0
          %2185 = vmatpush1.bf16.msra.mxu0 %v1925
          %2186 = vmatprep.subr.bf16.mxu0 0
          %2187 = vmatpush1.bf16.msra.mxu0 %v1926
          %2188 = vmatprep.subr.bf16.mxu0 0
          %2189 = vmatpush1.bf16.msra.mxu0 %v1927
          %2190 = vmatprep.subr.bf16.mxu0 0
          %2191 = vmatpush1.bf16.msra.mxu0 %v1928
          %2192 = vmatprep.subr.bf16.mxu0 0
          %2193 = vmatpush1.bf16.msra.mxu0 %v1929
          %2194 = vmatprep.subr.bf16.mxu0 0
          %2195 = vmatpush1.bf16.msra.mxu0 %v1930
          %2196 = vmatprep.mubr.bf16.mxu0 %v1426
          %2197 = vmatmul.mubr.bf16.gmra.mrb[0].mxu0 %v1425
          %v2198 = vpop.f32.mrb[0].mxu0
          %v2199 = vadd.f32 %v2158, %v2198
          %v2200 = vpop.f32.mrb[0].mxu0
          %v2201 = vpop.f32.mrb[0].mxu0
          %v2202 = vadd.f32 %v2161, %v2201
          %v2203 = vpop.f32.mrb[0].mxu0
          %2204 = vdwg.mxu0
          %2205 = vmatprep.subr.bf16.mxu0 0
          %2206 = vmatpush1.bf16.msra.mxu0 %v1931
          %2207 = vmatprep.subr.bf16.mxu0 0
          %2208 = vmatpush1.bf16.msra.mxu0 %v1932
          %2209 = vmatprep.subr.bf16.mxu0 0
          %2210 = vmatpush1.bf16.msra.mxu0 %v1933
          %2211 = vmatprep.subr.bf16.mxu0 0
          %2212 = vmatpush1.bf16.msra.mxu0 %v1934
          %2213 = vmatprep.subr.bf16.mxu0 0
          %2214 = vmatpush1.bf16.msra.mxu0 %v1935
          %2215 = vmatprep.subr.bf16.mxu0 0
          %2216 = vmatpush1.bf16.msra.mxu0 %v1936
          %2217 = vmatprep.subr.bf16.mxu0 0
          %2218 = vmatpush1.bf16.msra.mxu0 %v1937
          %2219 = vmatprep.subr.bf16.mxu0 0
          %2220 = vmatpush1.bf16.msra.mxu0 %v1938
          %2221 = vmatprep.subr.bf16.mxu0 0
          %2222 = vmatpush1.bf16.msra.mxu0 %v1939
          %2223 = vmatprep.subr.bf16.mxu0 0
          %2224 = vmatpush1.bf16.msra.mxu0 %v1940
          %2225 = vmatprep.subr.bf16.mxu0 0
          %2226 = vmatpush1.bf16.msra.mxu0 %v1941
          %2227 = vmatprep.subr.bf16.mxu0 0
          %2228 = vmatpush1.bf16.msra.mxu0 %v1942
          %2229 = vmatprep.subr.bf16.mxu0 0
          %2230 = vmatpush1.bf16.msra.mxu0 %v1943
          %2231 = vmatprep.subr.bf16.mxu0 0
          %2232 = vmatpush1.bf16.msra.mxu0 %v1944
          %2233 = vmatprep.subr.bf16.mxu0 0
          %2234 = vmatpush1.bf16.msra.mxu0 %v1945
          %2235 = vmatprep.subr.bf16.mxu0 0
          %2236 = vmatpush1.bf16.msra.mxu0 %v1946
          %2237 = vmatprep.mubr.bf16.mxu0 %v1428
          %2238 = vmatmul.mubr.bf16.gmra.mrb[0].mxu0 %v1427
          %v2239 = vpop.f32.mrb[0].mxu0
          %v2240 = vadd.f32 %v2199, %v2239
          %v2241 = vpop.f32.mrb[0].mxu0
          %v2242 = vpop.f32.mrb[0].mxu0
          %v2243 = vadd.f32 %v2202, %v2242
          %v2244 = vpop.f32.mrb[0].mxu0
          %2245 = vdwg.mxu0
          %2246 = vmatprep.subr.bf16.mxu0 0
          %2247 = vmatpush1.bf16.msra.mxu0 %v1947
          %2248 = vmatprep.subr.bf16.mxu0 0
          %2249 = vmatpush1.bf16.msra.mxu0 %v1948
          %2250 = vmatprep.subr.bf16.mxu0 0
          %2251 = vmatpush1.bf16.msra.mxu0 %v1949
          %2252 = vmatprep.subr.bf16.mxu0 0
          %2253 = vmatpush1.bf16.msra.mxu0 %v1950
          %2254 = vmatprep.subr.bf16.mxu0 0
          %2255 = vmatpush1.bf16.msra.mxu0 %v1951
          %2256 = vmatprep.subr.bf16.mxu0 0
          %2257 = vmatpush1.bf16.msra.mxu0 %v1952
          %2258 = vmatprep.subr.bf16.mxu0 0
          %2259 = vmatpush1.bf16.msra.mxu0 %v1953
          %2260 = vmatprep.subr.bf16.mxu0 0
          %2261 = vmatpush1.bf16.msra.mxu0 %v1954
          %2262 = vmatprep.subr.bf16.mxu0 0
          %2263 = vmatpush1.bf16.msra.mxu0 %v1955
          %2264 = vmatprep.subr.bf16.mxu0 0
          %2265 = vmatpush1.bf16.msra.mxu0 %v1956
          %2266 = vmatprep.subr.bf16.mxu0 0
          %2267 = vmatpush1.bf16.msra.mxu0 %v1957
          %2268 = vmatprep.subr.bf16.mxu0 0
          %2269 = vmatpush1.bf16.msra.mxu0 %v1958
          %2270 = vmatprep.subr.bf16.mxu0 0
          %2271 = vmatpush1.bf16.msra.mxu0 %v1959
          %2272 = vmatprep.subr.bf16.mxu0 0
          %2273 = vmatpush1.bf16.msra.mxu0 %v1960
          %2274 = vmatprep.subr.bf16.mxu0 0
          %2275 = vmatpush1.bf16.msra.mxu0 %v1961
          %2276 = vmatprep.subr.bf16.mxu0 0
          %2277 = vmatpush1.bf16.msra.mxu0 %v1962
          %2278 = vmatprep.mubr.bf16.mxu0 %v1430
          %2279 = vmatmul.mubr.bf16.gmra.mrb[0].mxu0 %v1429
          %v2280 = vpop.f32.mrb[0].mxu0
          %v2281 = vadd.f32 %v2240, %v2280
          %v2282 = vpop.f32.mrb[0].mxu0
          %v2283 = vpop.f32.mrb[0].mxu0
          %v2284 = vadd.f32 %v2243, %v2283
          %v2285 = vpop.f32.mrb[0].mxu0
          %2286 = vdwg.mxu0
          %2287 = vmatprep.subr.bf16.mxu0 0
          %2288 = vmatpush1.bf16.msra.mxu0 %v1963
          %2289 = vmatprep.subr.bf16.mxu0 0
          %2290 = vmatpush1.bf16.msra.mxu0 %v1964
          %2291 = vmatprep.subr.bf16.mxu0 0
          %2292 = vmatpush1.bf16.msra.mxu0 %v1965
          %2293 = vmatprep.subr.bf16.mxu0 0
          %2294 = vmatpush1.bf16.msra.mxu0 %v1966
          %2295 = vmatprep.subr.bf16.mxu0 0
          %2296 = vmatpush1.bf16.msra.mxu0 %v1967
          %2297 = vmatprep.subr.bf16.mxu0 0
          %2298 = vmatpush1.bf16.msra.mxu0 %v1968
          %2299 = vmatprep.subr.bf16.mxu0 0
          %2300 = vmatpush1.bf16.msra.mxu0 %v1969
          %2301 = vmatprep.subr.bf16.mxu0 0
          %2302 = vmatpush1.bf16.msra.mxu0 %v1970
          %2303 = vmatprep.subr.bf16.mxu0 0
          %2304 = vmatpush1.bf16.msra.mxu0 %v1971
          %2305 = vmatprep.subr.bf16.mxu0 0
          %2306 = vmatpush1.bf16.msra.mxu0 %v1972
          %2307 = vmatprep.subr.bf16.mxu0 0
          %2308 = vmatpush1.bf16.msra.mxu0 %v1973
          %2309 = vmatprep.subr.bf16.mxu0 0
          %2310 = vmatpush1.bf16.msra.mxu0 %v1974
          %2311 = vmatprep.subr.bf16.mxu0 0
          %2312 = vmatpush1.bf16.msra.mxu0 %v1975
          %2313 = vmatprep.subr.bf16.mxu0 0
          %2314 = vmatpush1.bf16.msra.mxu0 %v1976
          %2315 = vmatprep.subr.bf16.mxu0 0
          %2316 = vmatpush1.bf16.msra.mxu0 %v1977
          %2317 = vmatprep.subr.bf16.mxu0 0
          %2318 = vmatpush1.bf16.msra.mxu0 %v1978
          %2319 = vmatprep.mubr.bf16.mxu0 %v1432
          %2320 = vmatmul.mubr.bf16.gmra.mrb[0].mxu0 %v1431
          %v2321 = vpop.f32.mrb[0].mxu0
          %v2322 = vadd.f32 %v2281, %v2321
          %v2323 = vpop.f32.mrb[0].mxu0
          %v2324 = vpop.f32.mrb[0].mxu0
          %v2325 = vadd.f32 %v2284, %v2324
          %v2326 = vpop.f32.mrb[0].mxu0
          %2327 = vdwg.mxu0
          %2328 = vmatprep.subr.bf16.mxu0 0
          %2329 = vmatpush1.bf16.msra.mxu0 %v1979
          %2330 = vmatprep.subr.bf16.mxu0 0
          %2331 = vmatpush1.bf16.msra.mxu0 %v1980
          %2332 = vmatprep.subr.bf16.mxu0 0
          %2333 = vmatpush1.bf16.msra.mxu0 %v1981
          %2334 = vmatprep.subr.bf16.mxu0 0
          %2335 = vmatpush1.bf16.msra.mxu0 %v1982
          %2336 = vmatprep.subr.bf16.mxu0 0
          %2337 = vmatpush1.bf16.msra.mxu0 %v1983
          %2338 = vmatprep.subr.bf16.mxu0 0
          %2339 = vmatpush1.bf16.msra.mxu0 %v1984
          %2340 = vmatprep.subr.bf16.mxu0 0
          %2341 = vmatpush1.bf16.msra.mxu0 %v1985
          %2342 = vmatprep.subr.bf16.mxu0 0
          %2343 = vmatpush1.bf16.msra.mxu0 %v1986
          %2344 = vmatprep.subr.bf16.mxu0 0
          %2345 = vmatpush1.bf16.msra.mxu0 %v1987
          %2346 = vmatprep.subr.bf16.mxu0 0
          %2347 = vmatpush1.bf16.msra.mxu0 %v1988
          %2348 = vmatprep.subr.bf16.mxu0 0
          %2349 = vmatpush1.bf16.msra.mxu0 %v1989
          %2350 = vmatprep.subr.bf16.mxu0 0
          %2351 = vmatpush1.bf16.msra.mxu0 %v1990
          %2352 = vmatprep.subr.bf16.mxu0 0
          %2353 = vmatpush1.bf16.msra.mxu0 %v1991
          %2354 = vmatprep.subr.bf16.mxu0 0
          %2355 = vmatpush1.bf16.msra.mxu0 %v1992
          %2356 = vmatprep.subr.bf16.mxu0 0
          %2357 = vmatpush1.bf16.msra.mxu0 %v1993
          %2358 = vmatprep.subr.bf16.mxu0 0
          %2359 = vmatpush1.bf16.msra.mxu0 %v1994
          %2360 = vmatprep.mubr.bf16.mxu0 %v1434
          %2361 = vmatmul.mubr.bf16.gmra.mrb[0].mxu0 %v1433
          %v2362 = vpop.f32.mrb[0].mxu0
          %v2363 = vadd.f32 %v2322, %v2362
          %v2364 = vpop.f32.mrb[0].mxu0
          %v2365 = vpop.f32.mrb[0].mxu0
          %v2366 = vadd.f32 %v2325, %v2365
          %v2367 = vpop.f32.mrb[0].mxu0
          %2368 = vdwg.mxu0
          %2369 = vmatprep.subr.bf16.mxu0 0
          %2370 = vmatpush1.bf16.msra.mxu0 %v1995
          %2371 = vmatprep.subr.bf16.mxu0 0
          %2372 = vmatpush1.bf16.msra.mxu0 %v1996
          %2373 = vmatprep.subr.bf16.mxu0 0
          %2374 = vmatpush1.bf16.msra.mxu0 %v1997
          %2375 = vmatprep.subr.bf16.mxu0 0
          %2376 = vmatpush1.bf16.msra.mxu0 %v1998
          %2377 = vmatprep.subr.bf16.mxu0 0
          %2378 = vmatpush1.bf16.msra.mxu0 %v1999
          %2379 = vmatprep.subr.bf16.mxu0 0
          %2380 = vmatpush1.bf16.msra.mxu0 %v2000
          %2381 = vmatprep.subr.bf16.mxu0 0
          %2382 = vmatpush1.bf16.msra.mxu0 %v2001
          %2383 = vmatprep.subr.bf16.mxu0 0
          %2384 = vmatpush1.bf16.msra.mxu0 %v2002
          %2385 = vmatprep.subr.bf16.mxu0 0
          %2386 = vmatpush1.bf16.msra.mxu0 %v2003
          %2387 = vmatprep.subr.bf16.mxu0 0
          %2388 = vmatpush1.bf16.msra.mxu0 %v2004
          %2389 = vmatprep.subr.bf16.mxu0 0
          %2390 = vmatpush1.bf16.msra.mxu0 %v2005
          %2391 = vmatprep.subr.bf16.mxu0 0
          %2392 = vmatpush1.bf16.msra.mxu0 %v2006
          %2393 = vmatprep.subr.bf16.mxu0 0
          %2394 = vmatpush1.bf16.msra.mxu0 %v2007
          %2395 = vmatprep.subr.bf16.mxu0 0
          %2396 = vmatpush1.bf16.msra.mxu0 %v2008
          %2397 = vmatprep.subr.bf16.mxu0 0
          %2398 = vmatpush1.bf16.msra.mxu0 %v2009
          %2399 = vmatprep.subr.bf16.mxu0 0
          %2400 = vmatpush1.bf16.msra.mxu0 %v2010
          %2401 = vmatprep.mubr.bf16.mxu0 %v1436
          %2402 = vmatmul.mubr.bf16.gmra.mrb[0].mxu0 %v1435
          %v2403 = vpop.f32.mrb[0].mxu0
          %v2404 = vadd.f32 %v2363, %v2403
          %v2405 = vpop.f32.mrb[0].mxu0
          %v2406 = vpop.f32.mrb[0].mxu0
          %v2407 = vadd.f32 %v2366, %v2406
          %v2408 = vpop.f32.mrb[0].mxu0
          %2409 = vdwg.mxu0
          %v2410 = vld [vmem:[%s1037] sm:$0xff]
          %v2411 = vld [vmem:[%s1037 + $0x8] sm:$0xff]
          %v2412 = vadd.f32 %v2410, %v2404
          %v2413 = vadd.f32 %v2411, %v2407
          %v2414 = vmul.f32 %v2412, 8.0
          %v2415 = vmul.f32 %v2413, 8.0
          %v2416 = vmul.f32 %v2414, %v1123
          %v2417 = vmul.f32 %v2415, %v1124
          %vm2418 = vcmask 523264
          %2419 = vst.msk [vmem:[#allocation2] sm:$0xff] %vm2418, %v2416
          %2420 = vst.msk [vmem:[#allocation2 + $0x8] sm:$0xff] %vm2418, %v2417
        $region120: #{tpu_custom_call.1} parent=115 // pred_fallthru
          _
        %v2421 = vld [vmem:[#allocation2] sm:$0xff]
        %v2422 = vld [vmem:[#allocation2 + $0x8] sm:$0xff]
        %v2423 = vpack.c.bf16 %v2422, %v2421
        %v2424 = vld [vmem:[%s1047] sm:$0xf]
        %v2425 = vld [vmem:[%s1047 + $0x4] sm:$0xf]
        %v2426 = vld [vmem:[%s1047 + $0x8] sm:$0xf]
        %v2427 = vld [vmem:[%s1047 + $0xc] sm:$0xf]
        %v2428 = vld [vmem:[%s1047 + $0x10] sm:$0xf]
        %v2429 = vld [vmem:[%s1047 + $0x14] sm:$0xf]
        %v2430 = vld [vmem:[%s1047 + $0x18] sm:$0xf]
        %v2431 = vld [vmem:[%s1047 + $0x1c] sm:$0xf]
        %v2432 = vld [vmem:[%s1050] sm:$0x1]
        %v2434 = vlaneseq
        %v2435 = vshrl.u32 %v2434, 7
        %v2436 = vsub.s32 0, %v2435
        %v2437 = vrot.slane %v2432, %v2436
        %v2447 = vunpack.c.l.b16 %v2424
        %v2448 = vunpack.c.l.b16 %v2425
        %v2449 = vunpack.c.l.b16 %v2426
        %v2450 = vunpack.c.l.b16 %v2427
        %v2451 = vunpack.c.l.b16 %v2428
        %v2452 = vunpack.c.l.b16 %v2429
        %v2453 = vunpack.c.l.b16 %v2430
        %v2454 = vunpack.c.l.b16 %v2431
        %v2455 = vpack.c.b16 %v2448, %v2447
        %v2456 = vpack.c.b16 %v2450, %v2449
        %v2457 = vpack.c.b16 %v2452, %v2451
        %v2458 = vpack.c.b16 %v2454, %v2453
        %vm2463 = vcmask 523264
        %v2465 = vsel %vm2463, %v2423, 0
        %2467 = vmatprep.subr.bf16.mxu0 0
        %2468 = vmatpush1.bf16.msra.mxu0 %v2455
        %2469 = vmatprep.subr.bf16.mxu0 0
        %2470 = vmatpush1.bf16.msra.mxu0 %v2456
        %2471 = vmatprep.subr.bf16.mxu0 0
        %2472 = vmatpush1.bf16.msra.mxu0 %v2457
        %2473 = vmatprep.subr.bf16.mxu0 0
        %2474 = vmatpush1.bf16.msra.mxu0 %v2458
        %2475 = vmatprep.subr.bf16.mxu0 0
        %2476 = vmatpush1.bf16.msra.mxu0 0
        %2477 = vmatprep.subr.bf16.mxu0 0
        %2478 = vmatpush1.bf16.msra.mxu0 0
        %2479 = vmatprep.subr.bf16.mxu0 0
        %2480 = vmatpush1.bf16.msra.mxu0 0
        %2481 = vmatprep.subr.bf16.mxu0 0
        %2482 = vmatpush1.bf16.msra.mxu0 0
        %2483 = vmatprep.subr.bf16.mxu0 0
        %2484 = vmatpush1.bf16.msra.mxu0 0
        %2485 = vmatprep.subr.bf16.mxu0 0
        %2486 = vmatpush1.bf16.msra.mxu0 0
        %2487 = vmatprep.subr.bf16.mxu0 0
        %2488 = vmatpush1.bf16.msra.mxu0 0
        %2489 = vmatprep.subr.bf16.mxu0 0
        %2490 = vmatpush1.bf16.msra.mxu0 0
        %2491 = vmatprep.subr.bf16.mxu0 0
        %2492 = vmatpush1.bf16.msra.mxu0 0
        %2493 = vmatprep.subr.bf16.mxu0 0
        %2494 = vmatpush1.bf16.msra.mxu0 0
        %2495 = vmatprep.subr.bf16.mxu0 0
        %2496 = vmatpush1.bf16.msra.mxu0 0
        %2497 = vmatprep.subr.bf16.mxu0 0
        %2498 = vmatpush1.bf16.msra.mxu0 0
        %2499 = vmatprep.mubr.bf16.mxu0 0
        %2500 = vmatmul.mubr.bf16.gmra.mrb[0].mxu0 %v2465
        %v2501 = vpop.f32.mrb[0].mxu0
        %v2502 = vadd.f32 %v2437, %v2501
        %v2503 = vpop.f32.mrb[0].mxu0
        %v2504 = vpop.f32.mrb[0].mxu0
        %v2505 = vadd.f32 %v2437, %v2504
        %v2506 = vpop.f32.mrb[0].mxu0
        %2507 = vdwg.mxu0
        %v2508 = vld [vmem:[%s1055] sm:$0xf]
        %v2509 = vld [vmem:[%s1055 + $0x4] sm:$0xf]
        %v2510 = vld [vmem:[%s1055 + $0x8] sm:$0xf]
        %v2511 = vld [vmem:[%s1055 + $0xc] sm:$0xf]
        %v2512 = vld [vmem:[%s1055 + $0x10] sm:$0xf]
        %v2513 = vld [vmem:[%s1055 + $0x14] sm:$0xf]
        %v2514 = vld [vmem:[%s1055 + $0x18] sm:$0xf]
        %v2515 = vld [vmem:[%s1055 + $0x1c] sm:$0xf]
        %v2516 = vld [vmem:[%s1058] sm:$0x1]
        %v2518 = vlaneseq
        %v2519 = vshrl.u32 %v2518, 7
        %v2520 = vsub.s32 0, %v2519
        %v2521 = vrot.slane %v2516, %v2520
        %v2531 = vunpack.c.l.b16 %v2508
        %v2532 = vunpack.c.l.b16 %v2509
        %v2533 = vunpack.c.l.b16 %v2510
        %v2534 = vunpack.c.l.b16 %v2511
        %v2535 = vunpack.c.l.b16 %v2512
        %v2536 = vunpack.c.l.b16 %v2513
        %v2537 = vunpack.c.l.b16 %v2514
        %v2538 = vunpack.c.l.b16 %v2515
        %v2539 = vpack.c.b16 %v2532, %v2531
        %v2540 = vpack.c.b16 %v2534, %v2533
        %v2541 = vpack.c.b16 %v2536, %v2535
        %v2542 = vpack.c.b16 %v2538, %v2537
        %2547 = vmatprep.subr.bf16.mxu0 0
        %2548 = vmatpush1.bf16.msra.mxu0 %v2539
        %2549 = vmatprep.subr.bf16.mxu0 0
        %2550 = vmatpush1.bf16.msra.mxu0 %v2540
        %2551 = vmatprep.subr.bf16.mxu0 0
        %2552 = vmatpush1.bf16.msra.mxu0 %v2541
        %2553 = vmatprep.subr.bf16.mxu0 0
        %2554 = vmatpush1.bf16.msra.mxu0 %v2542
        %2555 = vmatprep.subr.bf16.mxu0 0
        %2556 = vmatpush1.bf16.msra.mxu0 0
        %2557 = vmatprep.subr.bf16.mxu0 0
        %2558 = vmatpush1.bf16.msra.mxu0 0
        %2559 = vmatprep.subr.bf16.mxu0 0
        %2560 = vmatpush1.bf16.msra.mxu0 0
        %2561 = vmatprep.subr.bf16.mxu0 0
        %2562 = vmatpush1.bf16.msra.mxu0 0
        %2563 = vmatprep.subr.bf16.mxu0 0
        %2564 = vmatpush1.bf16.msra.mxu0 0
        %2565 = vmatprep.subr.bf16.mxu0 0
        %2566 = vmatpush1.bf16.msra.mxu0 0
        %2567 = vmatprep.subr.bf16.mxu0 0
        %2568 = vmatpush1.bf16.msra.mxu0 0
        %2569 = vmatprep.subr.bf16.mxu0 0
        %2570 = vmatpush1.bf16.msra.mxu0 0
        %2571 = vmatprep.subr.bf16.mxu0 0
        %2572 = vmatpush1.bf16.msra.mxu0 0
        %2573 = vmatprep.subr.bf16.mxu0 0
        %2574 = vmatpush1.bf16.msra.mxu0 0
        %2575 = vmatprep.subr.bf16.mxu0 0
        %2576 = vmatpush1.bf16.msra.mxu0 0
        %2577 = vmatprep.subr.bf16.mxu0 0
        %2578 = vmatpush1.bf16.msra.mxu0 0
        %2579 = vmatprep.mubr.bf16.mxu0 0
        %2580 = vmatmul.mubr.bf16.gmra.mrb[0].mxu0 %v2465
        %v2581 = vpop.f32.mrb[0].mxu0
        %v2582 = vadd.f32 %v2521, %v2581
        %v2583 = vpop.f32.mrb[0].mxu0
        %v2584 = vpop.f32.mrb[0].mxu0
        %v2585 = vadd.f32 %v2521, %v2584
        %v2586 = vpop.f32.mrb[0].mxu0
        %2587 = vdwg.mxu0
        %v2588 = vld [vmem:[%s1063] sm:$0xf]
        %v2589 = vld [vmem:[%s1063 + $0x4] sm:$0xf]
        %v2590 = vld [vmem:[%s1063 + $0x8] sm:$0xf]
        %v2591 = vld [vmem:[%s1063 + $0xc] sm:$0xf]
        %v2592 = vld [vmem:[%s1063 + $0x10] sm:$0xf]
        %v2593 = vld [vmem:[%s1063 + $0x14] sm:$0xf]
        %v2594 = vld [vmem:[%s1063 + $0x18] sm:$0xf]
        %v2595 = vld [vmem:[%s1063 + $0x1c] sm:$0xf]
        %v2596 = vld [vmem:[%s1066] sm:$0x1]
        %v2598 = vlaneseq
        %v2599 = vshrl.u32 %v2598, 7
        %v2600 = vsub.s32 0, %v2599
        %v2601 = vrot.slane %v2596, %v2600
        %v2611 = vunpack.c.l.b16 %v2588
        %v2612 = vunpack.c.l.b16 %v2589
        %v2613 = vunpack.c.l.b16 %v2590
        %v2614 = vunpack.c.l.b16 %v2591
        %v2615 = vunpack.c.l.b16 %v2592
        %v2616 = vunpack.c.l.b16 %v2593
        %v2617 = vunpack.c.l.b16 %v2594
        %v2618 = vunpack.c.l.b16 %v2595
        %v2619 = vpack.c.b16 %v2612, %v2611
        %v2620 = vpack.c.b16 %v2614, %v2613
        %v2621 = vpack.c.b16 %v2616, %v2615
        %v2622 = vpack.c.b16 %v2618, %v2617
        %2627 = vmatprep.subr.bf16.mxu0 0
        %2628 = vmatpush1.bf16.msra.mxu0 %v2619
        %2629 = vmatprep.subr.bf16.mxu0 0
        %2630 = vmatpush1.bf16.msra.mxu0 %v2620
        %2631 = vmatprep.subr.bf16.mxu0 0
        %2632 = vmatpush1.bf16.msra.mxu0 %v2621
        %2633 = vmatprep.subr.bf16.mxu0 0
        %2634 = vmatpush1.bf16.msra.mxu0 %v2622
        %2635 = vmatprep.subr.bf16.mxu0 0
        %2636 = vmatpush1.bf16.msra.mxu0 0
        %2637 = vmatprep.subr.bf16.mxu0 0
        %2638 = vmatpush1.bf16.msra.mxu0 0
        %2639 = vmatprep.subr.bf16.mxu0 0
        %2640 = vmatpush1.bf16.msra.mxu0 0
        %2641 = vmatprep.subr.bf16.mxu0 0
        %2642 = vmatpush1.bf16.msra.mxu0 0
        %2643 = vmatprep.subr.bf16.mxu0 0
        %2644 = vmatpush1.bf16.msra.mxu0 0
        %2645 = vmatprep.subr.bf16.mxu0 0
        %2646 = vmatpush1.bf16.msra.mxu0 0
        %2647 = vmatprep.subr.bf16.mxu0 0
        %2648 = vmatpush1.bf16.msra.mxu0 0
        %2649 = vmatprep.subr.bf16.mxu0 0
        %2650 = vmatpush1.bf16.msra.mxu0 0
        %2651 = vmatprep.subr.bf16.mxu0 0
        %2652 = vmatpush1.bf16.msra.mxu0 0
        %2653 = vmatprep.subr.bf16.mxu0 0
        %2654 = vmatpush1.bf16.msra.mxu0 0
        %2655 = vmatprep.subr.bf16.mxu0 0
        %2656 = vmatpush1.bf16.msra.mxu0 0
        %2657 = vmatprep.subr.bf16.mxu0 0
        %2658 = vmatpush1.bf16.msra.mxu0 0
        %2659 = vmatprep.mubr.bf16.mxu0 0
        %2660 = vmatmul.mubr.bf16.gmra.mrb[0].mxu0 %v2465
        %v2661 = vpop.f32.mrb[0].mxu0
        %v2662 = vadd.f32 %v2601, %v2661
        %v2663 = vpop.f32.mrb[0].mxu0
        %v2664 = vpop.f32.mrb[0].mxu0
        %v2665 = vadd.f32 %v2601, %v2664
        %v2666 = vpop.f32.mrb[0].mxu0
        %2667 = vdwg.mxu0
        %v2668 = vld [vmem:[%s1079] sm:$0xff]
        %v2669 = vld [vmem:[%s1079 + $0x8] sm:$0x1]
        %v2670 = vpack.c.bf16 %v2669, %v2668
        %v2671 = vld [vmem:[%s1084] sm:$0xff]
        %v2672 = vld [vmem:[%s1084 + $0x8] sm:$0x1]
        %v2673 = vmul.f32 %v2502, 0.17677669
        %v2674 = vmul.f32 %v2505, 0.17677669
        %v2675 = vpack.c.bf16 %v2674, %v2673
        %v2676 = vpack.c.bf16 %v2585, %v2582
        %v2677 = vpack.c.bf16 %v2665, %v2662
        %vm2678 = vcmask 261120
        %v2680 = vsel %vm2678, %v2675, 0
        %v2683 = vsel %vm2678, %v2670, 0
        %2685 = vmatprep.subr.bf16.mxu0 0
        %2686 = vmatpush1.bf16.xpose.msra.mxu0 %v2683
        %2687 = vmatprep.subr.bf16.mxu0 0
        %2688 = vmatpush1.bf16.xpose.msra.mxu0 0
        %2689 = vmatprep.subr.bf16.mxu0 0
        %2690 = vmatpush1.bf16.xpose.msra.mxu0 0
        %2691 = vmatprep.subr.bf16.mxu0 0
        %2692 = vmatpush1.bf16.xpose.msra.mxu0 0
        %2693 = vmatprep.subr.bf16.mxu0 0
        %2694 = vmatpush1.bf16.xpose.msra.mxu0 0
        %2695 = vmatprep.subr.bf16.mxu0 0
        %2696 = vmatpush1.bf16.xpose.msra.mxu0 0
        %2697 = vmatprep.subr.bf16.mxu0 0
        %2698 = vmatpush1.bf16.xpose.msra.mxu0 0
        %2699 = vmatprep.subr.bf16.mxu0 0
        %2700 = vmatpush1.bf16.xpose.msra.mxu0 0
        %2701 = vmatprep.subr.bf16.mxu0 0
        %2702 = vmatpush1.bf16.xpose.msra.mxu0 0
        %2703 = vmatprep.subr.bf16.mxu0 0
        %2704 = vmatpush1.bf16.xpose.msra.mxu0 0
        %2705 = vmatprep.subr.bf16.mxu0 0
        %2706 = vmatpush1.bf16.xpose.msra.mxu0 0
        %2707 = vmatprep.subr.bf16.mxu0 0
        %2708 = vmatpush1.bf16.xpose.msra.mxu0 0
        %2709 = vmatprep.subr.bf16.mxu0 0
        %2710 = vmatpush1.bf16.xpose.msra.mxu0 0
        %2711 = vmatprep.subr.bf16.mxu0 0
        %2712 = vmatpush1.bf16.xpose.msra.mxu0 0
        %2713 = vmatprep.subr.bf16.mxu0 0
        %2714 = vmatpush1.bf16.xpose.msra.mxu0 0
        %2715 = vmatprep.subr.bf16.mxu0 0
        %2716 = vmatpush1.bf16.xpose.msra.mxu0 0
        %2717 = vmatprep.mubr.bf16.mxu0 0
        %2718 = vmatmul.mubr.bf16.gmra.mrb[0].mxu0 %v2680
        %v2719 = vpop.f32.mrb[0].mxu0
        %v2720 = vadd.f32 0.0, %v2719
        %v2721 = vpop.f32.mrb[0].mxu0
        %v2722 = vpop.f32.mrb[0].mxu0
        %v2723 = vadd.f32 0.0, %v2722
        %v2724 = vpop.f32.mrb[0].mxu0
        %2725 = vdwg.mxu0
        %vm2726 = vcmp.eq.s32.totalorder %v1130, 4294967292
        %vm2727 = vcmp.eq.s32.totalorder %v1131, 4294967292
        %2729 = vset.pattern.permute.xlu0 0
        %2730 = vperm.xlu0 %2729, %v2720
        %v2731 = vpop.permute.xlu0 %2730
        %2734 = vset.pattern.permute.xlu0 0
        %2735 = vperm.xlu0 %2734, %v2723
        %v2736 = vpop.permute.xlu0 %2735
        %v2738 = vsel %vm2726, %v2731, 0.0
        %v2739 = vsel %vm2727, %v2736, 0.0
        %v2741 = vsel %vm2678, %v2676, 0
        %2743 = vmatprep.subr.bf16.mxu0 0
        %2744 = vmatpush1.bf16.xpose.msra.mxu0 %v2741
        %2745 = vmatprep.subr.bf16.mxu0 0
        %2746 = vmatpush1.bf16.xpose.msra.mxu0 0
        %2747 = vmatprep.subr.bf16.mxu0 0
        %2748 = vmatpush1.bf16.xpose.msra.mxu0 0
        %2749 = vmatprep.subr.bf16.mxu0 0
        %2750 = vmatpush1.bf16.xpose.msra.mxu0 0
        %2751 = vmatprep.subr.bf16.mxu0 0
        %2752 = vmatpush1.bf16.xpose.msra.mxu0 0
        %2753 = vmatprep.subr.bf16.mxu0 0
        %2754 = vmatpush1.bf16.xpose.msra.mxu0 0
        %2755 = vmatprep.subr.bf16.mxu0 0
        %2756 = vmatpush1.bf16.xpose.msra.mxu0 0
        %2757 = vmatprep.subr.bf16.mxu0 0
        %2758 = vmatpush1.bf16.xpose.msra.mxu0 0
        %2759 = vmatprep.subr.bf16.mxu0 0
        %2760 = vmatpush1.bf16.xpose.msra.mxu0 0
        %2761 = vmatprep.subr.bf16.mxu0 0
        %2762 = vmatpush1.bf16.xpose.msra.mxu0 0
        %2763 = vmatprep.subr.bf16.mxu0 0
        %2764 = vmatpush1.bf16.xpose.msra.mxu0 0
        %2765 = vmatprep.subr.bf16.mxu0 0
        %2766 = vmatpush1.bf16.xpose.msra.mxu0 0
        %2767 = vmatprep.subr.bf16.mxu0 0
        %2768 = vmatpush1.bf16.xpose.msra.mxu0 0
        %2769 = vmatprep.subr.bf16.mxu0 0
        %2770 = vmatpush1.bf16.xpose.msra.mxu0 0
        %2771 = vmatprep.subr.bf16.mxu0 0
        %2772 = vmatpush1.bf16.xpose.msra.mxu0 0
        %2773 = vmatprep.subr.bf16.mxu0 0
        %2774 = vmatpush1.bf16.xpose.msra.mxu0 0
        %2775 = vmatprep.mubr.bf16.mxu0 0
        %2776 = vmatmul.mubr.bf16.gmra.mrb[0].mxu0 %v2680
        %v2777 = vpop.f32.mrb[0].mxu0
        %v2778 = vadd.f32 %v2738, %v2777
        %v2779 = vpop.f32.mrb[0].mxu0
        %v2780 = vpop.f32.mrb[0].mxu0
        %v2781 = vadd.f32 %v2739, %v2780
        %v2782 = vpop.f32.mrb[0].mxu0
        %2783 = vdwg.mxu0
        %vm2784 = vcmp.eq.s32.totalorder %v1130, 4294967293
        %vm2785 = vcmp.eq.s32.totalorder %v1131, 4294967293
        %2786 = vset.pattern.permute.xlu0 1
        %2787 = vperm.xlu0 %2786, %v2720
        %v2788 = vpop.permute.xlu0 %2787
        %2790 = vset.pattern.permute.xlu0 1
        %2791 = vperm.xlu0 %2790, %v2723
        %v2792 = vpop.permute.xlu0 %2791
        %v2794 = vsel %vm2784, %v2788, 0.0
        %v2795 = vsel %vm2785, %v2792, 0.0
        %v2796 = vadd.f32 %v2778, %v2794
        %v2797 = vadd.f32 %v2781, %v2795
        %vm2798 = vcmp.eq.s32.totalorder %v1130, 4294967294
        %vm2799 = vcmp.eq.s32.totalorder %v1131, 4294967294
        %2800 = vset.pattern.permute.xlu0 2
        %2801 = vperm.xlu0 %2800, %v2720
        %v2802 = vpop.permute.xlu0 %2801
        %2804 = vset.pattern.permute.xlu0 2
        %2805 = vperm.xlu0 %2804, %v2723
        %v2806 = vpop.permute.xlu0 %2805
        %v2808 = vsel %vm2798, %v2802, 0.0
        %v2809 = vsel %vm2799, %v2806, 0.0
        %v2810 = vadd.f32 %v2796, %v2808
        %v2811 = vadd.f32 %v2797, %v2809
        %vm2812 = vcmp.eq.s32.totalorder %v1130, 4294967295
        %vm2813 = vcmp.eq.s32.totalorder %v1131, 4294967295
        %2814 = vset.pattern.permute.xlu0 3
        %2815 = vperm.xlu0 %2814, %v2720
        %v2816 = vpop.permute.xlu0 %2815
        %2818 = vset.pattern.permute.xlu0 3
        %2819 = vperm.xlu0 %2818, %v2723
        %v2820 = vpop.permute.xlu0 %2819
        %v2822 = vsel %vm2812, %v2816, 0.0
        %v2823 = vsel %vm2813, %v2820, 0.0
        %v2824 = vadd.f32 %v2810, %v2822
        %v2825 = vadd.f32 %v2811, %v2823
        %vm2826 = vcmp.eq.s32.totalorder %v1130, 0
        %vm2827 = vcmp.eq.s32.totalorder %v1131, 0
        %2828 = vset.pattern.permute.xlu0 4
        %2829 = vperm.xlu0 %2828, %v2720
        %v2830 = vpop.permute.xlu0 %2829
        %2832 = vset.pattern.permute.xlu0 4
        %2833 = vperm.xlu0 %2832, %v2723
        %v2834 = vpop.permute.xlu0 %2833
        %v2836 = vsel %vm2826, %v2830, 0.0
        %v2837 = vsel %vm2827, %v2834, 0.0
        %v2838 = vadd.f32 %v2824, %v2836
        %v2839 = vadd.f32 %v2825, %v2837
        %vm2840 = vcmp.eq.s32.totalorder %v1130, 1
        %vm2841 = vcmp.eq.s32.totalorder %v1131, 1
        %2842 = vset.pattern.permute.xlu0 5
        %2843 = vperm.xlu0 %2842, %v2720
        %v2844 = vpop.permute.xlu0 %2843
        %2846 = vset.pattern.permute.xlu0 5
        %2847 = vperm.xlu0 %2846, %v2723
        %v2848 = vpop.permute.xlu0 %2847
        %v2850 = vsel %vm2840, %v2844, 0.0
        %v2851 = vsel %vm2841, %v2848, 0.0
        %v2852 = vadd.f32 %v2838, %v2850
        %v2853 = vadd.f32 %v2839, %v2851
        %vm2854 = vcmp.eq.s32.totalorder %v1130, 2
        %vm2855 = vcmp.eq.s32.totalorder %v1131, 2
        %2856 = vset.pattern.permute.xlu0 6
        %2857 = vperm.xlu0 %2856, %v2720
        %v2858 = vpop.permute.xlu0 %2857
        %2860 = vset.pattern.permute.xlu0 6
        %2861 = vperm.xlu0 %2860, %v2723
        %v2862 = vpop.permute.xlu0 %2861
        %v2864 = vsel %vm2854, %v2858, 0.0
        %v2865 = vsel %vm2855, %v2862, 0.0
        %v2866 = vadd.f32 %v2852, %v2864
        %v2867 = vadd.f32 %v2853, %v2865
        %vm2868 = vcmp.eq.s32.totalorder %v1130, 3
        %vm2869 = vcmp.eq.s32.totalorder %v1131, 3
        %2870 = vset.pattern.permute.xlu0 7
        %2871 = vperm.xlu0 %2870, %v2720
        %v2872 = vpop.permute.xlu0 %2871
        %2874 = vset.pattern.permute.xlu0 7
        %2875 = vperm.xlu0 %2874, %v2723
        %v2876 = vpop.permute.xlu0 %2875
        %v2878 = vsel %vm2868, %v2872, 0.0
        %v2879 = vsel %vm2869, %v2876, 0.0
        %v2880 = vadd.f32 %v2866, %v2878
        %v2881 = vadd.f32 %v2867, %v2879
        %vm2882 = vcmp.eq.s32.totalorder %v1130, 4
        %vm2883 = vcmp.eq.s32.totalorder %v1131, 4
        %2884 = vset.pattern.permute.xlu0 8
        %2885 = vperm.xlu0 %2884, %v2720
        %v2886 = vpop.permute.xlu0 %2885
        %2888 = vset.pattern.permute.xlu0 8
        %2889 = vperm.xlu0 %2888, %v2723
        %v2890 = vpop.permute.xlu0 %2889
        %v2892 = vsel %vm2882, %v2886, 0.0
        %v2893 = vsel %vm2883, %v2890, 0.0
        %v2894 = vadd.f32 %v2880, %v2892
        %v2895 = vadd.f32 %v2881, %v2893
        %v2896 = vsel %vm1128, %v2894, -10000.0
        %v2897 = vsel %vm1129, %v2895, -10000.0
        %vm2898 = vcmask 130048
        %v2899 = vsel %vm2898, %v2896, -inf
        %2900 = vmax.xlane.f32.xlu0 %v2899
        %v2901 = vpop.xlane.xlu0 %2900
        %v2902 = vsel %vm2898, %v2897, -inf
        %2903 = vmax.xlane.f32.xlu0 %v2902
        %v2904 = vpop.xlane.xlu0 %2903
        %v2905 = vsub.f32 %v2896, %v2901
        %v2906 = vsub.f32 %v2897, %v2904
        %v2907 = vmul.f32 %v2905, 1.442695
        %v2908 = vpow.pop %v2907
        %v2909 = vmul.f32 %v2906, 1.442695
        %v2910 = vpow.pop %v2909
        %v2911 = vsel %vm2898, %v2908, 0.0
        %2912 = vadd.xlane.f32.xlu0 %v2911
        %v2913 = vpop.xlane.xlu0 %2912
        %v2914 = vsel %vm2898, %v2910, 0.0
        %2915 = vadd.xlane.f32.xlu0 %v2914
        %v2916 = vpop.xlane.xlu0 %2915
        %v2917 = vrcp.pop %v2913
        %v2918 = vrcp.pop %v2916
        %v2919 = vmul.f32 %v2908, %v2917
        %v2920 = vmul.f32 %v2910, %v2918
        %v2921 = vpack.c.bf16 %v2920, %v2919
        %v2922 = vsel %vm2726, %v2919, 0.0
        %v2923 = vsel %vm2727, %v2920, 0.0
        %v2924 = vsel %vm2898, %v2922, 0.0
        %2925 = vadd.xlane.f32.xlu0 %v2924
        %v2926 = vpop.xlane.xlu0 %2925
        %v2927 = vsel %vm2898, %v2923, 0.0
        %2928 = vadd.xlane.f32.xlu0 %v2927
        %v2929 = vpop.xlane.xlu0 %2928
        %v2930 = vlaneseq
        %v2931 = vshrl.u32 %v2930, 7
        %v2932 = vsub.s32 0, %v2931
        %v2933 = vrot.slane %v2671, %v2932
        %v2934 = vmul.f32 %v2926, %v2933
        %v2935 = vmul.f32 %v2929, %v2933
        %v2937 = vsel %vm2898, %v2921, 0
        %2939 = vmatprep.subr.bf16.mxu0 0
        %2940 = vmatpush1.bf16.msra.mxu0 %v2677
        %2941 = vmatprep.subr.bf16.mxu0 0
        %2942 = vmatpush1.bf16.msra.mxu0 0
        %2943 = vmatprep.subr.bf16.mxu0 0
        %2944 = vmatpush1.bf16.msra.mxu0 0
        %2945 = vmatprep.subr.bf16.mxu0 0
        %2946 = vmatpush1.bf16.msra.mxu0 0
        %2947 = vmatprep.subr.bf16.mxu0 0
        %2948 = vmatpush1.bf16.msra.mxu0 0
        %2949 = vmatprep.subr.bf16.mxu0 0
        %2950 = vmatpush1.bf16.msra.mxu0 0
        %2951 = vmatprep.subr.bf16.mxu0 0
        %2952 = vmatpush1.bf16.msra.mxu0 0
        %2953 = vmatprep.subr.bf16.mxu0 0
        %2954 = vmatpush1.bf16.msra.mxu0 0
        %2955 = vmatprep.subr.bf16.mxu0 0
        %2956 = vmatpush1.bf16.msra.mxu0 0
        %2957 = vmatprep.subr.bf16.mxu0 0
        %2958 = vmatpush1.bf16.msra.mxu0 0
        %2959 = vmatprep.subr.bf16.mxu0 0
        %2960 = vmatpush1.bf16.msra.mxu0 0
        %2961 = vmatprep.subr.bf16.mxu0 0
        %2962 = vmatpush1.bf16.msra.mxu0 0
        %2963 = vmatprep.subr.bf16.mxu0 0
        %2964 = vmatpush1.bf16.msra.mxu0 0
        %2965 = vmatprep.subr.bf16.mxu0 0
        %2966 = vmatpush1.bf16.msra.mxu0 0
        %2967 = vmatprep.subr.bf16.mxu0 0
        %2968 = vmatpush1.bf16.msra.mxu0 0
        %2969 = vmatprep.subr.bf16.mxu0 0
        %2970 = vmatpush1.bf16.msra.mxu0 0
        %2971 = vmatprep.mubr.bf16.mxu0 0
        %2972 = vmatmul.mubr.bf16.gmra.mrb[0].mxu0 %v2937
        %v2973 = vpop.f32.mrb[0].mxu0
        %v2974 = vadd.f32 %v2934, %v2973
        %v2975 = vpop.f32.mrb[0].mxu0
        %v2976 = vpop.f32.mrb[0].mxu0
        %v2977 = vadd.f32 %v2935, %v2976
        %v2978 = vpop.f32.mrb[0].mxu0
        %2979 = vdwg.mxu0
        %v2980 = vsel %vm2784, %v2919, 0.0
        %v2981 = vsel %vm2785, %v2920, 0.0
        %v2982 = vsel %vm2898, %v2980, 0.0
        %2983 = vadd.xlane.f32.xlu0 %v2982
        %v2984 = vpop.xlane.xlu0 %2983
        %v2985 = vsel %vm2898, %v2981, 0.0
        %2986 = vadd.xlane.f32.xlu0 %v2985
        %v2987 = vpop.xlane.xlu0 %2986
        %v2988 = vlaneseq
        %v2989 = vshrl.u32 %v2988, 7
        %v2990 = vsub.s32 1, %v2989
        %v2991 = vrot.slane %v2671, %v2990
        %v2992 = vmul.f32 %v2984, %v2991
        %v2993 = vmul.f32 %v2987, %v2991
        %v2994 = vadd.f32 %v2974, %v2992
        %v2995 = vadd.f32 %v2977, %v2993
        %v2996 = vsel %vm2798, %v2919, 0.0
        %v2997 = vsel %vm2799, %v2920, 0.0
        %v2998 = vsel %vm2898, %v2996, 0.0
        %2999 = vadd.xlane.f32.xlu0 %v2998
        %v3000 = vpop.xlane.xlu0 %2999
        %v3001 = vsel %vm2898, %v2997, 0.0
        %3002 = vadd.xlane.f32.xlu0 %v3001
        %v3003 = vpop.xlane.xlu0 %3002
        %v3004 = vlaneseq
        %v3005 = vshrl.u32 %v3004, 7
        %v3006 = vsub.s32 2, %v3005
        %v3007 = vrot.slane %v2671, %v3006
        %v3008 = vmul.f32 %v3000, %v3007
        %v3009 = vmul.f32 %v3003, %v3007
        %v3010 = vadd.f32 %v2994, %v3008
        %v3011 = vadd.f32 %v2995, %v3009
        %v3012 = vsel %vm2812, %v2919, 0.0
        %v3013 = vsel %vm2813, %v2920, 0.0
        %v3014 = vsel %vm2898, %v3012, 0.0
        %3015 = vadd.xlane.f32.xlu0 %v3014
        %v3016 = vpop.xlane.xlu0 %3015
        %v3017 = vsel %vm2898, %v3013, 0.0
        %3018 = vadd.xlane.f32.xlu0 %v3017
        %v3019 = vpop.xlane.xlu0 %3018
        %v3020 = vlaneseq
        %v3021 = vshrl.u32 %v3020, 7
        %v3022 = vsub.s32 3, %v3021
        %v3023 = vrot.slane %v2671, %v3022
        %v3024 = vmul.f32 %v3016, %v3023
        %v3025 = vmul.f32 %v3019, %v3023
        %v3026 = vadd.f32 %v3010, %v3024
        %v3027 = vadd.f32 %v3011, %v3025
        %v3028 = vsel %vm2826, %v2919, 0.0
        %v3029 = vsel %vm2827, %v2920, 0.0
        %v3030 = vsel %vm2898, %v3028, 0.0
        %3031 = vadd.xlane.f32.xlu0 %v3030
        %v3032 = vpop.xlane.xlu0 %3031
        %v3033 = vsel %vm2898, %v3029, 0.0
        %3034 = vadd.xlane.f32.xlu0 %v3033
        %v3035 = vpop.xlane.xlu0 %3034
        %v3036 = vlaneseq
        %v3037 = vshrl.u32 %v3036, 7
        %v3038 = vsub.s32 4, %v3037
        %v3039 = vrot.slane %v2671, %v3038
        %v3040 = vmul.f32 %v3032, %v3039
        %v3041 = vmul.f32 %v3035, %v3039
        %v3042 = vadd.f32 %v3026, %v3040
        %v3043 = vadd.f32 %v3027, %v3041
        %v3044 = vsel %vm2840, %v2919, 0.0
        %v3045 = vsel %vm2841, %v2920, 0.0
        %v3046 = vsel %vm2898, %v3044, 0.0
        %3047 = vadd.xlane.f32.xlu0 %v3046
        %v3048 = vpop.xlane.xlu0 %3047
        %v3049 = vsel %vm2898, %v3045, 0.0
        %3050 = vadd.xlane.f32.xlu0 %v3049
        %v3051 = vpop.xlane.xlu0 %3050
        %v3052 = vlaneseq
        %v3053 = vshrl.u32 %v3052, 7
        %v3054 = vsub.s32 5, %v3053
        %v3055 = vrot.slane %v2671, %v3054
        %v3056 = vmul.f32 %v3048, %v3055
        %v3057 = vmul.f32 %v3051, %v3055
        %v3058 = vadd.f32 %v3042, %v3056
        %v3059 = vadd.f32 %v3043, %v3057
        %v3060 = vsel %vm2854, %v2919, 0.0
        %v3061 = vsel %vm2855, %v2920, 0.0
        %v3062 = vsel %vm2898, %v3060, 0.0
        %3063 = vadd.xlane.f32.xlu0 %v3062
        %v3064 = vpop.xlane.xlu0 %3063
        %v3065 = vsel %vm2898, %v3061, 0.0
        %3066 = vadd.xlane.f32.xlu0 %v3065
        %v3067 = vpop.xlane.xlu0 %3066
        %v3068 = vlaneseq
        %v3069 = vshrl.u32 %v3068, 7
        %v3070 = vsub.s32 6, %v3069
        %v3071 = vrot.slane %v2671, %v3070
        %v3072 = vmul.f32 %v3064, %v3071
        %v3073 = vmul.f32 %v3067, %v3071
        %v3074 = vadd.f32 %v3058, %v3072
        %v3075 = vadd.f32 %v3059, %v3073
        %v3076 = vsel %vm2868, %v2919, 0.0
        %v3077 = vsel %vm2869, %v2920, 0.0
        %v3078 = vsel %vm2898, %v3076, 0.0
        %3079 = vadd.xlane.f32.xlu0 %v3078
        %v3080 = vpop.xlane.xlu0 %3079
        %v3081 = vsel %vm2898, %v3077, 0.0
        %3082 = vadd.xlane.f32.xlu0 %v3081
        %v3083 = vpop.xlane.xlu0 %3082
        %v3084 = vlaneseq
        %v3085 = vshrl.u32 %v3084, 7
        %v3086 = vsub.s32 7, %v3085
        %v3087 = vrot.slane %v2671, %v3086
        %v3088 = vmul.f32 %v3080, %v3087
        %v3089 = vmul.f32 %v3083, %v3087
        %v3090 = vadd.f32 %v3074, %v3088
        %v3091 = vadd.f32 %v3075, %v3089
        %v3092 = vsel %vm2882, %v2919, 0.0
        %v3093 = vsel %vm2883, %v2920, 0.0
        %v3094 = vsel %vm2898, %v3092, 0.0
        %3095 = vadd.xlane.f32.xlu0 %v3094
        %v3096 = vpop.xlane.xlu0 %3095
        %v3097 = vsel %vm2898, %v3093, 0.0
        %3098 = vadd.xlane.f32.xlu0 %v3097
        %v3099 = vpop.xlane.xlu0 %3098
        %v3100 = vlaneseq
        %v3101 = vshrl.u32 %v3100, 7
        %v3102 = vsub.s32 0, %v3101
        %v3103 = vrot.slane %v2672, %v3102
        %v3104 = vmul.f32 %v3096, %v3103
        %v3105 = vmul.f32 %v3099, %v3103
        %v3106 = vadd.f32 %v3090, %v3104
        %v3107 = vadd.f32 %v3091, %v3105
        %3108 = vst.msk [vmem:[#allocation3] sm:$0xff] %vm2678, %v3106
        %3109 = vst.msk [vmem:[#allocation3 + $0x8] sm:$0xff] %vm2678, %v3107
        %3111 = vrot.lane.b32.xlu0 %v2675, 96
        %v3112 = vpop.permute.xlu0 %3111
        %v3114 = vsel %vm2678, %v3112, 0
        %3116 = vmatprep.subr.bf16.mxu0 0
        %3117 = vmatpush1.bf16.xpose.msra.mxu0 %v2683
        %3118 = vmatprep.subr.bf16.mxu0 0
        %3119 = vmatpush1.bf16.xpose.msra.mxu0 0
        %3120 = vmatprep.subr.bf16.mxu0 0
        %3121 = vmatpush1.bf16.xpose.msra.mxu0 0
        %3122 = vmatprep.subr.bf16.mxu0 0
        %3123 = vmatpush1.bf16.xpose.msra.mxu0 0
        %3124 = vmatprep.subr.bf16.mxu0 0
        %3125 = vmatpush1.bf16.xpose.msra.mxu0 0
        %3126 = vmatprep.subr.bf16.mxu0 0
        %3127 = vmatpush1.bf16.xpose.msra.mxu0 0
        %3128 = vmatprep.subr.bf16.mxu0 0
        %3129 = vmatpush1.bf16.xpose.msra.mxu0 0
        %3130 = vmatprep.subr.bf16.mxu0 0
        %3131 = vmatpush1.bf16.xpose.msra.mxu0 0
        %3132 = vmatprep.subr.bf16.mxu0 0
        %3133 = vmatpush1.bf16.xpose.msra.mxu0 0
        %3134 = vmatprep.subr.bf16.mxu0 0
        %3135 = vmatpush1.bf16.xpose.msra.mxu0 0
        %3136 = vmatprep.subr.bf16.mxu0 0
        %3137 = vmatpush1.bf16.xpose.msra.mxu0 0
        %3138 = vmatprep.subr.bf16.mxu0 0
        %3139 = vmatpush1.bf16.xpose.msra.mxu0 0
        %3140 = vmatprep.subr.bf16.mxu0 0
        %3141 = vmatpush1.bf16.xpose.msra.mxu0 0
        %3142 = vmatprep.subr.bf16.mxu0 0
        %3143 = vmatpush1.bf16.xpose.msra.mxu0 0
        %3144 = vmatprep.subr.bf16.mxu0 0
        %3145 = vmatpush1.bf16.xpose.msra.mxu0 0
        %3146 = vmatprep.subr.bf16.mxu0 0
        %3147 = vmatpush1.bf16.xpose.msra.mxu0 0
        %3148 = vmatprep.mubr.bf16.mxu0 0
        %3149 = vmatmul.mubr.bf16.gmra.mrb[0].mxu0 %v3114
        %v3150 = vpop.f32.mrb[0].mxu0
        %v3151 = vadd.f32 0.0, %v3150
        %v3152 = vpop.f32.mrb[0].mxu0
        %v3153 = vpop.f32.mrb[0].mxu0
        %v3154 = vadd.f32 0.0, %v3153
        %v3155 = vpop.f32.mrb[0].mxu0
        %3156 = vdwg.mxu0
        %3158 = vset.pattern.permute.xlu0 0
        %3159 = vperm.xlu0 %3158, %v3151
        %v3160 = vpop.permute.xlu0 %3159
        %3163 = vset.pattern.permute.xlu0 0
        %3164 = vperm.xlu0 %3163, %v3154
        %v3165 = vpop.permute.xlu0 %3164
        %v3167 = vsel %vm2726, %v3160, 0.0
        %v3168 = vsel %vm2727, %v3165, 0.0
        %3170 = vrot.lane.b32.xlu0 %v2676, 96
        %v3171 = vpop.permute.xlu0 %3170
        %v3173 = vsel %vm2678, %v3171, 0
        %3175 = vmatprep.subr.bf16.mxu0 0
        %3176 = vmatpush1.bf16.xpose.msra.mxu0 %v3173
        %3177 = vmatprep.subr.bf16.mxu0 0
        %3178 = vmatpush1.bf16.xpose.msra.mxu0 0
        %3179 = vmatprep.subr.bf16.mxu0 0
        %3180 = vmatpush1.bf16.xpose.msra.mxu0 0
        %3181 = vmatprep.subr.bf16.mxu0 0
        %3182 = vmatpush1.bf16.xpose.msra.mxu0 0
        %3183 = vmatprep.subr.bf16.mxu0 0
        %3184 = vmatpush1.bf16.xpose.msra.mxu0 0
        %3185 = vmatprep.subr.bf16.mxu0 0
        %3186 = vmatpush1.bf16.xpose.msra.mxu0 0
        %3187 = vmatprep.subr.bf16.mxu0 0
        %3188 = vmatpush1.bf16.xpose.msra.mxu0 0
        %3189 = vmatprep.subr.bf16.mxu0 0
        %3190 = vmatpush1.bf16.xpose.msra.mxu0 0
        %3191 = vmatprep.subr.bf16.mxu0 0
        %3192 = vmatpush1.bf16.xpose.msra.mxu0 0
        %3193 = vmatprep.subr.bf16.mxu0 0
        %3194 = vmatpush1.bf16.xpose.msra.mxu0 0
        %3195 = vmatprep.subr.bf16.mxu0 0
        %3196 = vmatpush1.bf16.xpose.msra.mxu0 0
        %3197 = vmatprep.subr.bf16.mxu0 0
        %3198 = vmatpush1.bf16.xpose.msra.mxu0 0
        %3199 = vmatprep.subr.bf16.mxu0 0
        %3200 = vmatpush1.bf16.xpose.msra.mxu0 0
        %3201 = vmatprep.subr.bf16.mxu0 0
        %3202 = vmatpush1.bf16.xpose.msra.mxu0 0
        %3203 = vmatprep.subr.bf16.mxu0 0
        %3204 = vmatpush1.bf16.xpose.msra.mxu0 0
        %3205 = vmatprep.subr.bf16.mxu0 0
        %3206 = vmatpush1.bf16.xpose.msra.mxu0 0
        %3207 = vmatprep.mubr.bf16.mxu0 0
        %3208 = vmatmul.mubr.bf16.gmra.mrb[0].mxu0 %v3114
        %v3209 = vpop.f32.mrb[0].mxu0
        %v3210 = vadd.f32 %v3167, %v3209
        %v3211 = vpop.f32.mrb[0].mxu0
        %v3212 = vpop.f32.mrb[0].mxu0
        %v3213 = vadd.f32 %v3168, %v3212
        %v3214 = vpop.f32.mrb[0].mxu0
        %3215 = vdwg.mxu0
        %3216 = vset.pattern.permute.xlu0 1
        %3217 = vperm.xlu0 %3216, %v3151
        %v3218 = vpop.permute.xlu0 %3217
        %3220 = vset.pattern.permute.xlu0 1
        %3221 = vperm.xlu0 %3220, %v3154
        %v3222 = vpop.permute.xlu0 %3221
        %v3224 = vsel %vm2784, %v3218, 0.0
        %v3225 = vsel %vm2785, %v3222, 0.0
        %v3226 = vadd.f32 %v3210, %v3224
        %v3227 = vadd.f32 %v3213, %v3225
        %3228 = vset.pattern.permute.xlu0 2
        %3229 = vperm.xlu0 %3228, %v3151
        %v3230 = vpop.permute.xlu0 %3229
        %3232 = vset.pattern.permute.xlu0 2
        %3233 = vperm.xlu0 %3232, %v3154
        %v3234 = vpop.permute.xlu0 %3233
        %v3236 = vsel %vm2798, %v3230, 0.0
        %v3237 = vsel %vm2799, %v3234, 0.0
        %v3238 = vadd.f32 %v3226, %v3236
        %v3239 = vadd.f32 %v3227, %v3237
        %3240 = vset.pattern.permute.xlu0 3
        %3241 = vperm.xlu0 %3240, %v3151
        %v3242 = vpop.permute.xlu0 %3241
        %3244 = vset.pattern.permute.xlu0 3
        %3245 = vperm.xlu0 %3244, %v3154
        %v3246 = vpop.permute.xlu0 %3245
        %v3248 = vsel %vm2812, %v3242, 0.0
        %v3249 = vsel %vm2813, %v3246, 0.0
        %v3250 = vadd.f32 %v3238, %v3248
        %v3251 = vadd.f32 %v3239, %v3249
        %3252 = vset.pattern.permute.xlu0 4
        %3253 = vperm.xlu0 %3252, %v3151
        %v3254 = vpop.permute.xlu0 %3253
        %3256 = vset.pattern.permute.xlu0 4
        %3257 = vperm.xlu0 %3256, %v3154
        %v3258 = vpop.permute.xlu0 %3257
        %v3260 = vsel %vm2826, %v3254, 0.0
        %v3261 = vsel %vm2827, %v3258, 0.0
        %v3262 = vadd.f32 %v3250, %v3260
        %v3263 = vadd.f32 %v3251, %v3261
        %3264 = vset.pattern.permute.xlu0 5
        %3265 = vperm.xlu0 %3264, %v3151
        %v3266 = vpop.permute.xlu0 %3265
        %3268 = vset.pattern.permute.xlu0 5
        %3269 = vperm.xlu0 %3268, %v3154
        %v3270 = vpop.permute.xlu0 %3269
        %v3272 = vsel %vm2840, %v3266, 0.0
        %v3273 = vsel %vm2841, %v3270, 0.0
        %v3274 = vadd.f32 %v3262, %v3272
        %v3275 = vadd.f32 %v3263, %v3273
        %3276 = vset.pattern.permute.xlu0 6
        %3277 = vperm.xlu0 %3276, %v3151
        %v3278 = vpop.permute.xlu0 %3277
        %3280 = vset.pattern.permute.xlu0 6
        %3281 = vperm.xlu0 %3280, %v3154
        %v3282 = vpop.permute.xlu0 %3281
        %v3284 = vsel %vm2854, %v3278, 0.0
        %v3285 = vsel %vm2855, %v3282, 0.0
        %v3286 = vadd.f32 %v3274, %v3284
        %v3287 = vadd.f32 %v3275, %v3285
        %3288 = vset.pattern.permute.xlu0 7
        %3289 = vperm.xlu0 %3288, %v3151
        %v3290 = vpop.permute.xlu0 %3289
        %3292 = vset.pattern.permute.xlu0 7
        %3293 = vperm.xlu0 %3292, %v3154
        %v3294 = vpop.permute.xlu0 %3293
        %v3296 = vsel %vm2868, %v3290, 0.0
        %v3297 = vsel %vm2869, %v3294, 0.0
        %v3298 = vadd.f32 %v3286, %v3296
        %v3299 = vadd.f32 %v3287, %v3297
        %3300 = vset.pattern.permute.xlu0 8
        %3301 = vperm.xlu0 %3300, %v3151
        %v3302 = vpop.permute.xlu0 %3301
        %3304 = vset.pattern.permute.xlu0 8
        %3305 = vperm.xlu0 %3304, %v3154
        %v3306 = vpop.permute.xlu0 %3305
        %v3308 = vsel %vm2882, %v3302, 0.0
        %v3309 = vsel %vm2883, %v3306, 0.0
        %v3310 = vadd.f32 %v3298, %v3308
        %v3311 = vadd.f32 %v3299, %v3309
        %v3312 = vsel %vm1128, %v3310, -10000.0
        %v3313 = vsel %vm1129, %v3311, -10000.0
        %v3314 = vsel %vm2898, %v3312, -inf
        %3315 = vmax.xlane.f32.xlu0 %v3314
        %v3316 = vpop.xlane.xlu0 %3315
        %v3317 = vsel %vm2898, %v3313, -inf
        %3318 = vmax.xlane.f32.xlu0 %v3317
        %v3319 = vpop.xlane.xlu0 %3318
        %v3320 = vsub.f32 %v3312, %v3316
        %v3321 = vsub.f32 %v3313, %v3319
        %v3322 = vmul.f32 %v3320, 1.442695
        %v3323 = vpow.pop %v3322
        %v3324 = vmul.f32 %v3321, 1.442695
        %v3325 = vpow.pop %v3324
        %v3326 = vsel %vm2898, %v3323, 0.0
        %3327 = vadd.xlane.f32.xlu0 %v3326
        %v3328 = vpop.xlane.xlu0 %3327
        %v3329 = vsel %vm2898, %v3325, 0.0
        %3330 = vadd.xlane.f32.xlu0 %v3329
        %v3331 = vpop.xlane.xlu0 %3330
        %v3332 = vrcp.pop %v3328
        %v3333 = vrcp.pop %v3331
        %v3334 = vmul.f32 %v3323, %v3332
        %v3335 = vmul.f32 %v3325, %v3333
        %v3336 = vpack.c.bf16 %v3335, %v3334
        %v3337 = vsel %vm2726, %v3334, 0.0
        %v3338 = vsel %vm2727, %v3335, 0.0
        %v3339 = vsel %vm2898, %v3337, 0.0
        %3340 = vadd.xlane.f32.xlu0 %v3339
        %v3341 = vpop.xlane.xlu0 %3340
        %v3342 = vsel %vm2898, %v3338, 0.0
        %3343 = vadd.xlane.f32.xlu0 %v3342
        %v3344 = vpop.xlane.xlu0 %3343
        %v3345 = vmul.f32 %v3341, %v2933
        %v3346 = vmul.f32 %v3344, %v2933
        %3348 = vrot.lane.b32.xlu0 %v2677, 96
        %v3349 = vpop.permute.xlu0 %3348
        %v3352 = vsel %vm2898, %v3336, 0
        %3354 = vmatprep.subr.bf16.mxu0 0
        %3355 = vmatpush1.bf16.msra.mxu0 %v3349
        %3356 = vmatprep.subr.bf16.mxu0 0
        %3357 = vmatpush1.bf16.msra.mxu0 0
        %3358 = vmatprep.subr.bf16.mxu0 0
        %3359 = vmatpush1.bf16.msra.mxu0 0
        %3360 = vmatprep.subr.bf16.mxu0 0
        %3361 = vmatpush1.bf16.msra.mxu0 0
        %3362 = vmatprep.subr.bf16.mxu0 0
        %3363 = vmatpush1.bf16.msra.mxu0 0
        %3364 = vmatprep.subr.bf16.mxu0 0
        %3365 = vmatpush1.bf16.msra.mxu0 0
        %3366 = vmatprep.subr.bf16.mxu0 0
        %3367 = vmatpush1.bf16.msra.mxu0 0
        %3368 = vmatprep.subr.bf16.mxu0 0
        %3369 = vmatpush1.bf16.msra.mxu0 0
        %3370 = vmatprep.subr.bf16.mxu0 0
        %3371 = vmatpush1.bf16.msra.mxu0 0
        %3372 = vmatprep.subr.bf16.mxu0 0
        %3373 = vmatpush1.bf16.msra.mxu0 0
        %3374 = vmatprep.subr.bf16.mxu0 0
        %3375 = vmatpush1.bf16.msra.mxu0 0
        %3376 = vmatprep.subr.bf16.mxu0 0
        %3377 = vmatpush1.bf16.msra.mxu0 0
        %3378 = vmatprep.subr.bf16.mxu0 0
        %3379 = vmatpush1.bf16.msra.mxu0 0
        %3380 = vmatprep.subr.bf16.mxu0 0
        %3381 = vmatpush1.bf16.msra.mxu0 0
        %3382 = vmatprep.subr.bf16.mxu0 0
        %3383 = vmatpush1.bf16.msra.mxu0 0
        %3384 = vmatprep.subr.bf16.mxu0 0
        %3385 = vmatpush1.bf16.msra.mxu0 0
        %3386 = vmatprep.mubr.bf16.mxu0 0
        %3387 = vmatmul.mubr.bf16.gmra.mrb[0].mxu0 %v3352
        %v3388 = vpop.f32.mrb[0].mxu0
        %v3389 = vadd.f32 %v3345, %v3388
        %v3390 = vpop.f32.mrb[0].mxu0
        %v3391 = vpop.f32.mrb[0].mxu0
        %v3392 = vadd.f32 %v3346, %v3391
        %v3393 = vpop.f32.mrb[0].mxu0
        %3394 = vdwg.mxu0
        %v3395 = vsel %vm2784, %v3334, 0.0
        %v3396 = vsel %vm2785, %v3335, 0.0
        %v3397 = vsel %vm2898, %v3395, 0.0
        %3398 = vadd.xlane.f32.xlu0 %v3397
        %v3399 = vpop.xlane.xlu0 %3398
        %v3400 = vsel %vm2898, %v3396, 0.0
        %3401 = vadd.xlane.f32.xlu0 %v3400
        %v3402 = vpop.xlane.xlu0 %3401
        %v3403 = vmul.f32 %v3399, %v2991
        %v3404 = vmul.f32 %v3402, %v2991
        %v3405 = vadd.f32 %v3389, %v3403
        %v3406 = vadd.f32 %v3392, %v3404
        %v3407 = vsel %vm2798, %v3334, 0.0
        %v3408 = vsel %vm2799, %v3335, 0.0
        %v3409 = vsel %vm2898, %v3407, 0.0
        %3410 = vadd.xlane.f32.xlu0 %v3409
        %v3411 = vpop.xlane.xlu0 %3410
        %v3412 = vsel %vm2898, %v3408, 0.0
        %3413 = vadd.xlane.f32.xlu0 %v3412
        %v3414 = vpop.xlane.xlu0 %3413
        %v3415 = vmul.f32 %v3411, %v3007
        %v3416 = vmul.f32 %v3414, %v3007
        %v3417 = vadd.f32 %v3405, %v3415
        %v3418 = vadd.f32 %v3406, %v3416
        %v3419 = vsel %vm2812, %v3334, 0.0
        %v3420 = vsel %vm2813, %v3335, 0.0
        %v3421 = vsel %vm2898, %v3419, 0.0
        %3422 = vadd.xlane.f32.xlu0 %v3421
        %v3423 = vpop.xlane.xlu0 %3422
        %v3424 = vsel %vm2898, %v3420, 0.0
        %3425 = vadd.xlane.f32.xlu0 %v3424
        %v3426 = vpop.xlane.xlu0 %3425
        %v3427 = vmul.f32 %v3423, %v3023
        %v3428 = vmul.f32 %v3426, %v3023
        %v3429 = vadd.f32 %v3417, %v3427
        %v3430 = vadd.f32 %v3418, %v3428
        %v3431 = vsel %vm2826, %v3334, 0.0
        %v3432 = vsel %vm2827, %v3335, 0.0
        %v3433 = vsel %vm2898, %v3431, 0.0
        %3434 = vadd.xlane.f32.xlu0 %v3433
        %v3435 = vpop.xlane.xlu0 %3434
        %v3436 = vsel %vm2898, %v3432, 0.0
        %3437 = vadd.xlane.f32.xlu0 %v3436
        %v3438 = vpop.xlane.xlu0 %3437
        %v3439 = vmul.f32 %v3435, %v3039
        %v3440 = vmul.f32 %v3438, %v3039
        %v3441 = vadd.f32 %v3429, %v3439
        %v3442 = vadd.f32 %v3430, %v3440
        %v3443 = vsel %vm2840, %v3334, 0.0
        %v3444 = vsel %vm2841, %v3335, 0.0
        %v3445 = vsel %vm2898, %v3443, 0.0
        %3446 = vadd.xlane.f32.xlu0 %v3445
        %v3447 = vpop.xlane.xlu0 %3446
        %v3448 = vsel %vm2898, %v3444, 0.0
        %3449 = vadd.xlane.f32.xlu0 %v3448
        %v3450 = vpop.xlane.xlu0 %3449
        %v3451 = vmul.f32 %v3447, %v3055
        %v3452 = vmul.f32 %v3450, %v3055
        %v3453 = vadd.f32 %v3441, %v3451
        %v3454 = vadd.f32 %v3442, %v3452
        %v3455 = vsel %vm2854, %v3334, 0.0
        %v3456 = vsel %vm2855, %v3335, 0.0
        %v3457 = vsel %vm2898, %v3455, 0.0
        %3458 = vadd.xlane.f32.xlu0 %v3457
        %v3459 = vpop.xlane.xlu0 %3458
        %v3460 = vsel %vm2898, %v3456, 0.0
        %3461 = vadd.xlane.f32.xlu0 %v3460
        %v3462 = vpop.xlane.xlu0 %3461
        %v3463 = vmul.f32 %v3459, %v3071
        %v3464 = vmul.f32 %v3462, %v3071
        %v3465 = vadd.f32 %v3453, %v3463
        %v3466 = vadd.f32 %v3454, %v3464
        %v3467 = vsel %vm2868, %v3334, 0.0
        %v3468 = vsel %vm2869, %v3335, 0.0
        %v3469 = vsel %vm2898, %v3467, 0.0
        %3470 = vadd.xlane.f32.xlu0 %v3469
        %v3471 = vpop.xlane.xlu0 %3470
        %v3472 = vsel %vm2898, %v3468, 0.0
        %3473 = vadd.xlane.f32.xlu0 %v3472
        %v3474 = vpop.xlane.xlu0 %3473
        %v3475 = vmul.f32 %v3471, %v3087
        %v3476 = vmul.f32 %v3474, %v3087
        %v3477 = vadd.f32 %v3465, %v3475
        %v3478 = vadd.f32 %v3466, %v3476
        %v3479 = vsel %vm2882, %v3334, 0.0
        %v3480 = vsel %vm2883, %v3335, 0.0
        %v3481 = vsel %vm2898, %v3479, 0.0
        %3482 = vadd.xlane.f32.xlu0 %v3481
        %v3483 = vpop.xlane.xlu0 %3482
        %v3484 = vsel %vm2898, %v3480, 0.0
        %3485 = vadd.xlane.f32.xlu0 %v3484
        %v3486 = vpop.xlane.xlu0 %3485
        %v3487 = vmul.f32 %v3483, %v3103
        %v3488 = vmul.f32 %v3486, %v3103
        %v3489 = vadd.f32 %v3477, %v3487
        %v3490 = vadd.f32 %v3478, %v3488
        %3493 = vrot.lane.b32.xlu0 %v3489, 32
        %v3494 = vpop.permute.xlu0 %3493
        %3495 = vrot.lane.b32.xlu0 %v3490, 32
        %v3496 = vpop.permute.xlu0 %3495
        %vm3499 = vcmask 523520
        %3500 = vst.msk [vmem:[#allocation3] sm:$0xff] %vm3499, %v3494
        %3501 = vst.msk [vmem:[#allocation3 + $0x8] sm:$0xff] %vm3499, %v3496
        %v3502 = vld [vmem:[#allocation3] sm:$0xff]
        %v3503 = vld [vmem:[#allocation3 + $0x8] sm:$0xff]
        %v3504 = vpack.c.bf16 %v3503, %v3502
        %v3505 = vld [vmem:[%s1071] sm:$0xf]
        %v3506 = vld [vmem:[%s1071 + $0x4] sm:$0xf]
        %v3507 = vld [vmem:[%s1071 + $0x8] sm:$0xf]
        %v3508 = vld [vmem:[%s1071 + $0xc] sm:$0xf]
        %v3509 = vld [vmem:[%s1071 + $0x10] sm:$0xf]
        %v3510 = vld [vmem:[%s1071 + $0x14] sm:$0xf]
        %v3511 = vld [vmem:[%s1071 + $0x18] sm:$0xf]
        %v3512 = vld [vmem:[%s1071 + $0x1c] sm:$0xf]
        %v3513 = vld [vmem:[%s1074] sm:$0x1]
        %v3515 = vlaneseq
        %v3516 = vshrl.u32 %v3515, 7
        %v3517 = vsub.s32 0, %v3516
        %v3518 = vrot.slane %v3513, %v3517
        %v3528 = vunpack.c.l.b16 %v3505
        %v3529 = vunpack.c.l.b16 %v3506
        %v3530 = vunpack.c.l.b16 %v3507
        %v3531 = vunpack.c.l.b16 %v3508
        %v3532 = vunpack.c.l.b16 %v3509
        %v3533 = vunpack.c.l.b16 %v3510
        %v3534 = vunpack.c.l.b16 %v3511
        %v3535 = vunpack.c.l.b16 %v3512
        %v3536 = vpack.c.b16 %v3529, %v3528
        %v3537 = vpack.c.b16 %v3531, %v3530
        %v3538 = vpack.c.b16 %v3533, %v3532
        %v3539 = vpack.c.b16 %v3535, %v3534
        %v3545 = vsel %vm2463, %v3504, 0
        %3547 = vmatprep.subr.bf16.mxu0 0
        %3548 = vmatpush1.bf16.msra.mxu0 %v3536
        %3549 = vmatprep.subr.bf16.mxu0 0
        %3550 = vmatpush1.bf16.msra.mxu0 %v3537
        %3551 = vmatprep.subr.bf16.mxu0 0
        %3552 = vmatpush1.bf16.msra.mxu0 %v3538
        %3553 = vmatprep.subr.bf16.mxu0 0
        %3554 = vmatpush1.bf16.msra.mxu0 %v3539
        %3555 = vmatprep.subr.bf16.mxu0 0
        %3556 = vmatpush1.bf16.msra.mxu0 0
        %3557 = vmatprep.subr.bf16.mxu0 0
        %3558 = vmatpush1.bf16.msra.mxu0 0
        %3559 = vmatprep.subr.bf16.mxu0 0
        %3560 = vmatpush1.bf16.msra.mxu0 0
        %3561 = vmatprep.subr.bf16.mxu0 0
        %3562 = vmatpush1.bf16.msra.mxu0 0
        %3563 = vmatprep.subr.bf16.mxu0 0
        %3564 = vmatpush1.bf16.msra.mxu0 0
        %3565 = vmatprep.subr.bf16.mxu0 0
        %3566 = vmatpush1.bf16.msra.mxu0 0
        %3567 = vmatprep.subr.bf16.mxu0 0
        %3568 = vmatpush1.bf16.msra.mxu0 0
        %3569 = vmatprep.subr.bf16.mxu0 0
        %3570 = vmatpush1.bf16.msra.mxu0 0
        %3571 = vmatprep.subr.bf16.mxu0 0
        %3572 = vmatpush1.bf16.msra.mxu0 0
        %3573 = vmatprep.subr.bf16.mxu0 0
        %3574 = vmatpush1.bf16.msra.mxu0 0
        %3575 = vmatprep.subr.bf16.mxu0 0
        %3576 = vmatpush1.bf16.msra.mxu0 0
        %3577 = vmatprep.subr.bf16.mxu0 0
        %3578 = vmatpush1.bf16.msra.mxu0 0
        %3579 = vmatprep.mubr.bf16.mxu0 0
        %3580 = vmatmul.mubr.bf16.gmra.mrb[0].mxu0 %v3545
        %v3581 = vpop.f32.mrb[0].mxu0
        %v3582 = vadd.f32 %v3518, %v3581
        %v3583 = vpop.f32.mrb[0].mxu0
        %v3584 = vpop.f32.mrb[0].mxu0
        %v3585 = vadd.f32 %v3518, %v3584
        %v3586 = vpop.f32.mrb[0].mxu0
        %3587 = vdwg.mxu0
        %v3588 = vadd.f32 %v2421, %v3582
        %v3589 = vadd.f32 %v2422, %v3585
        %v3590 = vld [vmem:[%s1087] sm:$0x1]
        %v3591 = vld [vmem:[%s1090] sm:$0x1]
        %v3592 = vsel %vm2463, %v3588, 0.0
        %3593 = vadd.xlane.f32.xlu0 %v3592
        %v3594 = vpop.xlane.xlu0 %3593
        %v3595 = vsel %vm2463, %v3589, 0.0
        %3596 = vadd.xlane.f32.xlu0 %v3595
        %v3597 = vpop.xlane.xlu0 %3596
        %v3598 = vrcp.pop 64.0
        %v3599 = vmul.f32 %v3594, %v3598
        %v3600 = vmul.f32 %v3597, %v3598
        %v3601 = vsub.f32 %v3588, %v3599
        %v3602 = vsub.f32 %v3589, %v3600
        %v3603 = vmul.f32 %v3601, %v3601
        %v3604 = vmul.f32 %v3602, %v3602
        %v3605 = vsel %vm2463, %v3603, 0.0
        %3606 = vadd.xlane.f32.xlu0 %v3605
        %v3607 = vpop.xlane.xlu0 %3606
        %v3608 = vsel %vm2463, %v3604, 0.0
        %3609 = vadd.xlane.f32.xlu0 %v3608
        %v3610 = vpop.xlane.xlu0 %3609
        %v3611 = vmul.f32 %v3607, %v3598
        %v3612 = vmul.f32 %v3610, %v3598
        %v3613 = vadd.f32 %v3611, 1e-05
        %v3614 = vadd.f32 %v3612, 1e-05
        %v3615 = vrsqrt.pop %v3613
        %v3616 = vrsqrt.pop %v3614
        %v3617 = vmul.f32 %v3601, %v3615
        %v3618 = vmul.f32 %v3602, %v3616
        %v3620 = vlaneseq
        %v3621 = vshrl.u32 %v3620, 7
        %v3622 = vsub.s32 0, %v3621
        %v3623 = vrot.slane %v3590, %v3622
        %v3625 = vmul.f32 %v3617, %v3623
        %v3626 = vmul.f32 %v3618, %v3623
        %v3628 = vlaneseq
        %v3629 = vshrl.u32 %v3628, 7
        %v3630 = vsub.s32 0, %v3629
        %v3631 = vrot.slane %v3591, %v3630
        %v3633 = vadd.f32 %v3625, %v3631
        %v3634 = vadd.f32 %v3626, %v3631
        %v3635 = vmul.f32 %v3633, %v1123
        %v3636 = vmul.f32 %v3634, %v1124
        %v3637 = vld [vmem:[%s1098] sm:$0x1]
        %vm3640 = vcmask 1040384
        %v3641 = vrot.slane %v3635, 7
        %v3642 = vrot.slane %v3636, 7
        %v3643 = vsel %vm3640, %v3641, %v3642
        %v3646 = vsel %vm3640, 0.0, %v3641
        %v3647 = vpack.c.bf16 %v3643, %v3646
        %v3648 = vld [vmem:[%s1095] sm:$0xf]
        %v3649 = vld [vmem:[%s1095 + $0x4] sm:$0xf]
        %v3650 = vld [vmem:[%s1095 + $0x8] sm:$0xf]
        %v3651 = vld [vmem:[%s1095 + $0xc] sm:$0xf]
        %v3652 = vld [vmem:[%s1095 + $0x10] sm:$0xf]
        %v3653 = vld [vmem:[%s1095 + $0x14] sm:$0xf]
        %v3654 = vld [vmem:[%s1095 + $0x18] sm:$0xf]
        %v3655 = vld [vmem:[%s1095 + $0x1c] sm:$0xf]
        %v3664 = vunpack.c.l.b16 %v3648
        %v3665 = vunpack.c.l.b16 %v3649
        %v3666 = vunpack.c.l.b16 %v3650
        %v3667 = vunpack.c.l.b16 %v3651
        %v3668 = vunpack.c.l.b16 %v3652
        %v3669 = vunpack.c.l.b16 %v3653
        %v3670 = vunpack.c.l.b16 %v3654
        %v3671 = vunpack.c.l.b16 %v3655
        %v3672 = vpack.c.b16 %v3665, %v3664
        %v3673 = vpack.c.b16 %v3667, %v3666
        %v3674 = vpack.c.b16 %v3669, %v3668
        %v3675 = vpack.c.b16 %v3671, %v3670
        %v3681 = vsel %vm2463, %v3647, 0
        %3683 = vmatprep.subr.bf16.mxu0 0
        %3684 = vmatpush1.bf16.msra.mxu0 %v3672
        %3685 = vmatprep.subr.bf16.mxu0 0
        %3686 = vmatpush1.bf16.msra.mxu0 %v3673
        %3687 = vmatprep.subr.bf16.mxu0 0
        %3688 = vmatpush1.bf16.msra.mxu0 %v3674
        %3689 = vmatprep.subr.bf16.mxu0 0
        %3690 = vmatpush1.bf16.msra.mxu0 %v3675
        %3691 = vmatprep.subr.bf16.mxu0 0
        %3692 = vmatpush1.bf16.msra.mxu0 0
        %3693 = vmatprep.subr.bf16.mxu0 0
        %3694 = vmatpush1.bf16.msra.mxu0 0
        %3695 = vmatprep.subr.bf16.mxu0 0
        %3696 = vmatpush1.bf16.msra.mxu0 0
        %3697 = vmatprep.subr.bf16.mxu0 0
        %3698 = vmatpush1.bf16.msra.mxu0 0
        %3699 = vmatprep.subr.bf16.mxu0 0
        %3700 = vmatpush1.bf16.msra.mxu0 0
        %3701 = vmatprep.subr.bf16.mxu0 0
        %3702 = vmatpush1.bf16.msra.mxu0 0
        %3703 = vmatprep.subr.bf16.mxu0 0
        %3704 = vmatpush1.bf16.msra.mxu0 0
        %3705 = vmatprep.subr.bf16.mxu0 0
        %3706 = vmatpush1.bf16.msra.mxu0 0
        %3707 = vmatprep.subr.bf16.mxu0 0
        %3708 = vmatpush1.bf16.msra.mxu0 0
        %3709 = vmatprep.subr.bf16.mxu0 0
        %3710 = vmatpush1.bf16.msra.mxu0 0
        %3711 = vmatprep.subr.bf16.mxu0 0
        %3712 = vmatpush1.bf16.msra.mxu0 0
        %3713 = vmatprep.subr.bf16.mxu0 0
        %3714 = vmatpush1.bf16.msra.mxu0 0
        %3715 = vmatprep.mubr.bf16.mxu0 0
        %3716 = vmatmul.mubr.bf16.gmra.mrb[0].mxu0 %v3681
        %v3717 = vpop.f32.mrb[0].mxu0
        %v3718 = vadd.f32 0.0, %v3717
        %v3719 = vpop.f32.mrb[0].mxu0
        %v3720 = vpop.f32.mrb[0].mxu0
        %v3721 = vadd.f32 0.0, %v3720
        %v3722 = vpop.f32.mrb[0].mxu0
        %3723 = vdwg.mxu0
        %v3725 = vlaneseq
        %v3726 = vshrl.u32 %v3725, 7
        %v3727 = vsub.s32 0, %v3726
        %v3728 = vrot.slane %v3637, %v3727
        %v3730 = vadd.f32 %v3728, %v3718
        %v3731 = vadd.f32 %v3728, %v3721
        %v3732 = vpack.c.bf16 %v3636, %v3635
        %s3733 = scalar_lea.vmem %s1095, 32
        %v3734 = vld [vmem:[%s3733] sm:$0xf]
        %v3735 = vld [vmem:[%s3733 + $0x4] sm:$0xf]
        %v3736 = vld [vmem:[%s3733 + $0x8] sm:$0xf]
        %v3737 = vld [vmem:[%s3733 + $0xc] sm:$0xf]
        %v3738 = vld [vmem:[%s3733 + $0x10] sm:$0xf]
        %v3739 = vld [vmem:[%s3733 + $0x14] sm:$0xf]
        %v3740 = vld [vmem:[%s3733 + $0x18] sm:$0xf]
        %v3741 = vld [vmem:[%s3733 + $0x1c] sm:$0xf]
        %v3750 = vunpack.c.l.b16 %v3734
        %v3751 = vunpack.c.l.b16 %v3735
        %v3752 = vunpack.c.l.b16 %v3736
        %v3753 = vunpack.c.l.b16 %v3737
        %v3754 = vunpack.c.l.b16 %v3738
        %v3755 = vunpack.c.l.b16 %v3739
        %v3756 = vunpack.c.l.b16 %v3740
        %v3757 = vunpack.c.l.b16 %v3741
        %v3758 = vpack.c.b16 %v3751, %v3750
        %v3759 = vpack.c.b16 %v3753, %v3752
        %v3760 = vpack.c.b16 %v3755, %v3754
        %v3761 = vpack.c.b16 %v3757, %v3756
        %v3767 = vsel %vm2463, %v3732, 0
        %3769 = vmatprep.subr.bf16.mxu0 0
        %3770 = vmatpush1.bf16.msra.mxu0 %v3758
        %3771 = vmatprep.subr.bf16.mxu0 0
        %3772 = vmatpush1.bf16.msra.mxu0 %v3759
        %3773 = vmatprep.subr.bf16.mxu0 0
        %3774 = vmatpush1.bf16.msra.mxu0 %v3760
        %3775 = vmatprep.subr.bf16.mxu0 0
        %3776 = vmatpush1.bf16.msra.mxu0 %v3761
        %3777 = vmatprep.subr.bf16.mxu0 0
        %3778 = vmatpush1.bf16.msra.mxu0 0
        %3779 = vmatprep.subr.bf16.mxu0 0
        %3780 = vmatpush1.bf16.msra.mxu0 0
        %3781 = vmatprep.subr.bf16.mxu0 0
        %3782 = vmatpush1.bf16.msra.mxu0 0
        %3783 = vmatprep.subr.bf16.mxu0 0
        %3784 = vmatpush1.bf16.msra.mxu0 0
        %3785 = vmatprep.subr.bf16.mxu0 0
        %3786 = vmatpush1.bf16.msra.mxu0 0
        %3787 = vmatprep.subr.bf16.mxu0 0
        %3788 = vmatpush1.bf16.msra.mxu0 0
        %3789 = vmatprep.subr.bf16.mxu0 0
        %3790 = vmatpush1.bf16.msra.mxu0 0
        %3791 = vmatprep.subr.bf16.mxu0 0
        %3792 = vmatpush1.bf16.msra.mxu0 0
        %3793 = vmatprep.subr.bf16.mxu0 0
        %3794 = vmatpush1.bf16.msra.mxu0 0
        %3795 = vmatprep.subr.bf16.mxu0 0
        %3796 = vmatpush1.bf16.msra.mxu0 0
        %3797 = vmatprep.subr.bf16.mxu0 0
        %3798 = vmatpush1.bf16.msra.mxu0 0
        %3799 = vmatprep.subr.bf16.mxu0 0
        %3800 = vmatpush1.bf16.msra.mxu0 0
        %3801 = vmatprep.mubr.bf16.mxu0 0
        %3802 = vmatmul.mubr.bf16.gmra.mrb[0].mxu0 %v3767
        %v3803 = vpop.f32.mrb[0].mxu0
        %v3804 = vadd.f32 0.0, %v3803
        %v3805 = vpop.f32.mrb[0].mxu0
        %v3806 = vpop.f32.mrb[0].mxu0
        %v3807 = vadd.f32 0.0, %v3806
        %v3808 = vpop.f32.mrb[0].mxu0
        %3809 = vdwg.mxu0
        %v3810 = vadd.f32 %v3730, %v3804
        %v3811 = vadd.f32 %v3731, %v3807
        %vm3812 = vcmask 1046528
        %v3813 = vrot.slane %v3635, 1
        %v3814 = vrot.slane %v3636, 1
        %v3815 = vsel %vm3812, %v3813, %v3814
        %v3818 = vsel %vm3812, %v3814, 0.0
        %v3819 = vpack.c.bf16 %v3818, %v3815
        %s3820 = scalar_lea.vmem %s1095, 64
        %v3821 = vld [vmem:[%s3820] sm:$0xf]
        %v3822 = vld [vmem:[%s3820 + $0x4] sm:$0xf]
        %v3823 = vld [vmem:[%s3820 + $0x8] sm:$0xf]
        %v3824 = vld [vmem:[%s3820 + $0xc] sm:$0xf]
        %v3825 = vld [vmem:[%s3820 + $0x10] sm:$0xf]
        %v3826 = vld [vmem:[%s3820 + $0x14] sm:$0xf]
        %v3827 = vld [vmem:[%s3820 + $0x18] sm:$0xf]
        %v3828 = vld [vmem:[%s3820 + $0x1c] sm:$0xf]
        %v3837 = vunpack.c.l.b16 %v3821
        %v3838 = vunpack.c.l.b16 %v3822
        %v3839 = vunpack.c.l.b16 %v3823
        %v3840 = vunpack.c.l.b16 %v3824
        %v3841 = vunpack.c.l.b16 %v3825
        %v3842 = vunpack.c.l.b16 %v3826
        %v3843 = vunpack.c.l.b16 %v3827
        %v3844 = vunpack.c.l.b16 %v3828
        %v3845 = vpack.c.b16 %v3838, %v3837
        %v3846 = vpack.c.b16 %v3840, %v3839
        %v3847 = vpack.c.b16 %v3842, %v3841
        %v3848 = vpack.c.b16 %v3844, %v3843
        %v3854 = vsel %vm2463, %v3819, 0
        %3856 = vmatprep.subr.bf16.mxu0 0
        %3857 = vmatpush1.bf16.msra.mxu0 %v3845
        %3858 = vmatprep.subr.bf16.mxu0 0
        %3859 = vmatpush1.bf16.msra.mxu0 %v3846
        %3860 = vmatprep.subr.bf16.mxu0 0
        %3861 = vmatpush1.bf16.msra.mxu0 %v3847
        %3862 = vmatprep.subr.bf16.mxu0 0
        %3863 = vmatpush1.bf16.msra.mxu0 %v3848
        %3864 = vmatprep.subr.bf16.mxu0 0
        %3865 = vmatpush1.bf16.msra.mxu0 0
        %3866 = vmatprep.subr.bf16.mxu0 0
        %3867 = vmatpush1.bf16.msra.mxu0 0
        %3868 = vmatprep.subr.bf16.mxu0 0
        %3869 = vmatpush1.bf16.msra.mxu0 0
        %3870 = vmatprep.subr.bf16.mxu0 0
        %3871 = vmatpush1.bf16.msra.mxu0 0
        %3872 = vmatprep.subr.bf16.mxu0 0
        %3873 = vmatpush1.bf16.msra.mxu0 0
        %3874 = vmatprep.subr.bf16.mxu0 0
        %3875 = vmatpush1.bf16.msra.mxu0 0
        %3876 = vmatprep.subr.bf16.mxu0 0
        %3877 = vmatpush1.bf16.msra.mxu0 0
        %3878 = vmatprep.subr.bf16.mxu0 0
        %3879 = vmatpush1.bf16.msra.mxu0 0
        %3880 = vmatprep.subr.bf16.mxu0 0
        %3881 = vmatpush1.bf16.msra.mxu0 0
        %3882 = vmatprep.subr.bf16.mxu0 0
        %3883 = vmatpush1.bf16.msra.mxu0 0
        %3884 = vmatprep.subr.bf16.mxu0 0
        %3885 = vmatpush1.bf16.msra.mxu0 0
        %3886 = vmatprep.subr.bf16.mxu0 0
        %3887 = vmatpush1.bf16.msra.mxu0 0
        %3888 = vmatprep.mubr.bf16.mxu0 0
        %3889 = vmatmul.mubr.bf16.gmra.mrb[0].mxu0 %v3854
        %v3890 = vpop.f32.mrb[0].mxu0
        %v3891 = vadd.f32 0.0, %v3890
        %v3892 = vpop.f32.mrb[0].mxu0
        %v3893 = vpop.f32.mrb[0].mxu0
        %v3894 = vadd.f32 0.0, %v3893
        %v3895 = vpop.f32.mrb[0].mxu0
        %3896 = vdwg.mxu0
        %v3897 = vadd.f32 %v3810, %v3891
        %v3898 = vadd.f32 %v3811, %v3894
        %v3899 = vmax.f32 %v3897, 0.0
        %v3900 = vmax.f32 %v3898, 0.0
        %v3901 = vmul.f32 %v3899, %v1123
        %v3902 = vmul.f32 %v3900, %v1124
        %v3903 = vld [vmem:[%s1106] sm:$0x1]
        %v3906 = vrot.slane %v3901, 7
        %v3907 = vrot.slane %v3902, 7
        %v3908 = vsel %vm3640, %v3906, %v3907
        %v3911 = vsel %vm3640, 0.0, %v3906
        %v3912 = vpack.c.bf16 %v3908, %v3911
        %v3913 = vld [vmem:[%s1103] sm:$0xf]
        %v3914 = vld [vmem:[%s1103 + $0x4] sm:$0xf]
        %v3915 = vld [vmem:[%s1103 + $0x8] sm:$0xf]
        %v3916 = vld [vmem:[%s1103 + $0xc] sm:$0xf]
        %v3917 = vld [vmem:[%s1103 + $0x10] sm:$0xf]
        %v3918 = vld [vmem:[%s1103 + $0x14] sm:$0xf]
        %v3919 = vld [vmem:[%s1103 + $0x18] sm:$0xf]
        %v3920 = vld [vmem:[%s1103 + $0x1c] sm:$0xf]
        %v3921 = vld [vmem:[%s1103 + $0x20] sm:$0xf]
        %v3922 = vld [vmem:[%s1103 + $0x24] sm:$0xf]
        %v3923 = vld [vmem:[%s1103 + $0x28] sm:$0xf]
        %v3924 = vld [vmem:[%s1103 + $0x2c] sm:$0xf]
        %v3925 = vld [vmem:[%s1103 + $0x30] sm:$0xf]
        %v3926 = vld [vmem:[%s1103 + $0x34] sm:$0xf]
        %v3927 = vld [vmem:[%s1103 + $0x38] sm:$0xf]
        %v3928 = vld [vmem:[%s1103 + $0x3c] sm:$0xf]
        %v3945 = vunpack.c.l.b16 %v3913
        %v3946 = vunpack.c.l.b16 %v3914
        %v3947 = vunpack.c.l.b16 %v3915
        %v3948 = vunpack.c.l.b16 %v3916
        %v3949 = vunpack.c.l.b16 %v3917
        %v3950 = vunpack.c.l.b16 %v3918
        %v3951 = vunpack.c.l.b16 %v3919
        %v3952 = vunpack.c.l.b16 %v3920
        %v3953 = vunpack.c.l.b16 %v3921
        %v3954 = vunpack.c.l.b16 %v3922
        %v3955 = vunpack.c.l.b16 %v3923
        %v3956 = vunpack.c.l.b16 %v3924
        %v3957 = vunpack.c.l.b16 %v3925
        %v3958 = vunpack.c.l.b16 %v3926
        %v3959 = vunpack.c.l.b16 %v3927
        %v3960 = vunpack.c.l.b16 %v3928
        %v3961 = vpack.c.b16 %v3946, %v3945
        %v3962 = vpack.c.b16 %v3948, %v3947
        %v3963 = vpack.c.b16 %v3950, %v3949
        %v3964 = vpack.c.b16 %v3952, %v3951
        %v3965 = vpack.c.b16 %v3954, %v3953
        %v3966 = vpack.c.b16 %v3956, %v3955
        %v3967 = vpack.c.b16 %v3958, %v3957
        %v3968 = vpack.c.b16 %v3960, %v3959
        %3977 = vmatprep.subr.bf16.mxu0 0
        %3978 = vmatpush1.bf16.msra.mxu0 %v3961
        %3979 = vmatprep.subr.bf16.mxu0 0
        %3980 = vmatpush1.bf16.msra.mxu0 %v3962
        %3981 = vmatprep.subr.bf16.mxu0 0
        %3982 = vmatpush1.bf16.msra.mxu0 %v3963
        %3983 = vmatprep.subr.bf16.mxu0 0
        %3984 = vmatpush1.bf16.msra.mxu0 %v3964
        %3985 = vmatprep.subr.bf16.mxu0 0
        %3986 = vmatpush1.bf16.msra.mxu0 %v3965
        %3987 = vmatprep.subr.bf16.mxu0 0
        %3988 = vmatpush1.bf16.msra.mxu0 %v3966
        %3989 = vmatprep.subr.bf16.mxu0 0
        %3990 = vmatpush1.bf16.msra.mxu0 %v3967
        %3991 = vmatprep.subr.bf16.mxu0 0
        %3992 = vmatpush1.bf16.msra.mxu0 %v3968
        %3993 = vmatprep.subr.bf16.mxu0 0
        %3994 = vmatpush1.bf16.msra.mxu0 0
        %3995 = vmatprep.subr.bf16.mxu0 0
        %3996 = vmatpush1.bf16.msra.mxu0 0
        %3997 = vmatprep.subr.bf16.mxu0 0
        %3998 = vmatpush1.bf16.msra.mxu0 0
        %3999 = vmatprep.subr.bf16.mxu0 0
        %4000 = vmatpush1.bf16.msra.mxu0 0
        %4001 = vmatprep.subr.bf16.mxu0 0
        %4002 = vmatpush1.bf16.msra.mxu0 0
        %4003 = vmatprep.subr.bf16.mxu0 0
        %4004 = vmatpush1.bf16.msra.mxu0 0
        %4005 = vmatprep.subr.bf16.mxu0 0
        %4006 = vmatpush1.bf16.msra.mxu0 0
        %4007 = vmatprep.subr.bf16.mxu0 0
        %4008 = vmatpush1.bf16.msra.mxu0 0
        %4009 = vmatprep.mubr.bf16.mxu0 0
        %4010 = vmatmul.mubr.bf16.gmra.mrb[0].mxu0 %v3912
        %v4011 = vpop.f32.mrb[0].mxu0
        %v4012 = vadd.f32 0.0, %v4011
        %v4013 = vpop.f32.mrb[0].mxu0
        %v4014 = vpop.f32.mrb[0].mxu0
        %v4015 = vadd.f32 0.0, %v4014
        %v4016 = vpop.f32.mrb[0].mxu0
        %4017 = vdwg.mxu0
        %v4019 = vlaneseq
        %v4020 = vshrl.u32 %v4019, 7
        %v4021 = vsub.s32 0, %v4020
        %v4022 = vrot.slane %v3903, %v4021
        %v4024 = vadd.f32 %v4022, %v4012
        %v4025 = vadd.f32 %v4022, %v4015
        %v4026 = vpack.c.bf16 %v3902, %v3901
        %s4027 = scalar_lea.vmem %s1103, 64
        %v4028 = vld [vmem:[%s4027] sm:$0xf]
        %v4029 = vld [vmem:[%s4027 + $0x4] sm:$0xf]
        %v4030 = vld [vmem:[%s4027 + $0x8] sm:$0xf]
        %v4031 = vld [vmem:[%s4027 + $0xc] sm:$0xf]
        %v4032 = vld [vmem:[%s4027 + $0x10] sm:$0xf]
        %v4033 = vld [vmem:[%s4027 + $0x14] sm:$0xf]
        %v4034 = vld [vmem:[%s4027 + $0x18] sm:$0xf]
        %v4035 = vld [vmem:[%s4027 + $0x1c] sm:$0xf]
        %v4036 = vld [vmem:[%s4027 + $0x20] sm:$0xf]
        %v4037 = vld [vmem:[%s4027 + $0x24] sm:$0xf]
        %v4038 = vld [vmem:[%s4027 + $0x28] sm:$0xf]
        %v4039 = vld [vmem:[%s4027 + $0x2c] sm:$0xf]
        %v4040 = vld [vmem:[%s4027 + $0x30] sm:$0xf]
        %v4041 = vld [vmem:[%s4027 + $0x34] sm:$0xf]
        %v4042 = vld [vmem:[%s4027 + $0x38] sm:$0xf]
        %v4043 = vld [vmem:[%s4027 + $0x3c] sm:$0xf]
        %v4060 = vunpack.c.l.b16 %v4028
        %v4061 = vunpack.c.l.b16 %v4029
        %v4062 = vunpack.c.l.b16 %v4030
        %v4063 = vunpack.c.l.b16 %v4031
        %v4064 = vunpack.c.l.b16 %v4032
        %v4065 = vunpack.c.l.b16 %v4033
        %v4066 = vunpack.c.l.b16 %v4034
        %v4067 = vunpack.c.l.b16 %v4035
        %v4068 = vunpack.c.l.b16 %v4036
        %v4069 = vunpack.c.l.b16 %v4037
        %v4070 = vunpack.c.l.b16 %v4038
        %v4071 = vunpack.c.l.b16 %v4039
        %v4072 = vunpack.c.l.b16 %v4040
        %v4073 = vunpack.c.l.b16 %v4041
        %v4074 = vunpack.c.l.b16 %v4042
        %v4075 = vunpack.c.l.b16 %v4043
        %v4076 = vpack.c.b16 %v4061, %v4060
        %v4077 = vpack.c.b16 %v4063, %v4062
        %v4078 = vpack.c.b16 %v4065, %v4064
        %v4079 = vpack.c.b16 %v4067, %v4066
        %v4080 = vpack.c.b16 %v4069, %v4068
        %v4081 = vpack.c.b16 %v4071, %v4070
        %v4082 = vpack.c.b16 %v4073, %v4072
        %v4083 = vpack.c.b16 %v4075, %v4074
        %4092 = vmatprep.subr.bf16.mxu0 0
        %4093 = vmatpush1.bf16.msra.mxu0 %v4076
        %4094 = vmatprep.subr.bf16.mxu0 0
        %4095 = vmatpush1.bf16.msra.mxu0 %v4077
        %4096 = vmatprep.subr.bf16.mxu0 0
        %4097 = vmatpush1.bf16.msra.mxu0 %v4078
        %4098 = vmatprep.subr.bf16.mxu0 0
        %4099 = vmatpush1.bf16.msra.mxu0 %v4079
        %4100 = vmatprep.subr.bf16.mxu0 0
        %4101 = vmatpush1.bf16.msra.mxu0 %v4080
        %4102 = vmatprep.subr.bf16.mxu0 0
        %4103 = vmatpush1.bf16.msra.mxu0 %v4081
        %4104 = vmatprep.subr.bf16.mxu0 0
        %4105 = vmatpush1.bf16.msra.mxu0 %v4082
        %4106 = vmatprep.subr.bf16.mxu0 0
        %4107 = vmatpush1.bf16.msra.mxu0 %v4083
        %4108 = vmatprep.subr.bf16.mxu0 0
        %4109 = vmatpush1.bf16.msra.mxu0 0
        %4110 = vmatprep.subr.bf16.mxu0 0
        %4111 = vmatpush1.bf16.msra.mxu0 0
        %4112 = vmatprep.subr.bf16.mxu0 0
        %4113 = vmatpush1.bf16.msra.mxu0 0
        %4114 = vmatprep.subr.bf16.mxu0 0
        %4115 = vmatpush1.bf16.msra.mxu0 0
        %4116 = vmatprep.subr.bf16.mxu0 0
        %4117 = vmatpush1.bf16.msra.mxu0 0
        %4118 = vmatprep.subr.bf16.mxu0 0
        %4119 = vmatpush1.bf16.msra.mxu0 0
        %4120 = vmatprep.subr.bf16.mxu0 0
        %4121 = vmatpush1.bf16.msra.mxu0 0
        %4122 = vmatprep.subr.bf16.mxu0 0
        %4123 = vmatpush1.bf16.msra.mxu0 0
        %4124 = vmatprep.mubr.bf16.mxu0 0
        %4125 = vmatmul.mubr.bf16.gmra.mrb[0].mxu0 %v4026
        %v4126 = vpop.f32.mrb[0].mxu0
        %v4127 = vadd.f32 0.0, %v4126
        %v4128 = vpop.f32.mrb[0].mxu0
        %v4129 = vpop.f32.mrb[0].mxu0
        %v4130 = vadd.f32 0.0, %v4129
        %v4131 = vpop.f32.mrb[0].mxu0
        %4132 = vdwg.mxu0
        %v4133 = vadd.f32 %v4024, %v4127
        %v4134 = vadd.f32 %v4025, %v4130
        %v4135 = vrot.slane %v3901, 1
        %v4136 = vrot.slane %v3902, 1
        %v4137 = vsel %vm3812, %v4135, %v4136
        %v4140 = vsel %vm3812, %v4136, 0.0
        %v4141 = vpack.c.bf16 %v4140, %v4137
        %s4142 = scalar_lea.vmem %s1103, 128
        %v4143 = vld [vmem:[%s4142] sm:$0xf]
        %v4144 = vld [vmem:[%s4142 + $0x4] sm:$0xf]
        %v4145 = vld [vmem:[%s4142 + $0x8] sm:$0xf]
        %v4146 = vld [vmem:[%s4142 + $0xc] sm:$0xf]
        %v4147 = vld [vmem:[%s4142 + $0x10] sm:$0xf]
        %v4148 = vld [vmem:[%s4142 + $0x14] sm:$0xf]
        %v4149 = vld [vmem:[%s4142 + $0x18] sm:$0xf]
        %v4150 = vld [vmem:[%s4142 + $0x1c] sm:$0xf]
        %v4151 = vld [vmem:[%s4142 + $0x20] sm:$0xf]
        %v4152 = vld [vmem:[%s4142 + $0x24] sm:$0xf]
        %v4153 = vld [vmem:[%s4142 + $0x28] sm:$0xf]
        %v4154 = vld [vmem:[%s4142 + $0x2c] sm:$0xf]
        %v4155 = vld [vmem:[%s4142 + $0x30] sm:$0xf]
        %v4156 = vld [vmem:[%s4142 + $0x34] sm:$0xf]
        %v4157 = vld [vmem:[%s4142 + $0x38] sm:$0xf]
        %v4158 = vld [vmem:[%s4142 + $0x3c] sm:$0xf]
        %v4175 = vunpack.c.l.b16 %v4143
        %v4176 = vunpack.c.l.b16 %v4144
        %v4177 = vunpack.c.l.b16 %v4145
        %v4178 = vunpack.c.l.b16 %v4146
        %v4179 = vunpack.c.l.b16 %v4147
        %v4180 = vunpack.c.l.b16 %v4148
        %v4181 = vunpack.c.l.b16 %v4149
        %v4182 = vunpack.c.l.b16 %v4150
        %v4183 = vunpack.c.l.b16 %v4151
        %v4184 = vunpack.c.l.b16 %v4152
        %v4185 = vunpack.c.l.b16 %v4153
        %v4186 = vunpack.c.l.b16 %v4154
        %v4187 = vunpack.c.l.b16 %v4155
        %v4188 = vunpack.c.l.b16 %v4156
        %v4189 = vunpack.c.l.b16 %v4157
        %v4190 = vunpack.c.l.b16 %v4158
        %v4191 = vpack.c.b16 %v4176, %v4175
        %v4192 = vpack.c.b16 %v4178, %v4177
        %v4193 = vpack.c.b16 %v4180, %v4179
        %v4194 = vpack.c.b16 %v4182, %v4181
        %v4195 = vpack.c.b16 %v4184, %v4183
        %v4196 = vpack.c.b16 %v4186, %v4185
        %v4197 = vpack.c.b16 %v4188, %v4187
        %v4198 = vpack.c.b16 %v4190, %v4189
        %4207 = vmatprep.subr.bf16.mxu0 0
        %4208 = vmatpush1.bf16.msra.mxu0 %v4191
        %4209 = vmatprep.subr.bf16.mxu0 0
        %4210 = vmatpush1.bf16.msra.mxu0 %v4192
        %4211 = vmatprep.subr.bf16.mxu0 0
        %4212 = vmatpush1.bf16.msra.mxu0 %v4193
        %4213 = vmatprep.subr.bf16.mxu0 0
        %4214 = vmatpush1.bf16.msra.mxu0 %v4194
        %4215 = vmatprep.subr.bf16.mxu0 0
        %4216 = vmatpush1.bf16.msra.mxu0 %v4195
        %4217 = vmatprep.subr.bf16.mxu0 0
        %4218 = vmatpush1.bf16.msra.mxu0 %v4196
        %4219 = vmatprep.subr.bf16.mxu0 0
        %4220 = vmatpush1.bf16.msra.mxu0 %v4197
        %4221 = vmatprep.subr.bf16.mxu0 0
        %4222 = vmatpush1.bf16.msra.mxu0 %v4198
        %4223 = vmatprep.subr.bf16.mxu0 0
        %4224 = vmatpush1.bf16.msra.mxu0 0
        %4225 = vmatprep.subr.bf16.mxu0 0
        %4226 = vmatpush1.bf16.msra.mxu0 0
        %4227 = vmatprep.subr.bf16.mxu0 0
        %4228 = vmatpush1.bf16.msra.mxu0 0
        %4229 = vmatprep.subr.bf16.mxu0 0
        %4230 = vmatpush1.bf16.msra.mxu0 0
        %4231 = vmatprep.subr.bf16.mxu0 0
        %4232 = vmatpush1.bf16.msra.mxu0 0
        %4233 = vmatprep.subr.bf16.mxu0 0
        %4234 = vmatpush1.bf16.msra.mxu0 0
        %4235 = vmatprep.subr.bf16.mxu0 0
        %4236 = vmatpush1.bf16.msra.mxu0 0
        %4237 = vmatprep.subr.bf16.mxu0 0
        %4238 = vmatpush1.bf16.msra.mxu0 0
        %4239 = vmatprep.mubr.bf16.mxu0 0
        %4240 = vmatmul.mubr.bf16.gmra.mrb[0].mxu0 %v4141
        %v4241 = vpop.f32.mrb[0].mxu0
        %v4242 = vadd.f32 0.0, %v4241
        %v4243 = vpop.f32.mrb[0].mxu0
        %v4244 = vpop.f32.mrb[0].mxu0
        %v4245 = vadd.f32 0.0, %v4244
        %v4246 = vpop.f32.mrb[0].mxu0
        %4247 = vdwg.mxu0
        %v4248 = vadd.f32 %v4133, %v4242
        %v4249 = vadd.f32 %v4134, %v4245
        %v4250 = vmul.f32 %v4248, %v1123
        %v4251 = vmul.f32 %v4249, %v1124
        %v4252 = vadd.f32 %v3633, %v4250
        %v4253 = vadd.f32 %v3634, %v4251
        %v4254 = vld [vmem:[%s1109] sm:$0x1]
        %v4255 = vld [vmem:[%s1112] sm:$0x1]
        %v4256 = vsel %vm2463, %v4252, 0.0
        %4257 = vadd.xlane.f32.xlu0 %v4256
        %v4258 = vpop.xlane.xlu0 %4257
        %v4259 = vsel %vm2463, %v4253, 0.0
        %4260 = vadd.xlane.f32.xlu0 %v4259
        %v4261 = vpop.xlane.xlu0 %4260
        %v4262 = vmul.f32 %v4258, %v3598
        %v4263 = vmul.f32 %v4261, %v3598
        %v4264 = vsub.f32 %v4252, %v4262
        %v4265 = vsub.f32 %v4253, %v4263
        %v4266 = vmul.f32 %v4264, %v4264
        %v4267 = vmul.f32 %v4265, %v4265
        %v4268 = vsel %vm2463, %v4266, 0.0
        %4269 = vadd.xlane.f32.xlu0 %v4268
        %v4270 = vpop.xlane.xlu0 %4269
        %v4271 = vsel %vm2463, %v4267, 0.0
        %4272 = vadd.xlane.f32.xlu0 %v4271
        %v4273 = vpop.xlane.xlu0 %4272
        %v4274 = vmul.f32 %v4270, %v3598
        %v4275 = vmul.f32 %v4273, %v3598
        %v4276 = vadd.f32 %v4274, 1e-05
        %v4277 = vadd.f32 %v4275, 1e-05
        %v4278 = vrsqrt.pop %v4276
        %v4279 = vrsqrt.pop %v4277
        %v4280 = vmul.f32 %v4264, %v4278
        %v4281 = vmul.f32 %v4265, %v4279
        %v4283 = vlaneseq
        %v4284 = vshrl.u32 %v4283, 7
        %v4285 = vsub.s32 0, %v4284
        %v4286 = vrot.slane %v4254, %v4285
        %v4288 = vmul.f32 %v4280, %v4286
        %v4289 = vmul.f32 %v4281, %v4286
        %v4291 = vlaneseq
        %v4292 = vshrl.u32 %v4291, 7
        %v4293 = vsub.s32 0, %v4292
        %v4294 = vrot.slane %v4255, %v4293
        %v4296 = vadd.f32 %v4288, %v4294
        %v4297 = vadd.f32 %v4289, %v4294
        %4298 = vst.msk [vmem:[#allocation2] sm:$0xff] %vm2463, %v4296
        %4299 = vst.msk [vmem:[#allocation2 + $0x8] sm:$0xff] %vm2463, %v4297
        %p4300 = scmp.eq.s32.totalorder %s55, 1
        // Predicated region
        $region121: #{tpu_custom_call.1} parent=115 // pred_check
          %p4301 = pneg %p4300
        $region122: #{tpu_custom_call.1} parent=115 // pred_check_branch
          %4303 = sbr.rel (%p4301) target = $region124
        $region123: #{tpu_custom_call.1} parent=115 // pred_region
          %v4304 = vmul.f32 %v4296, %v1123
          %v4305 = vmul.f32 %v4297, %v1124
          %4306 = vst.msk [vmem:[%s1025] sm:$0xff] %vm2463, %v4304
          %4307 = vst.msk [vmem:[%s1025 + $0x8] sm:$0xff] %vm2463, %v4305
          %v4308 = vpack.c.bf16 %v4305, %v4304
          %v4309 = vld [vmem:[%s23] sm:$0xf]
          %v4310 = vld [vmem:[%s23 + $0x4] sm:$0xf]
          %v4311 = vld [vmem:[%s23 + $0x8] sm:$0xf]
          %v4312 = vld [vmem:[%s23 + $0xc] sm:$0xf]
          %v4313 = vld [vmem:[%s23 + $0x10] sm:$0xf]
          %v4314 = vld [vmem:[%s23 + $0x14] sm:$0xf]
          %v4315 = vld [vmem:[%s23 + $0x18] sm:$0xf]
          %v4316 = vld [vmem:[%s23 + $0x1c] sm:$0xf]
          %v4317 = vld [vmem:[%s24] sm:$0x1]
          %v4319 = vlaneseq
          %v4320 = vshrl.u32 %v4319, 7
          %v4321 = vsub.s32 0, %v4320
          %v4322 = vrot.slane %v4317, %v4321
          %v4332 = vunpack.c.l.b16 %v4309
          %v4333 = vunpack.c.l.b16 %v4310
          %v4334 = vunpack.c.l.b16 %v4311
          %v4335 = vunpack.c.l.b16 %v4312
          %v4336 = vunpack.c.l.b16 %v4313
          %v4337 = vunpack.c.l.b16 %v4314
          %v4338 = vunpack.c.l.b16 %v4315
          %v4339 = vunpack.c.l.b16 %v4316
          %v4340 = vpack.c.b16 %v4333, %v4332
          %v4341 = vpack.c.b16 %v4335, %v4334
          %v4342 = vpack.c.b16 %v4337, %v4336
          %v4343 = vpack.c.b16 %v4339, %v4338
          %v4349 = vsel %vm2463, %v4308, 0
          %4351 = vmatprep.subr.bf16.mxu0 0
          %4352 = vmatpush1.bf16.msra.mxu0 %v4340
          %4353 = vmatprep.subr.bf16.mxu0 0
          %4354 = vmatpush1.bf16.msra.mxu0 %v4341
          %4355 = vmatprep.subr.bf16.mxu0 0
          %4356 = vmatpush1.bf16.msra.mxu0 %v4342
          %4357 = vmatprep.subr.bf16.mxu0 0
          %4358 = vmatpush1.bf16.msra.mxu0 %v4343
          %4359 = vmatprep.subr.bf16.mxu0 0
          %4360 = vmatpush1.bf16.msra.mxu0 0
          %4361 = vmatprep.subr.bf16.mxu0 0
          %4362 = vmatpush1.bf16.msra.mxu0 0
          %4363 = vmatprep.subr.bf16.mxu0 0
          %4364 = vmatpush1.bf16.msra.mxu0 0
          %4365 = vmatprep.subr.bf16.mxu0 0
          %4366 = vmatpush1.bf16.msra.mxu0 0
          %4367 = vmatprep.subr.bf16.mxu0 0
          %4368 = vmatpush1.bf16.msra.mxu0 0
          %4369 = vmatprep.subr.bf16.mxu0 0
          %4370 = vmatpush1.bf16.msra.mxu0 0
          %4371 = vmatprep.subr.bf16.mxu0 0
          %4372 = vmatpush1.bf16.msra.mxu0 0
          %4373 = vmatprep.subr.bf16.mxu0 0
          %4374 = vmatpush1.bf16.msra.mxu0 0
          %4375 = vmatprep.subr.bf16.mxu0 0
          %4376 = vmatpush1.bf16.msra.mxu0 0
          %4377 = vmatprep.subr.bf16.mxu0 0
          %4378 = vmatpush1.bf16.msra.mxu0 0
          %4379 = vmatprep.subr.bf16.mxu0 0
          %4380 = vmatpush1.bf16.msra.mxu0 0
          %4381 = vmatprep.subr.bf16.mxu0 0
          %4382 = vmatpush1.bf16.msra.mxu0 0
          %4383 = vmatprep.mubr.bf16.mxu0 0
          %4384 = vmatmul.mubr.bf16.gmra.mrb[0].mxu0 %v4349
          %v4385 = vpop.f32.mrb[0].mxu0
          %v4386 = vadd.f32 %v4322, %v4385
          %v4387 = vpop.f32.mrb[0].mxu0
          %v4388 = vpop.f32.mrb[0].mxu0
          %v4389 = vadd.f32 %v4322, %v4388
          %v4390 = vpop.f32.mrb[0].mxu0
          %4391 = vdwg.mxu0
          %v4392 = vmul.f32 %v4386, %v1123
          %v4393 = vmul.f32 %v4389, %v1124
          %4394 = vst.msk [vmem:[%s1032] sm:$0xff] %vm2678, %v4392
          %4395 = vst.msk [vmem:[%s1032 + $0x8] sm:$0xff] %vm2678, %v4393
        $region124: #{tpu_custom_call.1} parent=115 // pred_fallthru
          _
        %s4396 = sand.u32 %s674, 1
        %s4397 = scalar_lea.sflag [#allocation7], %s4396
        %s4398 = sand.u32 %s674, 1
        %s4399 = smul.addr %s4398, 16
        %s4400 = scalar_lea.vmem [#allocation6], %s4399
        %s4401 = sand.u32 %s700, 1
        %s4402 = scalar_lea.sflag [#allocation9], %s4401
        %s4403 = sand.u32 %s700, 1
        %s4404 = smul.addr %s4403, 16
        %s4405 = scalar_lea.vmem [#allocation8], %s4404
        // Predicated region
        $region125: #{tpu_custom_call.1} parent=115 // pred_check
          %p4406 = pneg %p684
        $region126: #{tpu_custom_call.1} parent=115 // pred_check_branch
          %4408 = sbr.rel (%p4406) target = $region128
        $region127: #{tpu_custom_call.1} parent=115 // pred_region
          %s4410 = ssub.s32 256, 256
          %4411 = vsyncadd %s4397, %s4410
          %s4412 = smul.addr %s54, 2
          %s4413 = smul.addr %s4412, 128
          %s4414 = scalar_lea.hbm %s25, %s4413
          %s4415 = sshll.u32 %s4400, 4
          %s4416 = int_to_ptr.vmem [resolvable:$true] %s4415
          %4421 = dma.vmem_to_hbm [thread:$0]  %s4416, 256, %s4414, %s4397, 128, 128, 8
        $region128: #{tpu_custom_call.1} parent=115 // pred_fallthru
          _
        // Predicated region
        $region129: #{tpu_custom_call.1} parent=115 // pred_check
          %p4422 = pneg %p710
        $region130: #{tpu_custom_call.1} parent=115 // pred_check_branch
          %4424 = sbr.rel (%p4422) target = $region132
        $region131: #{tpu_custom_call.1} parent=115 // pred_region
          %s4426 = ssub.s32 256, 256
          %4427 = vsyncadd %s4402, %s4426
          %s4428 = smul.addr %s54, 2
          %s4429 = smul.addr %s4428, 128
          %s4430 = scalar_lea.hbm %s26, %s4429
          %s4431 = sshll.u32 %s4405, 4
          %s4432 = int_to_ptr.vmem [resolvable:$true] %s4431
          %4437 = dma.vmem_to_hbm [thread:$0]  %s4432, 256, %s4430, %s4402, 128, 128, 8
        $region132: #{tpu_custom_call.1} parent=115 // pred_fallthru
          _
      $region116: #{tpu_custom_call.1} parent=5 // pred_fallthru
        _
      %p4438 = scmp.le.s32.totalorder 2, %s45
      // Predicated region
      $region133: #{tpu_custom_call.1} parent=5 // pred_check
        %p4439 = pneg %p4438
      $region134: #{tpu_custom_call.1} parent=5 // pred_check_branch
        %4441 = sbr.rel (%p4439) target = $region136
      $region135: #{tpu_custom_call.1} parent=5 // pred_region
        %s4442 = ssub.s32 %s45, 2
        // Predicated region
        $region137: #{tpu_custom_call.1} parent=135 // pred_check
          %p4443 = pneg %p690
        $region138: #{tpu_custom_call.1} parent=135 // pred_check_branch
          %4445 = sbr.rel (%p4443) target = $region140
        $region139: #{tpu_custom_call.1} parent=135 // pred_region
          %s4446 = sand.u32 %s675, 1
          %s4447 = scalar_lea.sflag [#allocation7], %s4446
          %s4448 = sand.u32 %s675, 1
          %s4449 = smul.addr %s4448, 16
          %s4450 = scalar_lea.vmem [#allocation6], %s4449
          %4451 = dma.done %s4447, 256
        $region140: #{tpu_custom_call.1} parent=135 // pred_fallthru
          _
        // Predicated region
        $region141: #{tpu_custom_call.1} parent=135 // pred_check
          %p4452 = pneg %p716
        $region142: #{tpu_custom_call.1} parent=135 // pred_check_branch
          %4454 = sbr.rel (%p4452) target = $region144
        $region143: #{tpu_custom_call.1} parent=135 // pred_region
          %s4455 = sand.u32 %s701, 1
          %s4456 = scalar_lea.sflag [#allocation9], %s4455
          %s4457 = sand.u32 %s701, 1
          %s4458 = smul.addr %s4457, 16
          %s4459 = scalar_lea.vmem [#allocation8], %s4458
          %4460 = dma.done %s4456, 256
        $region144: #{tpu_custom_call.1} parent=135 // pred_fallthru
          _
      $region136: #{tpu_custom_call.1} parent=5 // pred_fallthru
        _
    $region6: #{tpu_custom_call.1} parent=1 // loop_footer
      %s49 = sadd.s32 1, %s45
    $region7: #{tpu_custom_call.1} parent=1 // loop_footer_branch
      %44 = sbr.rel target = $region3
    $region8: #{tpu_custom_call.1} parent=1 // loop_exit
      _
    %4461 = vsyncpa [#allocation7], 1
    %s4462 = scalar_lea.sflag [#allocation7], 1
    %4463 = vsyncpa %s4462, 1
    %4464 = vsyncpa [#allocation9], 1
    %s4465 = scalar_lea.sflag [#allocation9], 1
    %4466 = vsyncpa %s4465, 1

</llo_original>
